<compile_context>
chip_gen: v7x
topology: tpu7x:2x2x1
jax: 0.10.0
libtpu: 0.0.40
codegen_flags: <defaults>
</compile_context>

<pallas_src>
import math
import functools

import jax
import jax.numpy as jnp
from jax import lax
from jax.experimental import pallas as pl
from jax.experimental.pallas import tpu as pltpu

# ----------------------------- model config ------------------------------ #
HR_SIZE = (32, 32)       # small spatial size for the demo
IN_CH = 4
PATCH = 16
EMBED = 32
DEPTH = 2
NUM_HEADS = 4
MLP_RATIO = 4
NUM_CLASSES = 1
LN_EPS = 1e-5

GH, GW = HR_SIZE[0] // PATCH, HR_SIZE[1] // PATCH
NPATCH = GH * GW                     # 4 patches
SEQ = NPATCH + 1                     # 5 tokens (cls + patches)
SPAD = 8                             # per-batch sequence padded to a sublane group
CPP = IN_CH * PATCH * PATCH          # 1024 = flattened patch length
HEAD_DIM = EMBED // NUM_HEADS        # 8
HIDDEN = EMBED * MLP_RATIO           # 128
LANES = 128
NEG_BIG = -1e30
assert SPAD & (SPAD - 1) == 0
_SPAD_SHIFT = SPAD.bit_length() - 1

# ---- bf16 weight-blob row layout (lane width = 128, zero padded) ---------- #
W_PATCH_ROWS = CPP                          # rows [0, 1024): patch_w (Cpp, D)
OFF_WQKV = 0                                # per-layer chunk offsets
OFF_WO = EMBED
OFF_WFC1 = 2 * EMBED
OFF_WFC2 = 3 * EMBED
W_LAYER_ROWS = 3 * EMBED + HIDDEN           # 224 rows per layer
WBLOB_ROWS = W_PATCH_ROWS + DEPTH * W_LAYER_ROWS

# ---- f32 param-blob row layout (lane width = 128, zero padded) ------------ #
# rows [0, SEQ): fused token offset (row 0: cls + pos[0]; rows 1..: patch bias + pos)
F_LAYER_BASE = 8                            # 8-row aligned per-layer chunks
F_LAYER_ROWS = 8                            # ln1w, ln1b, bqkv, bo, ln2w, ln2b, bfc1, bfc2
F_TAIL = F_LAYER_BASE + DEPTH * F_LAYER_ROWS  # norm_w, norm_b, head_w, head_b
FBLOB_ROWS = F_TAIL + 8


# ----------------------------- kernel helpers ---------------------------- #
def _layer_norm(x, w, b):
    # PyTorch nn.LayerNorm semantics: biased variance, eps inside rsqrt.
    mu = jnp.mean(x, axis=-1, keepdims=True)
    var = jnp.mean(jnp.square(x - mu), axis=-1, keepdims=True)
    return (x - mu) * lax.rsqrt(var + LN_EPS) * w + b


def _erf(z):
    # Abramowitz & Stegun 7.1.26 rational approximation (|err| <= 1.5e-7),
    # built only from abs/exp/mul/add/where so it is guaranteed to lower on
    # the TPU VPU/EUP.  Matches PyTorch's exact erf-based GELU to ~f32 noise.
    # TODO(synk): switch to lax.erf once its Mosaic lowering is guaranteed.
    a1, a2, a3, a4, a5 = 0.254829592, -0.284496736, 1.421413741, -1.453152027, 1.061405429
    p = 0.3275911
    az = jnp.abs(z)
    t = 1.0 / (1.0 + p * az)
    poly = ((((a5 * t + a4) * t + a3) * t + a2) * t + a1) * t
    e = 1.0 - poly * jnp.exp(-az * az)
    return jnp.where(z >= 0.0, e, -e)


def _gelu_exact(x):
    # nn.GELU() default = exact erf-based gelu.
    return 0.5 * x * (1.0 + _erf(x * (1.0 / math.sqrt(2.0))))


def _sigmoid(x):
    # Numerically safe sigmoid via tanh (EUP), exact identity.
    return 0.5 * (jnp.tanh(0.5 * x) + 1.0)


# ----------------------------- fused Pallas kernel ------------------------ #
def vit_fused_kernel(patches_ref, wblob_ref, fblob_ref, out_ref, *, batch):
    B = batch
    D = EMBED
    NH = NUM_HEADS
    dh = HEAD_DIM
    bf16 = jnp.bfloat16

    # ---------------- patch embedding (one GEMM, full-lane weight) ----------
    wp = wblob_ref[0:CPP, :]                                        # (Cpp, 128) bf16
    proj = jnp.dot(patches_ref[...], wp,
                   preferred_element_type=jnp.float32)[:, 0:D]      # (B*N, D) f32

    # Build the padded token sequence: [cls | patches | 3 zero rows] per batch.
    off_cls = fblob_ref[0:1, 0:D]                                   # cls_token + pos[0]
    off_pat = fblob_ref[1:SEQ, 0:D]                                 # patch bias + pos[1:]
    zpad = jnp.zeros((SPAD - SEQ, D), jnp.float32)
    pieces = []
    for b in range(B):
        pieces.append(off_cls)
        pieces.append(proj[b * NPATCH:(b + 1) * NPATCH, :] + off_pat)
        pieces.append(zpad)
    x = jnp.concatenate(pieces, axis=0)                             # (B*SPAD, D)

    # -------- block-diagonal attention mask, built once (constant) ----------
    R = B * NH * SPAD
    ri = lax.broadcasted_iota(jnp.int32, (R, R), 0)
    ci = lax.broadcasted_iota(jnp.int32, (R, R), 1)
    valid = ((ri >> _SPAD_SHIFT) == (ci >> _SPAD_SHIFT)) & ((ci & (SPAD - 1)) < SEQ)
    mask = jnp.where(valid, 0.0, NEG_BIG).astype(jnp.float32)       # (R, R)

    def stack_heads(m):
        # (B*SPAD, NH*dh) -> (B*NH*SPAD, dh), rows ordered (b, h, s); all
        # pieces are 8-row sublane-aligned slices.
        return jnp.concatenate(
            [m[b * SPAD:(b + 1) * SPAD, h * dh:(h + 1) * dh]
             for b in range(B) for h in range(NH)], axis=0)

    def unstack_heads(m):
        # (B*NH*SPAD, dh) -> (B*SPAD, NH*dh)
        return jnp.concatenate(
            [jnp.concatenate(
                [m[(b * NH + h) * SPAD:(b * NH + h + 1) * SPAD, :]
                 for h in range(NH)], axis=1)
             for b in range(B)], axis=0)

    for d in range(DEPTH):
        wbase = W_PATCH_ROWS + d * W_LAYER_ROWS
        fbase = F_LAYER_BASE + d * F_LAYER_ROWS

        wqkv = wblob_ref[wbase + OFF_WQKV:wbase + OFF_WQKV + D, :]        # (32, 128)
        wo = wblob_ref[wbase + OFF_WO:wbase + OFF_WO + D, :]              # (32, 128)
        wfc1 = wblob_ref[wbase + OFF_WFC1:wbase + OFF_WFC1 + D, :]        # (32, 128)
        wfc2 = wblob_ref[wbase + OFF_WFC2:wbase + OFF_WFC2 + HIDDEN, :]   # (128, 128)

        ln1w = fblob_ref[fbase + 0:fbase + 1, 0:D]
        ln1b = fblob_ref[fbase + 1:fbase + 2, 0:D]
        bqkv = fblob_ref[fbase + 2:fbase + 3, :]                          # (1, 128)
        bo = fblob_ref[fbase + 3:fbase + 4, 0:D]
        ln2w = fblob_ref[fbase + 4:fbase + 5, 0:D]
        ln2b = fblob_ref[fbase + 5:fbase + 6, 0:D]
        bfc1 = fblob_ref[fbase + 6:fbase + 7, :]                          # (1, 128)
        bfc2 = fblob_ref[fbase + 7:fbase + 8, 0:D]

        # ---- multi-head self-attention (pre-norm), all batches+heads fused --
        xn = _layer_norm(x, ln1w, ln1b)                                   # (B*SPAD, D)
        qkv = jnp.dot(xn.astype(bf16), wqkv,
                      preferred_element_type=jnp.float32) + bqkv          # (B*SPAD, 128)

        q_s = stack_heads(qkv[:, 0:D])            # (R, dh), softmax scale pre-folded
        k_s = stack_heads(qkv[:, D:2 * D])        # (R, dh)
        v_s = stack_heads(qkv[:, 2 * D:3 * D])    # (R, dh)

        s = lax.dot_general(q_s, k_s, (((1,), (1,)), ((), ())),
                            preferred_element_type=jnp.float32) + mask    # (R, R)
        s = s - jnp.max(s, axis=-1, keepdims=True)
        p = jnp.exp(s)
        p = p / jnp.sum(p, axis=-1, keepdims=True)                        # exact softmax
        ctx = jnp.dot(p, v_s, preferred_element_type=jnp.float32)         # (R, dh)

        attn = unstack_heads(ctx)                                         # (B*SPAD, D)
        attn = jnp.dot(attn.astype(bf16), wo,
                       preferred_element_type=jnp.float32)[:, 0:D] + bo
        x = x + attn

        # ---- MLP (pre-norm) ----
        xn = _layer_norm(x, ln2w, ln2b)
        h1 = jnp.dot(xn.astype(bf16), wfc1,
                     preferred_element_type=jnp.float32) + bfc1           # (B*SPAD, 128)
        h1 = _gelu_exact(h1)
        mlp = jnp.dot(h1.astype(bf16), wfc2,
                      preferred_element_type=jnp.float32)[:, 0:D] + bfc2
        x = x + mlp

    # ---- final LayerNorm on cls tokens + linear head + sigmoid (one pass) ----
    norm_w = fblob_ref[F_TAIL + 0:F_TAIL + 1, 0:D]
    norm_b = fblob_ref[F_TAIL + 1:F_TAIL + 2, 0:D]
    head_w = fblob_ref[F_TAIL + 2:F_TAIL + 3, 0:D]
    head_b = fblob_ref[F_TAIL + 3:F_TAIL + 4, 0:1]

    cls = jnp.concatenate([x[b * SPAD:b * SPAD + 1, :] for b in range(B)], axis=0)
    cls = _layer_norm(cls, norm_w, norm_b)                                # (B, D)
    logit = jnp.sum(cls * head_w, axis=-1, keepdims=True) + head_b        # (B, 1)
    out_ref[...] = _sigmoid(logit)


# ----------------------------- parameter packing -------------------------- #
def pack_params(params):
    """One-time packing into 2 blobs: a bf16 matmul-weight blob and an f32
    blob for LN params / biases / fused token offset / head params.  The
    softmax 1/sqrt(dh) scale is folded into the Q columns of w_qkv / b_qkv."""
    D = EMBED
    scale = 1.0 / math.sqrt(HEAD_DIM)
    blocks = params["blocks"]

    # ---- bf16 weight blob ----
    wblob = jnp.zeros((WBLOB_ROWS, LANES), jnp.float32)
    patch_w = params["patch_w"].reshape(D, CPP).T                   # (Cpp, D)
    wblob = wblob.at[0:CPP, 0:D].set(patch_w)
    for d, blk in enumerate(blocks):
        base = W_PATCH_ROWS + d * W_LAYER_ROWS
        w_qkv = blk[2].at[:, 0:D].multiply(scale)                   # fold scale into Q
        wblob = wblob.at[base + OFF_WQKV:base + OFF_WQKV + D, 0:3 * D].set(w_qkv)
        wblob = wblob.at[base + OFF_WO:base + OFF_WO + D, 0:D].set(blk[4])
        wblob = wblob.at[base + OFF_WFC1:base + OFF_WFC1 + D, 0:HIDDEN].set(blk[8])
        wblob = wblob.at[base + OFF_WFC2:base + OFF_WFC2 + HIDDEN, 0:D].set(blk[10])
    wblob = wblob.astype(jnp.bfloat16)

    # ---- f32 param blob ----
    fblob = jnp.zeros((FBLOB_ROWS, LANES), jnp.float32)
    off = params["pos_embed"].reshape(SEQ, D)
    off = off.at[0, :].add(params["cls_token"].reshape(D))
    off = off.at[1:SEQ, :].add(
        jnp.broadcast_to(params["patch_b"].reshape(1, D), (NPATCH, D)))
    fblob = fblob.at[0:SEQ, 0:D].set(off)
    for d, blk in enumerate(blocks):
        base = F_LAYER_BASE + d * F_LAYER_ROWS
        fblob = fblob.at[base + 0, 0:D].set(blk[0].reshape(D))      # ln1 w
        fblob = fblob.at[base + 1, 0:D].set(blk[1].reshape(D))      # ln1 b
        bqkv = blk[3].reshape(3 * D).at[0:D].multiply(scale)        # fold scale into Q bias
        fblob = fblob.at[base + 2, 0:3 * D].set(bqkv)
        fblob = fblob.at[base + 3, 0:D].set(blk[5].reshape(D))      # out-proj bias
        fblob = fblob.at[base + 4, 0:D].set(blk[6].reshape(D))      # ln2 w
        fblob = fblob.at[base + 5, 0:D].set(blk[7].reshape(D))      # ln2 b
        fblob = fblob.at[base + 6, 0:HIDDEN].set(blk[9].reshape(HIDDEN))
        fblob = fblob.at[base + 7, 0:D].set(blk[11].reshape(D))
    fblob = fblob.at[F_TAIL + 0, 0:D].set(params["norm_w"].reshape(D))
    fblob = fblob.at[F_TAIL + 1, 0:D].set(params["norm_b"].reshape(D))
    fblob = fblob.at[F_TAIL + 2, 0:D].set(params["head_w"].reshape(D))
    fblob = fblob.at[F_TAIL + 3, 0:1].set(params["head_b"].reshape(1))

    return {"wblob": wblob, "fblob": fblob}


# ----------------------------- forward wrapper ----------------------------- #
def vit_discriminator_forward(x, packed):
    B, C, H, W = x.shape
    gh, gw = H // PATCH, W // PATCH
    # NCHW image -> flattened patches (B*N, C*p*p), matching Conv2d(k=s=patch).
    patches = (x.reshape(B, C, gh, PATCH, gw, PATCH)
                .transpose(0, 2, 4, 1, 3, 5)
                .reshape(B * gh * gw, C * PATCH * PATCH)).astype(jnp.bfloat16)

    kernel = functools.partial(vit_fused_kernel, batch=B)
    return pl.pallas_call(
        kernel,
        out_shape=jax.ShapeDtypeStruct((B, NUM_CLASSES), jnp.float32),
        in_specs=[pl.BlockSpec(memory_space=pltpu.MemorySpace.VMEM)] * 3,
        out_specs=pl.BlockSpec(memory_space=pltpu.MemorySpace.VMEM),
    )(patches, packed["wblob"], packed["fblob"])


# ----------------------------- parameter init ----------------------------- #
def init_params(key):
    D, Hm = EMBED, HIDDEN
    keys = iter(jax.random.split(key, 8 + 6 * DEPTH))

    def nrm(shape, std=0.02):
        return jax.random.normal(next(keys), shape, dtype=jnp.float32) * std

    params = {
        "patch_w": nrm((D, IN_CH, PATCH, PATCH)),
        "patch_b": jnp.zeros((D,), jnp.float32),
        "cls_token": nrm((1, 1, D)),
        "pos_embed": nrm((1, SEQ, D)),
        "norm_w": jnp.ones((D,), jnp.float32),
        "norm_b": jnp.zeros((D,), jnp.float32),
        "head_w": nrm((D, NUM_CLASSES)),            # pre-transposed (D, num_classes)
        "head_b": jnp.zeros((NUM_CLASSES,), jnp.float32),
        "blocks": [],
    }
    for _ in range(DEPTH):
        blk = (
            jnp.ones((1, D), jnp.float32),          # 0  ln1 w
            jnp.zeros((1, D), jnp.float32),         # 1  ln1 b
            nrm((D, 3 * D)),                        # 2  qkv weight (pre-transposed)
            jnp.zeros((1, 3 * D), jnp.float32),     # 3  qkv bias
            nrm((D, D)),                            # 4  out_proj weight (pre-transposed)
            jnp.zeros((1, D), jnp.float32),         # 5  out_proj bias
            jnp.ones((1, D), jnp.float32),          # 6  ln2 w
            jnp.zeros((1, D), jnp.float32),         # 7  ln2 b
            nrm((D, Hm)),                           # 8  mlp fc1 weight (pre-transposed)
            jnp.zeros((1, Hm), jnp.float32),        # 9  mlp fc1 bias
            nrm((Hm, D)),                           # 10 mlp fc2 weight (pre-transposed)
            jnp.zeros((1, D), jnp.float32),         # 11 mlp fc2 bias
        )
        params["blocks"].append(blk)
    return params


# ----------------------------- main --------------------------------------- #
if __name__ == "__main__":
    key = jax.random.PRNGKey(0)
    kx, kp = jax.random.split(key)

    B = 2
    x = jax.random.normal(kx, (B, IN_CH, HR_SIZE[0], HR_SIZE[1]), dtype=jnp.float32)
    params = init_params(kp)
    packed = pack_params(params)

    forward = jax.jit(vit_discriminator_forward)
    prob = forward(x, packed)
    prob = jax.block_until_ready(prob)

    assert prob.shape == (B, NUM_CLASSES)
    assert bool(jnp.all((prob >= 0.0) & (prob <= 1.0)))
    print("KERNEL_OK")
</pallas_src>

<mosaic_0001>
module attributes {stable_mosaic.version = 11 : i64} {
  func.func @vit_fused_kernel(%arg0: memref<8x1024xbf16, #tpu.memory_space<vmem>>, %arg1: memref<1472x128xbf16, #tpu.memory_space<vmem>>, %arg2: memref<32x128xf32, #tpu.memory_space<vmem>>, %arg3: memref<2x1xf32, #tpu.memory_space<vmem>>) attributes {dimension_semantics = [], scalar_prefetch = 0 : i64, scratch_operands = 0 : i64, tpu.core_type = #tpu.core_type<tc>} {
    %c0 = arith.constant 0 : index
    %c0_0 = arith.constant 0 : index
    %0 = vector.load %arg1[%c0, %c0_0] : memref<1472x128xbf16, #tpu.memory_space<vmem>>, vector<1024x128xbf16>
    %c0_1 = arith.constant 0 : index
    %c0_2 = arith.constant 0 : index
    %1 = vector.load %arg0[%c0_1, %c0_2] : memref<8x1024xbf16, #tpu.memory_space<vmem>>, vector<8x1024xbf16>
    %cst = arith.constant dense<0.000000e+00> : vector<8x128xf32>
    %2 = tpu.matmul %1, %0, %cst {dimension_numbers = #tpu.dot_dimension_numbers<[1], [0], [0], [1], [0, 0, 1, 1], [], []>} : vector<8x1024xbf16>, vector<1024x128xbf16>, vector<8x128xf32> -> vector<8x128xf32>
    %3 = vector.extract_strided_slice %2 {offsets = [0, 0], sizes = [8, 32], strides = [1, 1]} : vector<8x128xf32> to vector<8x32xf32>
    %c0_3 = arith.constant 0 : index
    %c0_4 = arith.constant 0 : index
    %4 = vector.load %arg2[%c0_3, %c0_4] : memref<32x128xf32, #tpu.memory_space<vmem>>, vector<1x32xf32>
    %c1 = arith.constant 1 : index
    %c0_5 = arith.constant 0 : index
    %5 = vector.load %arg2[%c1, %c0_5] : memref<32x128xf32, #tpu.memory_space<vmem>>, vector<4x32xf32>
    %cst_6 = arith.constant 0.000000e+00 : f32
    %6 = vector.broadcast %cst_6 : f32 to vector<3x32xf32>
    %7 = vector.extract_strided_slice %3 {offsets = [0, 0], sizes = [4, 32], strides = [1, 1]} : vector<8x32xf32> to vector<4x32xf32>
    %8 = arith.addf %7, %5 : vector<4x32xf32>
    %9 = vector.extract_strided_slice %3 {offsets = [4, 0], sizes = [4, 32], strides = [1, 1]} : vector<8x32xf32> to vector<4x32xf32>
    %10 = arith.addf %9, %5 : vector<4x32xf32>
    %11 = tpu.concatenate %4, %8, %6, %4, %10, %6 in 0 : vector<1x32xf32>, vector<4x32xf32>, vector<3x32xf32>, vector<1x32xf32>, vector<4x32xf32>, vector<3x32xf32> -> vector<16x32xf32>
    %12 = tpu.iota {dimensions = array<i32: 0>} : vector<64x64xi32>
    %13 = tpu.iota {dimensions = array<i32: 1>} : vector<64x64xi32>
    %c3_i32 = arith.constant 3 : i32
    %14 = vector.broadcast %c3_i32 : i32 to vector<64x64xi32>
    %15 = arith.shrsi %12, %14 : vector<64x64xi32>
    %c3_i32_7 = arith.constant 3 : i32
    %16 = vector.broadcast %c3_i32_7 : i32 to vector<64x64xi32>
    %17 = arith.shrsi %13, %16 : vector<64x64xi32>
    %18 = arith.cmpi eq, %15, %17 : vector<64x64xi32>
    %c7_i32 = arith.constant 7 : i32
    %19 = vector.broadcast %c7_i32 : i32 to vector<64x64xi32>
    %20 = arith.andi %13, %19 : vector<64x64xi32>
    %c5_i32 = arith.constant 5 : i32
    %21 = vector.broadcast %c5_i32 : i32 to vector<64x64xi32>
    %22 = arith.cmpi slt, %20, %21 : vector<64x64xi32>
    %23 = arith.andi %18, %22 : vector<64x64xi1>
    %cst_8 = arith.constant 0.000000e+00 : f32
    %cst_9 = arith.constant -1.000000e+30 : f32
    %24 = vector.broadcast %cst_8 : f32 to vector<64x64xf32>
    %25 = vector.broadcast %cst_9 : f32 to vector<64x64xf32>
    %26 = arith.select %23, %24, %25 : vector<64x64xi1>, vector<64x64xf32>
    %c1024 = arith.constant 1024 : index
    %c0_10 = arith.constant 0 : index
    %27 = vector.load %arg1[%c1024, %c0_10] : memref<1472x128xbf16, #tpu.memory_space<vmem>>, vector<32x128xbf16>
    %c1056 = arith.constant 1056 : index
    %c0_11 = arith.constant 0 : index
    %28 = vector.load %arg1[%c1056, %c0_11] : memref<1472x128xbf16, #tpu.memory_space<vmem>>, vector<32x128xbf16>
    %c1088 = arith.constant 1088 : index
    %c0_12 = arith.constant 0 : index
    %29 = vector.load %arg1[%c1088, %c0_12] : memref<1472x128xbf16, #tpu.memory_space<vmem>>, vector<32x128xbf16>
    %c1120 = arith.constant 1120 : index
    %c0_13 = arith.constant 0 : index
    %30 = vector.load %arg1[%c1120, %c0_13] : memref<1472x128xbf16, #tpu.memory_space<vmem>>, vector<128x128xbf16>
    %c8 = arith.constant 8 : index
    %c0_14 = arith.constant 0 : index
    %31 = vector.load %arg2[%c8, %c0_14] : memref<32x128xf32, #tpu.memory_space<vmem>>, vector<1x32xf32>
    %c9 = arith.constant 9 : index
    %c0_15 = arith.constant 0 : index
    %32 = vector.load %arg2[%c9, %c0_15] : memref<32x128xf32, #tpu.memory_space<vmem>>, vector<1x32xf32>
    %c10 = arith.constant 10 : index
    %c0_16 = arith.constant 0 : index
    %33 = vector.load %arg2[%c10, %c0_16] : memref<32x128xf32, #tpu.memory_space<vmem>>, vector<1x128xf32>
    %c11 = arith.constant 11 : index
    %c0_17 = arith.constant 0 : index
    %34 = vector.load %arg2[%c11, %c0_17] : memref<32x128xf32, #tpu.memory_space<vmem>>, vector<1x32xf32>
    %c12 = arith.constant 12 : index
    %c0_18 = arith.constant 0 : index
    %35 = vector.load %arg2[%c12, %c0_18] : memref<32x128xf32, #tpu.memory_space<vmem>>, vector<1x32xf32>
    %c13 = arith.constant 13 : index
    %c0_19 = arith.constant 0 : index
    %36 = vector.load %arg2[%c13, %c0_19] : memref<32x128xf32, #tpu.memory_space<vmem>>, vector<1x32xf32>
    %c14 = arith.constant 14 : index
    %c0_20 = arith.constant 0 : index
    %37 = vector.load %arg2[%c14, %c0_20] : memref<32x128xf32, #tpu.memory_space<vmem>>, vector<1x128xf32>
    %c15 = arith.constant 15 : index
    %c0_21 = arith.constant 0 : index
    %38 = vector.load %arg2[%c15, %c0_21] : memref<32x128xf32, #tpu.memory_space<vmem>>, vector<1x32xf32>
    %cst_22 = arith.constant dense<0.000000e+00> : vector<16xf32>
    %39 = vector.multi_reduction <add>, %11, %cst_22 [1] : vector<16x32xf32> to vector<16xf32>
    %40 = vector.shape_cast %39 : vector<16xf32> to vector<16x1xf32>
    %cst_23 = arith.constant 3.200000e+01 : f32
    %41 = vector.broadcast %cst_23 : f32 to vector<16x1xf32>
    %42 = arith.divf %40, %41 : vector<16x1xf32>
    %43 = vector.broadcast %42 : vector<16x1xf32> to vector<16x32xf32>
    %44 = arith.subf %11, %43 : vector<16x32xf32>
    %45 = arith.mulf %44, %44 : vector<16x32xf32>
    %cst_24 = arith.constant dense<0.000000e+00> : vector<16xf32>
    %46 = vector.multi_reduction <add>, %45, %cst_24 [1] : vector<16x32xf32> to vector<16xf32>
    %47 = vector.shape_cast %46 : vector<16xf32> to vector<16x1xf32>
    %cst_25 = arith.constant 3.200000e+01 : f32
    %48 = vector.broadcast %cst_25 : f32 to vector<16x1xf32>
    %49 = arith.divf %47, %48 : vector<16x1xf32>
    %50 = vector.broadcast %42 : vector<16x1xf32> to vector<16x32xf32>
    %51 = arith.subf %11, %50 : vector<16x32xf32>
    %cst_26 = arith.constant 9.99999974E-6 : f32
    %52 = vector.broadcast %cst_26 : f32 to vector<16x1xf32>
    %53 = arith.addf %49, %52 : vector<16x1xf32>
    %54 = math.rsqrt %53 : vector<16x1xf32>
    %55 = vector.broadcast %54 : vector<16x1xf32> to vector<16x32xf32>
    %56 = arith.mulf %51, %55 : vector<16x32xf32>
    %57 = vector.broadcast %31 : vector<1x32xf32> to vector<16x32xf32>
    %58 = arith.mulf %56, %57 : vector<16x32xf32>
    %59 = vector.broadcast %32 : vector<1x32xf32> to vector<16x32xf32>
    %60 = arith.addf %58, %59 : vector<16x32xf32>
    %61 = arith.truncf %60 : vector<16x32xf32> to vector<16x32xbf16>
    %cst_27 = arith.constant dense<0.000000e+00> : vector<16x128xf32>
    %62 = tpu.matmul %61, %27, %cst_27 {dimension_numbers = #tpu.dot_dimension_numbers<[1], [0], [0], [1], [0, 0, 1, 1], [], []>} : vector<16x32xbf16>, vector<32x128xbf16>, vector<16x128xf32> -> vector<16x128xf32>
    %63 = vector.broadcast %33 : vector<1x128xf32> to vector<16x128xf32>
    %64 = arith.addf %62, %63 : vector<16x128xf32>
    %65 = vector.extract_strided_slice %64 {offsets = [0, 0], sizes = [16, 32], strides = [1, 1]} : vector<16x128xf32> to vector<16x32xf32>
    %66 = vector.extract_strided_slice %65 {offsets = [0, 0], sizes = [8, 8], strides = [1, 1]} : vector<16x32xf32> to vector<8x8xf32>
    %67 = vector.extract_strided_slice %65 {offsets = [0, 8], sizes = [8, 8], strides = [1, 1]} : vector<16x32xf32> to vector<8x8xf32>
    %68 = vector.extract_strided_slice %65 {offsets = [0, 16], sizes = [8, 8], strides = [1, 1]} : vector<16x32xf32> to vector<8x8xf32>
    %69 = vector.extract_strided_slice %65 {offsets = [0, 24], sizes = [8, 8], strides = [1, 1]} : vector<16x32xf32> to vector<8x8xf32>
    %70 = vector.extract_strided_slice %65 {offsets = [8, 0], sizes = [8, 8], strides = [1, 1]} : vector<16x32xf32> to vector<8x8xf32>
    %71 = vector.extract_strided_slice %65 {offsets = [8, 8], sizes = [8, 8], strides = [1, 1]} : vector<16x32xf32> to vector<8x8xf32>
    %72 = vector.extract_strided_slice %65 {offsets = [8, 16], sizes = [8, 8], strides = [1, 1]} : vector<16x32xf32> to vector<8x8xf32>
    %73 = vector.extract_strided_slice %65 {offsets = [8, 24], sizes = [8, 8], strides = [1, 1]} : vector<16x32xf32> to vector<8x8xf32>
    %74 = tpu.concatenate %66, %67, %68, %69, %70, %71, %72, %73 in 0 : vector<8x8xf32>, vector<8x8xf32>, vector<8x8xf32>, vector<8x8xf32>, vector<8x8xf32>, vector<8x8xf32>, vector<8x8xf32>, vector<8x8xf32> -> vector<64x8xf32>
    %75 = vector.extract_strided_slice %64 {offsets = [0, 32], sizes = [16, 32], strides = [1, 1]} : vector<16x128xf32> to vector<16x32xf32>
    %76 = vector.extract_strided_slice %75 {offsets = [0, 0], sizes = [8, 8], strides = [1, 1]} : vector<16x32xf32> to vector<8x8xf32>
    %77 = vector.extract_strided_slice %75 {offsets = [0, 8], sizes = [8, 8], strides = [1, 1]} : vector<16x32xf32> to vector<8x8xf32>
    %78 = vector.extract_strided_slice %75 {offsets = [0, 16], sizes = [8, 8], strides = [1, 1]} : vector<16x32xf32> to vector<8x8xf32>
    %79 = vector.extract_strided_slice %75 {offsets = [0, 24], sizes = [8, 8], strides = [1, 1]} : vector<16x32xf32> to vector<8x8xf32>
    %80 = vector.extract_strided_slice %75 {offsets = [8, 0], sizes = [8, 8], strides = [1, 1]} : vector<16x32xf32> to vector<8x8xf32>
    %81 = vector.extract_strided_slice %75 {offsets = [8, 8], sizes = [8, 8], strides = [1, 1]} : vector<16x32xf32> to vector<8x8xf32>
    %82 = vector.extract_strided_slice %75 {offsets = [8, 16], sizes = [8, 8], strides = [1, 1]} : vector<16x32xf32> to vector<8x8xf32>
    %83 = vector.extract_strided_slice %75 {offsets = [8, 24], sizes = [8, 8], strides = [1, 1]} : vector<16x32xf32> to vector<8x8xf32>
    %84 = tpu.concatenate %76, %77, %78, %79, %80, %81, %82, %83 in 0 : vector<8x8xf32>, vector<8x8xf32>, vector<8x8xf32>, vector<8x8xf32>, vector<8x8xf32>, vector<8x8xf32>, vector<8x8xf32>, vector<8x8xf32> -> vector<64x8xf32>
    %85 = vector.extract_strided_slice %64 {offsets = [0, 64], sizes = [16, 32], strides = [1, 1]} : vector<16x128xf32> to vector<16x32xf32>
    %86 = vector.extract_strided_slice %85 {offsets = [0, 0], sizes = [8, 8], strides = [1, 1]} : vector<16x32xf32> to vector<8x8xf32>
    %87 = vector.extract_strided_slice %85 {offsets = [0, 8], sizes = [8, 8], strides = [1, 1]} : vector<16x32xf32> to vector<8x8xf32>
    %88 = vector.extract_strided_slice %85 {offsets = [0, 16], sizes = [8, 8], strides = [1, 1]} : vector<16x32xf32> to vector<8x8xf32>
    %89 = vector.extract_strided_slice %85 {offsets = [0, 24], sizes = [8, 8], strides = [1, 1]} : vector<16x32xf32> to vector<8x8xf32>
    %90 = vector.extract_strided_slice %85 {offsets = [8, 0], sizes = [8, 8], strides = [1, 1]} : vector<16x32xf32> to vector<8x8xf32>
    %91 = vector.extract_strided_slice %85 {offsets = [8, 8], sizes = [8, 8], strides = [1, 1]} : vector<16x32xf32> to vector<8x8xf32>
    %92 = vector.extract_strided_slice %85 {offsets = [8, 16], sizes = [8, 8], strides = [1, 1]} : vector<16x32xf32> to vector<8x8xf32>
    %93 = vector.extract_strided_slice %85 {offsets = [8, 24], sizes = [8, 8], strides = [1, 1]} : vector<16x32xf32> to vector<8x8xf32>
    %94 = tpu.concatenate %86, %87, %88, %89, %90, %91, %92, %93 in 0 : vector<8x8xf32>, vector<8x8xf32>, vector<8x8xf32>, vector<8x8xf32>, vector<8x8xf32>, vector<8x8xf32>, vector<8x8xf32>, vector<8x8xf32> -> vector<64x8xf32>
    %cst_28 = arith.constant dense<0.000000e+00> : vector<64x64xf32>
    %95 = tpu.matmul %74, %84, %cst_28 {dimension_numbers = #tpu.dot_dimension_numbers<[1], [1], [0], [0], [0, 0, 1, 0], [], []>} : vector<64x8xf32>, vector<64x8xf32>, vector<64x64xf32> -> vector<64x64xf32>
    %96 = arith.addf %95, %26 : vector<64x64xf32>
    %cst_29 = arith.constant dense<0xFF800000> : vector<64xf32>
    %97 = vector.multi_reduction <maximumf>, %96, %cst_29 [1] : vector<64x64xf32> to vector<64xf32>
    %98 = vector.shape_cast %97 : vector<64xf32> to vector<64x1xf32>
    %99 = vector.broadcast %98 : vector<64x1xf32> to vector<64x64xf32>
    %100 = arith.subf %96, %99 : vector<64x64xf32>
    %101 = math.exp %100 : vector<64x64xf32>
    %cst_30 = arith.constant dense<0.000000e+00> : vector<64xf32>
    %102 = vector.multi_reduction <add>, %101, %cst_30 [1] : vector<64x64xf32> to vector<64xf32>
    %103 = vector.shape_cast %102 : vector<64xf32> to vector<64x1xf32>
    %104 = vector.broadcast %103 : vector<64x1xf32> to vector<64x64xf32>
    %105 = arith.divf %101, %104 : vector<64x64xf32>
    %cst_31 = arith.constant dense<0.000000e+00> : vector<64x8xf32>
    %106 = tpu.matmul %105, %94, %cst_31 {dimension_numbers = #tpu.dot_dimension_numbers<[1], [0], [0], [1], [0, 0, 1, 1], [], []>} : vector<64x64xf32>, vector<64x8xf32>, vector<64x8xf32> -> vector<64x8xf32>
    %107 = vector.extract_strided_slice %106 {offsets = [0, 0], sizes = [8, 8], strides = [1, 1]} : vector<64x8xf32> to vector<8x8xf32>
    %108 = vector.extract_strided_slice %106 {offsets = [8, 0], sizes = [8, 8], strides = [1, 1]} : vector<64x8xf32> to vector<8x8xf32>
    %109 = vector.extract_strided_slice %106 {offsets = [16, 0], sizes = [8, 8], strides = [1, 1]} : vector<64x8xf32> to vector<8x8xf32>
    %110 = vector.extract_strided_slice %106 {offsets = [24, 0], sizes = [8, 8], strides = [1, 1]} : vector<64x8xf32> to vector<8x8xf32>
    %111 = tpu.concatenate %107, %108, %109, %110 in 1 : vector<8x8xf32>, vector<8x8xf32>, vector<8x8xf32>, vector<8x8xf32> -> vector<8x32xf32>
    %112 = vector.extract_strided_slice %106 {offsets = [32, 0], sizes = [8, 8], strides = [1, 1]} : vector<64x8xf32> to vector<8x8xf32>
    %113 = vector.extract_strided_slice %106 {offsets = [40, 0], sizes = [8, 8], strides = [1, 1]} : vector<64x8xf32> to vector<8x8xf32>
    %114 = vector.extract_strided_slice %106 {offsets = [48, 0], sizes = [8, 8], strides = [1, 1]} : vector<64x8xf32> to vector<8x8xf32>
    %115 = vector.extract_strided_slice %106 {offsets = [56, 0], sizes = [8, 8], strides = [1, 1]} : vector<64x8xf32> to vector<8x8xf32>
    %116 = tpu.concatenate %112, %113, %114, %115 in 1 : vector<8x8xf32>, vector<8x8xf32>, vector<8x8xf32>, vector<8x8xf32> -> vector<8x32xf32>
    %117 = tpu.concatenate %111, %116 in 0 : vector<8x32xf32>, vector<8x32xf32> -> vector<16x32xf32>
    %118 = arith.truncf %117 : vector<16x32xf32> to vector<16x32xbf16>
    %cst_32 = arith.constant dense<0.000000e+00> : vector<16x128xf32>
    %119 = tpu.matmul %118, %28, %cst_32 {dimension_numbers = #tpu.dot_dimension_numbers<[1], [0], [0], [1], [0, 0, 1, 1], [], []>} : vector<16x32xbf16>, vector<32x128xbf16>, vector<16x128xf32> -> vector<16x128xf32>
    %120 = vector.extract_strided_slice %119 {offsets = [0, 0], sizes = [16, 32], strides = [1, 1]} : vector<16x128xf32> to vector<16x32xf32>
    %121 = vector.broadcast %34 : vector<1x32xf32> to vector<16x32xf32>
    %122 = arith.addf %120, %121 : vector<16x32xf32>
    %123 = arith.addf %11, %122 : vector<16x32xf32>
    %cst_33 = arith.constant dense<0.000000e+00> : vector<16xf32>
    %124 = vector.multi_reduction <add>, %123, %cst_33 [1] : vector<16x32xf32> to vector<16xf32>
    %125 = vector.shape_cast %124 : vector<16xf32> to vector<16x1xf32>
    %cst_34 = arith.constant 3.200000e+01 : f32
    %126 = vector.broadcast %cst_34 : f32 to vector<16x1xf32>
    %127 = arith.divf %125, %126 : vector<16x1xf32>
    %128 = vector.broadcast %127 : vector<16x1xf32> to vector<16x32xf32>
    %129 = arith.subf %123, %128 : vector<16x32xf32>
    %130 = arith.mulf %129, %129 : vector<16x32xf32>
    %cst_35 = arith.constant dense<0.000000e+00> : vector<16xf32>
    %131 = vector.multi_reduction <add>, %130, %cst_35 [1] : vector<16x32xf32> to vector<16xf32>
    %132 = vector.shape_cast %131 : vector<16xf32> to vector<16x1xf32>
    %cst_36 = arith.constant 3.200000e+01 : f32
    %133 = vector.broadcast %cst_36 : f32 to vector<16x1xf32>
    %134 = arith.divf %132, %133 : vector<16x1xf32>
    %135 = vector.broadcast %127 : vector<16x1xf32> to vector<16x32xf32>
    %136 = arith.subf %123, %135 : vector<16x32xf32>
    %cst_37 = arith.constant 9.99999974E-6 : f32
    %137 = vector.broadcast %cst_37 : f32 to vector<16x1xf32>
    %138 = arith.addf %134, %137 : vector<16x1xf32>
    %139 = math.rsqrt %138 : vector<16x1xf32>
    %140 = vector.broadcast %139 : vector<16x1xf32> to vector<16x32xf32>
    %141 = arith.mulf %136, %140 : vector<16x32xf32>
    %142 = vector.broadcast %35 : vector<1x32xf32> to vector<16x32xf32>
    %143 = arith.mulf %141, %142 : vector<16x32xf32>
    %144 = vector.broadcast %36 : vector<1x32xf32> to vector<16x32xf32>
    %145 = arith.addf %143, %144 : vector<16x32xf32>
    %146 = arith.truncf %145 : vector<16x32xf32> to vector<16x32xbf16>
    %cst_38 = arith.constant dense<0.000000e+00> : vector<16x128xf32>
    %147 = tpu.matmul %146, %29, %cst_38 {dimension_numbers = #tpu.dot_dimension_numbers<[1], [0], [0], [1], [0, 0, 1, 1], [], []>} : vector<16x32xbf16>, vector<32x128xbf16>, vector<16x128xf32> -> vector<16x128xf32>
    %148 = vector.broadcast %37 : vector<1x128xf32> to vector<16x128xf32>
    %149 = arith.addf %147, %148 : vector<16x128xf32>
    %cst_39 = arith.constant 5.000000e-01 : f32
    %150 = vector.broadcast %cst_39 : f32 to vector<16x128xf32>
    %151 = arith.mulf %150, %149 : vector<16x128xf32>
    %cst_40 = arith.constant 0.707106769 : f32
    %152 = vector.broadcast %cst_40 : f32 to vector<16x128xf32>
    %153 = arith.mulf %149, %152 : vector<16x128xf32>
    %154 = math.absf %153 : vector<16x128xf32>
    %cst_41 = arith.constant 0.327591091 : f32
    %155 = vector.broadcast %cst_41 : f32 to vector<16x128xf32>
    %156 = arith.mulf %155, %154 : vector<16x128xf32>
    %cst_42 = arith.constant 1.000000e+00 : f32
    %157 = vector.broadcast %cst_42 : f32 to vector<16x128xf32>
    %158 = arith.addf %157, %156 : vector<16x128xf32>
    %cst_43 = arith.constant 1.000000e+00 : f32
    %159 = vector.broadcast %cst_43 : f32 to vector<16x128xf32>
    %160 = arith.divf %159, %158 : vector<16x128xf32>
    %cst_44 = arith.constant 1.06140542 : f32
    %161 = vector.broadcast %cst_44 : f32 to vector<16x128xf32>
    %162 = arith.mulf %161, %160 : vector<16x128xf32>
    %cst_45 = arith.constant -1.45315206 : f32
    %163 = vector.broadcast %cst_45 : f32 to vector<16x128xf32>
    %164 = arith.addf %162, %163 : vector<16x128xf32>
    %165 = arith.mulf %164, %160 : vector<16x128xf32>
    %cst_46 = arith.constant 1.42141378 : f32
    %166 = vector.broadcast %cst_46 : f32 to vector<16x128xf32>
    %167 = arith.addf %165, %166 : vector<16x128xf32>
    %168 = arith.mulf %167, %160 : vector<16x128xf32>
    %cst_47 = arith.constant -0.284496725 : f32
    %169 = vector.broadcast %cst_47 : f32 to vector<16x128xf32>
    %170 = arith.addf %168, %169 : vector<16x128xf32>
    %171 = arith.mulf %170, %160 : vector<16x128xf32>
    %cst_48 = arith.constant 0.254829586 : f32
    %172 = vector.broadcast %cst_48 : f32 to vector<16x128xf32>
    %173 = arith.addf %171, %172 : vector<16x128xf32>
    %174 = arith.mulf %173, %160 : vector<16x128xf32>
    %cst_49 = arith.constant 0.000000e+00 : f32
    %175 = vector.broadcast %cst_49 : f32 to vector<16x128xf32>
    %176 = arith.subf %175, %154 : vector<16x128xf32>
    %177 = arith.mulf %176, %154 : vector<16x128xf32>
    %178 = math.exp %177 : vector<16x128xf32>
    %179 = arith.mulf %174, %178 : vector<16x128xf32>
    %cst_50 = arith.constant 1.000000e+00 : f32
    %180 = vector.broadcast %cst_50 : f32 to vector<16x128xf32>
    %181 = arith.subf %180, %179 : vector<16x128xf32>
    %cst_51 = arith.constant 0.000000e+00 : f32
    %182 = vector.broadcast %cst_51 : f32 to vector<16x128xf32>
    %183 = arith.cmpf oge, %153, %182 : vector<16x128xf32>
    %cst_52 = arith.constant 0.000000e+00 : f32
    %184 = vector.broadcast %cst_52 : f32 to vector<16x128xf32>
    %185 = arith.subf %184, %181 : vector<16x128xf32>
    %186 = arith.select %183, %181, %185 : vector<16x128xi1>, vector<16x128xf32>
    %cst_53 = arith.constant 1.000000e+00 : f32
    %187 = vector.broadcast %cst_53 : f32 to vector<16x128xf32>
    %188 = arith.addf %187, %186 : vector<16x128xf32>
    %189 = arith.mulf %151, %188 : vector<16x128xf32>
    %190 = arith.truncf %189 : vector<16x128xf32> to vector<16x128xbf16>
    %cst_54 = arith.constant dense<0.000000e+00> : vector<16x128xf32>
    %191 = tpu.matmul %190, %30, %cst_54 {dimension_numbers = #tpu.dot_dimension_numbers<[1], [0], [0], [1], [0, 0, 1, 1], [], []>} : vector<16x128xbf16>, vector<128x128xbf16>, vector<16x128xf32> -> vector<16x128xf32>
    %192 = vector.extract_strided_slice %191 {offsets = [0, 0], sizes = [16, 32], strides = [1, 1]} : vector<16x128xf32> to vector<16x32xf32>
    %193 = vector.broadcast %38 : vector<1x32xf32> to vector<16x32xf32>
    %194 = arith.addf %192, %193 : vector<16x32xf32>
    %195 = arith.addf %123, %194 : vector<16x32xf32>
    %c1248 = arith.constant 1248 : index
    %c0_55 = arith.constant 0 : index
    %196 = vector.load %arg1[%c1248, %c0_55] : memref<1472x128xbf16, #tpu.memory_space<vmem>>, vector<32x128xbf16>
    %c1280 = arith.constant 1280 : index
    %c0_56 = arith.constant 0 : index
    %197 = vector.load %arg1[%c1280, %c0_56] : memref<1472x128xbf16, #tpu.memory_space<vmem>>, vector<32x128xbf16>
    %c1312 = arith.constant 1312 : index
    %c0_57 = arith.constant 0 : index
    %198 = vector.load %arg1[%c1312, %c0_57] : memref<1472x128xbf16, #tpu.memory_space<vmem>>, vector<32x128xbf16>
    %c1344 = arith.constant 1344 : index
    %c0_58 = arith.constant 0 : index
    %199 = vector.load %arg1[%c1344, %c0_58] : memref<1472x128xbf16, #tpu.memory_space<vmem>>, vector<128x128xbf16>
    %c16 = arith.constant 16 : index
    %c0_59 = arith.constant 0 : index
    %200 = vector.load %arg2[%c16, %c0_59] : memref<32x128xf32, #tpu.memory_space<vmem>>, vector<1x32xf32>
    %c17 = arith.constant 17 : index
    %c0_60 = arith.constant 0 : index
    %201 = vector.load %arg2[%c17, %c0_60] : memref<32x128xf32, #tpu.memory_space<vmem>>, vector<1x32xf32>
    %c18 = arith.constant 18 : index
    %c0_61 = arith.constant 0 : index
    %202 = vector.load %arg2[%c18, %c0_61] : memref<32x128xf32, #tpu.memory_space<vmem>>, vector<1x128xf32>
    %c19 = arith.constant 19 : index
    %c0_62 = arith.constant 0 : index
    %203 = vector.load %arg2[%c19, %c0_62] : memref<32x128xf32, #tpu.memory_space<vmem>>, vector<1x32xf32>
    %c20 = arith.constant 20 : index
    %c0_63 = arith.constant 0 : index
    %204 = vector.load %arg2[%c20, %c0_63] : memref<32x128xf32, #tpu.memory_space<vmem>>, vector<1x32xf32>
    %c21 = arith.constant 21 : index
    %c0_64 = arith.constant 0 : index
    %205 = vector.load %arg2[%c21, %c0_64] : memref<32x128xf32, #tpu.memory_space<vmem>>, vector<1x32xf32>
    %c22 = arith.constant 22 : index
    %c0_65 = arith.constant 0 : index
    %206 = vector.load %arg2[%c22, %c0_65] : memref<32x128xf32, #tpu.memory_space<vmem>>, vector<1x128xf32>
    %c23 = arith.constant 23 : index
    %c0_66 = arith.constant 0 : index
    %207 = vector.load %arg2[%c23, %c0_66] : memref<32x128xf32, #tpu.memory_space<vmem>>, vector<1x32xf32>
    %cst_67 = arith.constant dense<0.000000e+00> : vector<16xf32>
    %208 = vector.multi_reduction <add>, %195, %cst_67 [1] : vector<16x32xf32> to vector<16xf32>
    %209 = vector.shape_cast %208 : vector<16xf32> to vector<16x1xf32>
    %cst_68 = arith.constant 3.200000e+01 : f32
    %210 = vector.broadcast %cst_68 : f32 to vector<16x1xf32>
    %211 = arith.divf %209, %210 : vector<16x1xf32>
    %212 = vector.broadcast %211 : vector<16x1xf32> to vector<16x32xf32>
    %213 = arith.subf %195, %212 : vector<16x32xf32>
    %214 = arith.mulf %213, %213 : vector<16x32xf32>
    %cst_69 = arith.constant dense<0.000000e+00> : vector<16xf32>
    %215 = vector.multi_reduction <add>, %214, %cst_69 [1] : vector<16x32xf32> to vector<16xf32>
    %216 = vector.shape_cast %215 : vector<16xf32> to vector<16x1xf32>
    %cst_70 = arith.constant 3.200000e+01 : f32
    %217 = vector.broadcast %cst_70 : f32 to vector<16x1xf32>
    %218 = arith.divf %216, %217 : vector<16x1xf32>
    %219 = vector.broadcast %211 : vector<16x1xf32> to vector<16x32xf32>
    %220 = arith.subf %195, %219 : vector<16x32xf32>
    %cst_71 = arith.constant 9.99999974E-6 : f32
    %221 = vector.broadcast %cst_71 : f32 to vector<16x1xf32>
    %222 = arith.addf %218, %221 : vector<16x1xf32>
    %223 = math.rsqrt %222 : vector<16x1xf32>
    %224 = vector.broadcast %223 : vector<16x1xf32> to vector<16x32xf32>
    %225 = arith.mulf %220, %224 : vector<16x32xf32>
    %226 = vector.broadcast %200 : vector<1x32xf32> to vector<16x32xf32>
    %227 = arith.mulf %225, %226 : vector<16x32xf32>
    %228 = vector.broadcast %201 : vector<1x32xf32> to vector<16x32xf32>
    %229 = arith.addf %227, %228 : vector<16x32xf32>
    %230 = arith.truncf %229 : vector<16x32xf32> to vector<16x32xbf16>
    %cst_72 = arith.constant dense<0.000000e+00> : vector<16x128xf32>
    %231 = tpu.matmul %230, %196, %cst_72 {dimension_numbers = #tpu.dot_dimension_numbers<[1], [0], [0], [1], [0, 0, 1, 1], [], []>} : vector<16x32xbf16>, vector<32x128xbf16>, vector<16x128xf32> -> vector<16x128xf32>
    %232 = vector.broadcast %202 : vector<1x128xf32> to vector<16x128xf32>
    %233 = arith.addf %231, %232 : vector<16x128xf32>
    %234 = vector.extract_strided_slice %233 {offsets = [0, 0], sizes = [16, 32], strides = [1, 1]} : vector<16x128xf32> to vector<16x32xf32>
    %235 = vector.extract_strided_slice %234 {offsets = [0, 0], sizes = [8, 8], strides = [1, 1]} : vector<16x32xf32> to vector<8x8xf32>
    %236 = vector.extract_strided_slice %234 {offsets = [0, 8], sizes = [8, 8], strides = [1, 1]} : vector<16x32xf32> to vector<8x8xf32>
    %237 = vector.extract_strided_slice %234 {offsets = [0, 16], sizes = [8, 8], strides = [1, 1]} : vector<16x32xf32> to vector<8x8xf32>
    %238 = vector.extract_strided_slice %234 {offsets = [0, 24], sizes = [8, 8], strides = [1, 1]} : vector<16x32xf32> to vector<8x8xf32>
    %239 = vector.extract_strided_slice %234 {offsets = [8, 0], sizes = [8, 8], strides = [1, 1]} : vector<16x32xf32> to vector<8x8xf32>
    %240 = vector.extract_strided_slice %234 {offsets = [8, 8], sizes = [8, 8], strides = [1, 1]} : vector<16x32xf32> to vector<8x8xf32>
    %241 = vector.extract_strided_slice %234 {offsets = [8, 16], sizes = [8, 8], strides = [1, 1]} : vector<16x32xf32> to vector<8x8xf32>
    %242 = vector.extract_strided_slice %234 {offsets = [8, 24], sizes = [8, 8], strides = [1, 1]} : vector<16x32xf32> to vector<8x8xf32>
    %243 = tpu.concatenate %235, %236, %237, %238, %239, %240, %241, %242 in 0 : vector<8x8xf32>, vector<8x8xf32>, vector<8x8xf32>, vector<8x8xf32>, vector<8x8xf32>, vector<8x8xf32>, vector<8x8xf32>, vector<8x8xf32> -> vector<64x8xf32>
    %244 = vector.extract_strided_slice %233 {offsets = [0, 32], sizes = [16, 32], strides = [1, 1]} : vector<16x128xf32> to vector<16x32xf32>
    %245 = vector.extract_strided_slice %244 {offsets = [0, 0], sizes = [8, 8], strides = [1, 1]} : vector<16x32xf32> to vector<8x8xf32>
    %246 = vector.extract_strided_slice %244 {offsets = [0, 8], sizes = [8, 8], strides = [1, 1]} : vector<16x32xf32> to vector<8x8xf32>
    %247 = vector.extract_strided_slice %244 {offsets = [0, 16], sizes = [8, 8], strides = [1, 1]} : vector<16x32xf32> to vector<8x8xf32>
    %248 = vector.extract_strided_slice %244 {offsets = [0, 24], sizes = [8, 8], strides = [1, 1]} : vector<16x32xf32> to vector<8x8xf32>
    %249 = vector.extract_strided_slice %244 {offsets = [8, 0], sizes = [8, 8], strides = [1, 1]} : vector<16x32xf32> to vector<8x8xf32>
    %250 = vector.extract_strided_slice %244 {offsets = [8, 8], sizes = [8, 8], strides = [1, 1]} : vector<16x32xf32> to vector<8x8xf32>
    %251 = vector.extract_strided_slice %244 {offsets = [8, 16], sizes = [8, 8], strides = [1, 1]} : vector<16x32xf32> to vector<8x8xf32>
    %252 = vector.extract_strided_slice %244 {offsets = [8, 24], sizes = [8, 8], strides = [1, 1]} : vector<16x32xf32> to vector<8x8xf32>
    %253 = tpu.concatenate %245, %246, %247, %248, %249, %250, %251, %252 in 0 : vector<8x8xf32>, vector<8x8xf32>, vector<8x8xf32>, vector<8x8xf32>, vector<8x8xf32>, vector<8x8xf32>, vector<8x8xf32>, vector<8x8xf32> -> vector<64x8xf32>
    %254 = vector.extract_strided_slice %233 {offsets = [0, 64], sizes = [16, 32], strides = [1, 1]} : vector<16x128xf32> to vector<16x32xf32>
    %255 = vector.extract_strided_slice %254 {offsets = [0, 0], sizes = [8, 8], strides = [1, 1]} : vector<16x32xf32> to vector<8x8xf32>
    %256 = vector.extract_strided_slice %254 {offsets = [0, 8], sizes = [8, 8], strides = [1, 1]} : vector<16x32xf32> to vector<8x8xf32>
    %257 = vector.extract_strided_slice %254 {offsets = [0, 16], sizes = [8, 8], strides = [1, 1]} : vector<16x32xf32> to vector<8x8xf32>
    %258 = vector.extract_strided_slice %254 {offsets = [0, 24], sizes = [8, 8], strides = [1, 1]} : vector<16x32xf32> to vector<8x8xf32>
    %259 = vector.extract_strided_slice %254 {offsets = [8, 0], sizes = [8, 8], strides = [1, 1]} : vector<16x32xf32> to vector<8x8xf32>
    %260 = vector.extract_strided_slice %254 {offsets = [8, 8], sizes = [8, 8], strides = [1, 1]} : vector<16x32xf32> to vector<8x8xf32>
    %261 = vector.extract_strided_slice %254 {offsets = [8, 16], sizes = [8, 8], strides = [1, 1]} : vector<16x32xf32> to vector<8x8xf32>
    %262 = vector.extract_strided_slice %254 {offsets = [8, 24], sizes = [8, 8], strides = [1, 1]} : vector<16x32xf32> to vector<8x8xf32>
    %263 = tpu.concatenate %255, %256, %257, %258, %259, %260, %261, %262 in 0 : vector<8x8xf32>, vector<8x8xf32>, vector<8x8xf32>, vector<8x8xf32>, vector<8x8xf32>, vector<8x8xf32>, vector<8x8xf32>, vector<8x8xf32> -> vector<64x8xf32>
    %cst_73 = arith.constant dense<0.000000e+00> : vector<64x64xf32>
    %264 = tpu.matmul %243, %253, %cst_73 {dimension_numbers = #tpu.dot_dimension_numbers<[1], [1], [0], [0], [0, 0, 1, 0], [], []>} : vector<64x8xf32>, vector<64x8xf32>, vector<64x64xf32> -> vector<64x64xf32>
    %265 = arith.addf %264, %26 : vector<64x64xf32>
    %cst_74 = arith.constant dense<0xFF800000> : vector<64xf32>
    %266 = vector.multi_reduction <maximumf>, %265, %cst_74 [1] : vector<64x64xf32> to vector<64xf32>
    %267 = vector.shape_cast %266 : vector<64xf32> to vector<64x1xf32>
    %268 = vector.broadcast %267 : vector<64x1xf32> to vector<64x64xf32>
    %269 = arith.subf %265, %268 : vector<64x64xf32>
    %270 = math.exp %269 : vector<64x64xf32>
    %cst_75 = arith.constant dense<0.000000e+00> : vector<64xf32>
    %271 = vector.multi_reduction <add>, %270, %cst_75 [1] : vector<64x64xf32> to vector<64xf32>
    %272 = vector.shape_cast %271 : vector<64xf32> to vector<64x1xf32>
    %273 = vector.broadcast %272 : vector<64x1xf32> to vector<64x64xf32>
    %274 = arith.divf %270, %273 : vector<64x64xf32>
    %cst_76 = arith.constant dense<0.000000e+00> : vector<64x8xf32>
    %275 = tpu.matmul %274, %263, %cst_76 {dimension_numbers = #tpu.dot_dimension_numbers<[1], [0], [0], [1], [0, 0, 1, 1], [], []>} : vector<64x64xf32>, vector<64x8xf32>, vector<64x8xf32> -> vector<64x8xf32>
    %276 = vector.extract_strided_slice %275 {offsets = [0, 0], sizes = [8, 8], strides = [1, 1]} : vector<64x8xf32> to vector<8x8xf32>
    %277 = vector.extract_strided_slice %275 {offsets = [8, 0], sizes = [8, 8], strides = [1, 1]} : vector<64x8xf32> to vector<8x8xf32>
    %278 = vector.extract_strided_slice %275 {offsets = [16, 0], sizes = [8, 8], strides = [1, 1]} : vector<64x8xf32> to vector<8x8xf32>
    %279 = vector.extract_strided_slice %275 {offsets = [24, 0], sizes = [8, 8], strides = [1, 1]} : vector<64x8xf32> to vector<8x8xf32>
    %280 = tpu.concatenate %276, %277, %278, %279 in 1 : vector<8x8xf32>, vector<8x8xf32>, vector<8x8xf32>, vector<8x8xf32> -> vector<8x32xf32>
    %281 = vector.extract_strided_slice %275 {offsets = [32, 0], sizes = [8, 8], strides = [1, 1]} : vector<64x8xf32> to vector<8x8xf32>
    %282 = vector.extract_strided_slice %275 {offsets = [40, 0], sizes = [8, 8], strides = [1, 1]} : vector<64x8xf32> to vector<8x8xf32>
    %283 = vector.extract_strided_slice %275 {offsets = [48, 0], sizes = [8, 8], strides = [1, 1]} : vector<64x8xf32> to vector<8x8xf32>
    %284 = vector.extract_strided_slice %275 {offsets = [56, 0], sizes = [8, 8], strides = [1, 1]} : vector<64x8xf32> to vector<8x8xf32>
    %285 = tpu.concatenate %281, %282, %283, %284 in 1 : vector<8x8xf32>, vector<8x8xf32>, vector<8x8xf32>, vector<8x8xf32> -> vector<8x32xf32>
    %286 = tpu.concatenate %280, %285 in 0 : vector<8x32xf32>, vector<8x32xf32> -> vector<16x32xf32>
    %287 = arith.truncf %286 : vector<16x32xf32> to vector<16x32xbf16>
    %cst_77 = arith.constant dense<0.000000e+00> : vector<16x128xf32>
    %288 = tpu.matmul %287, %197, %cst_77 {dimension_numbers = #tpu.dot_dimension_numbers<[1], [0], [0], [1], [0, 0, 1, 1], [], []>} : vector<16x32xbf16>, vector<32x128xbf16>, vector<16x128xf32> -> vector<16x128xf32>
    %289 = vector.extract_strided_slice %288 {offsets = [0, 0], sizes = [16, 32], strides = [1, 1]} : vector<16x128xf32> to vector<16x32xf32>
    %290 = vector.broadcast %203 : vector<1x32xf32> to vector<16x32xf32>
    %291 = arith.addf %289, %290 : vector<16x32xf32>
    %292 = arith.addf %195, %291 : vector<16x32xf32>
    %cst_78 = arith.constant dense<0.000000e+00> : vector<16xf32>
    %293 = vector.multi_reduction <add>, %292, %cst_78 [1] : vector<16x32xf32> to vector<16xf32>
    %294 = vector.shape_cast %293 : vector<16xf32> to vector<16x1xf32>
    %cst_79 = arith.constant 3.200000e+01 : f32
    %295 = vector.broadcast %cst_79 : f32 to vector<16x1xf32>
    %296 = arith.divf %294, %295 : vector<16x1xf32>
    %297 = vector.broadcast %296 : vector<16x1xf32> to vector<16x32xf32>
    %298 = arith.subf %292, %297 : vector<16x32xf32>
    %299 = arith.mulf %298, %298 : vector<16x32xf32>
    %cst_80 = arith.constant dense<0.000000e+00> : vector<16xf32>
    %300 = vector.multi_reduction <add>, %299, %cst_80 [1] : vector<16x32xf32> to vector<16xf32>
    %301 = vector.shape_cast %300 : vector<16xf32> to vector<16x1xf32>
    %cst_81 = arith.constant 3.200000e+01 : f32
    %302 = vector.broadcast %cst_81 : f32 to vector<16x1xf32>
    %303 = arith.divf %301, %302 : vector<16x1xf32>
    %304 = vector.broadcast %296 : vector<16x1xf32> to vector<16x32xf32>
    %305 = arith.subf %292, %304 : vector<16x32xf32>
    %cst_82 = arith.constant 9.99999974E-6 : f32
    %306 = vector.broadcast %cst_82 : f32 to vector<16x1xf32>
    %307 = arith.addf %303, %306 : vector<16x1xf32>
    %308 = math.rsqrt %307 : vector<16x1xf32>
    %309 = vector.broadcast %308 : vector<16x1xf32> to vector<16x32xf32>
    %310 = arith.mulf %305, %309 : vector<16x32xf32>
    %311 = vector.broadcast %204 : vector<1x32xf32> to vector<16x32xf32>
    %312 = arith.mulf %310, %311 : vector<16x32xf32>
    %313 = vector.broadcast %205 : vector<1x32xf32> to vector<16x32xf32>
    %314 = arith.addf %312, %313 : vector<16x32xf32>
    %315 = arith.truncf %314 : vector<16x32xf32> to vector<16x32xbf16>
    %cst_83 = arith.constant dense<0.000000e+00> : vector<16x128xf32>
    %316 = tpu.matmul %315, %198, %cst_83 {dimension_numbers = #tpu.dot_dimension_numbers<[1], [0], [0], [1], [0, 0, 1, 1], [], []>} : vector<16x32xbf16>, vector<32x128xbf16>, vector<16x128xf32> -> vector<16x128xf32>
    %317 = vector.broadcast %206 : vector<1x128xf32> to vector<16x128xf32>
    %318 = arith.addf %316, %317 : vector<16x128xf32>
    %cst_84 = arith.constant 5.000000e-01 : f32
    %319 = vector.broadcast %cst_84 : f32 to vector<16x128xf32>
    %320 = arith.mulf %319, %318 : vector<16x128xf32>
    %cst_85 = arith.constant 0.707106769 : f32
    %321 = vector.broadcast %cst_85 : f32 to vector<16x128xf32>
    %322 = arith.mulf %318, %321 : vector<16x128xf32>
    %323 = math.absf %322 : vector<16x128xf32>
    %cst_86 = arith.constant 0.327591091 : f32
    %324 = vector.broadcast %cst_86 : f32 to vector<16x128xf32>
    %325 = arith.mulf %324, %323 : vector<16x128xf32>
    %cst_87 = arith.constant 1.000000e+00 : f32
    %326 = vector.broadcast %cst_87 : f32 to vector<16x128xf32>
    %327 = arith.addf %326, %325 : vector<16x128xf32>
    %cst_88 = arith.constant 1.000000e+00 : f32
    %328 = vector.broadcast %cst_88 : f32 to vector<16x128xf32>
    %329 = arith.divf %328, %327 : vector<16x128xf32>
    %cst_89 = arith.constant 1.06140542 : f32
    %330 = vector.broadcast %cst_89 : f32 to vector<16x128xf32>
    %331 = arith.mulf %330, %329 : vector<16x128xf32>
    %cst_90 = arith.constant -1.45315206 : f32
    %332 = vector.broadcast %cst_90 : f32 to vector<16x128xf32>
    %333 = arith.addf %331, %332 : vector<16x128xf32>
    %334 = arith.mulf %333, %329 : vector<16x128xf32>
    %cst_91 = arith.constant 1.42141378 : f32
    %335 = vector.broadcast %cst_91 : f32 to vector<16x128xf32>
    %336 = arith.addf %334, %335 : vector<16x128xf32>
    %337 = arith.mulf %336, %329 : vector<16x128xf32>
    %cst_92 = arith.constant -0.284496725 : f32
    %338 = vector.broadcast %cst_92 : f32 to vector<16x128xf32>
    %339 = arith.addf %337, %338 : vector<16x128xf32>
    %340 = arith.mulf %339, %329 : vector<16x128xf32>
    %cst_93 = arith.constant 0.254829586 : f32
    %341 = vector.broadcast %cst_93 : f32 to vector<16x128xf32>
    %342 = arith.addf %340, %341 : vector<16x128xf32>
    %343 = arith.mulf %342, %329 : vector<16x128xf32>
    %cst_94 = arith.constant 0.000000e+00 : f32
    %344 = vector.broadcast %cst_94 : f32 to vector<16x128xf32>
    %345 = arith.subf %344, %323 : vector<16x128xf32>
    %346 = arith.mulf %345, %323 : vector<16x128xf32>
    %347 = math.exp %346 : vector<16x128xf32>
    %348 = arith.mulf %343, %347 : vector<16x128xf32>
    %cst_95 = arith.constant 1.000000e+00 : f32
    %349 = vector.broadcast %cst_95 : f32 to vector<16x128xf32>
    %350 = arith.subf %349, %348 : vector<16x128xf32>
    %cst_96 = arith.constant 0.000000e+00 : f32
    %351 = vector.broadcast %cst_96 : f32 to vector<16x128xf32>
    %352 = arith.cmpf oge, %322, %351 : vector<16x128xf32>
    %cst_97 = arith.constant 0.000000e+00 : f32
    %353 = vector.broadcast %cst_97 : f32 to vector<16x128xf32>
    %354 = arith.subf %353, %350 : vector<16x128xf32>
    %355 = arith.select %352, %350, %354 : vector<16x128xi1>, vector<16x128xf32>
    %cst_98 = arith.constant 1.000000e+00 : f32
    %356 = vector.broadcast %cst_98 : f32 to vector<16x128xf32>
    %357 = arith.addf %356, %355 : vector<16x128xf32>
    %358 = arith.mulf %320, %357 : vector<16x128xf32>
    %359 = arith.truncf %358 : vector<16x128xf32> to vector<16x128xbf16>
    %cst_99 = arith.constant dense<0.000000e+00> : vector<16x128xf32>
    %360 = tpu.matmul %359, %199, %cst_99 {dimension_numbers = #tpu.dot_dimension_numbers<[1], [0], [0], [1], [0, 0, 1, 1], [], []>} : vector<16x128xbf16>, vector<128x128xbf16>, vector<16x128xf32> -> vector<16x128xf32>
    %361 = vector.extract_strided_slice %360 {offsets = [0, 0], sizes = [16, 32], strides = [1, 1]} : vector<16x128xf32> to vector<16x32xf32>
    %362 = vector.broadcast %207 : vector<1x32xf32> to vector<16x32xf32>
    %363 = arith.addf %361, %362 : vector<16x32xf32>
    %364 = arith.addf %292, %363 : vector<16x32xf32>
    %c24 = arith.constant 24 : index
    %c0_100 = arith.constant 0 : index
    %365 = vector.load %arg2[%c24, %c0_100] : memref<32x128xf32, #tpu.memory_space<vmem>>, vector<1x32xf32>
    %c25 = arith.constant 25 : index
    %c0_101 = arith.constant 0 : index
    %366 = vector.load %arg2[%c25, %c0_101] : memref<32x128xf32, #tpu.memory_space<vmem>>, vector<1x32xf32>
    %c26 = arith.constant 26 : index
    %c0_102 = arith.constant 0 : index
    %367 = vector.load %arg2[%c26, %c0_102] : memref<32x128xf32, #tpu.memory_space<vmem>>, vector<1x32xf32>
    %c27 = arith.constant 27 : index
    %c0_103 = arith.constant 0 : index
    %368 = vector.load %arg2[%c27, %c0_103] : memref<32x128xf32, #tpu.memory_space<vmem>>, vector<1x1xf32>
    %369 = vector.extract_strided_slice %364 {offsets = [0, 0], sizes = [1, 32], strides = [1, 1]} : vector<16x32xf32> to vector<1x32xf32>
    %370 = vector.extract_strided_slice %364 {offsets = [8, 0], sizes = [1, 32], strides = [1, 1]} : vector<16x32xf32> to vector<1x32xf32>
    %371 = tpu.concatenate %369, %370 in 0 : vector<1x32xf32>, vector<1x32xf32> -> vector<2x32xf32>
    %cst_104 = arith.constant dense<0.000000e+00> : vector<2xf32>
    %372 = vector.multi_reduction <add>, %371, %cst_104 [1] : vector<2x32xf32> to vector<2xf32>
    %373 = vector.shape_cast %372 : vector<2xf32> to vector<2x1xf32>
    %cst_105 = arith.constant 3.200000e+01 : f32
    %374 = vector.broadcast %cst_105 : f32 to vector<2x1xf32>
    %375 = arith.divf %373, %374 : vector<2x1xf32>
    %376 = vector.broadcast %375 : vector<2x1xf32> to vector<2x32xf32>
    %377 = arith.subf %371, %376 : vector<2x32xf32>
    %378 = arith.mulf %377, %377 : vector<2x32xf32>
    %cst_106 = arith.constant dense<0.000000e+00> : vector<2xf32>
    %379 = vector.multi_reduction <add>, %378, %cst_106 [1] : vector<2x32xf32> to vector<2xf32>
    %380 = vector.shape_cast %379 : vector<2xf32> to vector<2x1xf32>
    %cst_107 = arith.constant 3.200000e+01 : f32
    %381 = vector.broadcast %cst_107 : f32 to vector<2x1xf32>
    %382 = arith.divf %380, %381 : vector<2x1xf32>
    %383 = vector.broadcast %375 : vector<2x1xf32> to vector<2x32xf32>
    %384 = arith.subf %371, %383 : vector<2x32xf32>
    %cst_108 = arith.constant 9.99999974E-6 : f32
    %385 = vector.broadcast %cst_108 : f32 to vector<2x1xf32>
    %386 = arith.addf %382, %385 : vector<2x1xf32>
    %387 = math.rsqrt %386 : vector<2x1xf32>
    %388 = vector.broadcast %387 : vector<2x1xf32> to vector<2x32xf32>
    %389 = arith.mulf %384, %388 : vector<2x32xf32>
    %390 = vector.broadcast %365 : vector<1x32xf32> to vector<2x32xf32>
    %391 = arith.mulf %389, %390 : vector<2x32xf32>
    %392 = vector.broadcast %366 : vector<1x32xf32> to vector<2x32xf32>
    %393 = arith.addf %391, %392 : vector<2x32xf32>
    %394 = vector.broadcast %367 : vector<1x32xf32> to vector<2x32xf32>
    %395 = arith.mulf %393, %394 : vector<2x32xf32>
    %cst_109 = arith.constant dense<0.000000e+00> : vector<2xf32>
    %396 = vector.multi_reduction <add>, %395, %cst_109 [1] : vector<2x32xf32> to vector<2xf32>
    %397 = vector.shape_cast %396 : vector<2xf32> to vector<2x1xf32>
    %398 = vector.broadcast %368 : vector<1x1xf32> to vector<2x1xf32>
    %399 = arith.addf %397, %398 : vector<2x1xf32>
    %cst_110 = arith.constant 5.000000e-01 : f32
    %400 = vector.broadcast %cst_110 : f32 to vector<2x1xf32>
    %401 = arith.mulf %400, %399 : vector<2x1xf32>
    %402 = math.tanh %401 : vector<2x1xf32>
    %cst_111 = arith.constant 1.000000e+00 : f32
    %403 = vector.broadcast %cst_111 : f32 to vector<2x1xf32>
    %404 = arith.addf %402, %403 : vector<2x1xf32>
    %cst_112 = arith.constant 5.000000e-01 : f32
    %405 = vector.broadcast %cst_112 : f32 to vector<2x1xf32>
    %406 = arith.mulf %405, %404 : vector<2x1xf32>
    %c0_113 = arith.constant 0 : index
    %c0_114 = arith.constant 0 : index
    %407 = vector.load %arg3[%c0_113, %c0_114] : memref<2x1xf32, #tpu.memory_space<vmem>>, vector<2x1xf32>
    tpu.vector_store %arg3[%c0_113, %c0_114], %406 {strides = array<i32>} : memref<2x1xf32, #tpu.memory_space<vmem>>, vector<2x1xf32>,
    return
  }
}

</mosaic_0001>

<llo_original>
// kernel: vit_discriminator_forward.1
$region0: #{vit_discriminator_forward.1}
  #allocation0 [shape = 'u32[]', space=smem, size = 0x4, offset = 0x4, fixed_abs, tag = 'smem constant byte address 0x4 - core index']
  #allocation1 [shape = 'u32[144,128]{1,0:T(1,128)}', space=vmem, size = 0x12000, scoped, tag = 'internal scratch']
  %s0 = inlined_call_operand.vmem [shape: bf16[8,1024], index: 0, kind: input, shape index: {}]
  %s1 = inlined_call_operand.vmem [shape: bf16[1472,128], index: 1, kind: input, shape index: {}]
  %s2 = inlined_call_operand.vmem [shape: f32[32,128], index: 2, kind: input, shape index: {}]
  %s3 = inlined_call_operand.vmem [shape: f32[2,1], index: 3, kind: output, shape index: {}]
  %s4 = sld [smem:[#allocation0]]
  $region22: #{vit_discriminator_forward.1} parent=0
    _
  %s6 = ssub.s32 1, %s4
  %s7 = scalar_select 0, %s6, %s4
  // Predicated region
  $region2: #{vit_discriminator_forward.1} parent=0 // pred_check
    _
  $region3: #{vit_discriminator_forward.1} parent=0 // pred_check_branch
    %9 = sbr.rel (0) target = $region5
  $region4: #{vit_discriminator_forward.1} parent=0 // pred_region
    _
  $region5: #{vit_discriminator_forward.1} parent=0 // pred_fallthru
    _
  // Predicated region
  $region6: #{vit_discriminator_forward.1} parent=0 // pred_check
    _
  $region7: #{vit_discriminator_forward.1} parent=0 // pred_check_branch
    %11 = sbr.rel (0) target = $region9
  $region8: #{vit_discriminator_forward.1} parent=0 // pred_region
    _
  $region9: #{vit_discriminator_forward.1} parent=0 // pred_fallthru
    _
  // Predicated region
  $region10: #{vit_discriminator_forward.1} parent=0 // pred_check
    _
  $region11: #{vit_discriminator_forward.1} parent=0 // pred_check_branch
    %13 = sbr.rel (0) target = $region13
  $region12: #{vit_discriminator_forward.1} parent=0 // pred_region
    _
  $region13: #{vit_discriminator_forward.1} parent=0 // pred_fallthru
    _
  %v15 = vld [vmem:[%s1] sm:$0xf]
  %v16 = vld [vmem:[%s1 + $0x4] sm:$0xf]
  %v17 = vld [vmem:[%s1 + $0x8] sm:$0xf]
  %v18 = vld [vmem:[%s1 + $0xc] sm:$0xf]
  %v19 = vld [vmem:[%s1 + $0x10] sm:$0xf]
  %v20 = vld [vmem:[%s1 + $0x14] sm:$0xf]
  %v21 = vld [vmem:[%s1 + $0x18] sm:$0xf]
  %v22 = vld [vmem:[%s1 + $0x1c] sm:$0xf]
  %v23 = vld [vmem:[%s1 + $0x20] sm:$0xf]
  %v24 = vld [vmem:[%s1 + $0x24] sm:$0xf]
  %v25 = vld [vmem:[%s1 + $0x28] sm:$0xf]
  %v26 = vld [vmem:[%s1 + $0x2c] sm:$0xf]
  %v27 = vld [vmem:[%s1 + $0x30] sm:$0xf]
  %v28 = vld [vmem:[%s1 + $0x34] sm:$0xf]
  %v29 = vld [vmem:[%s1 + $0x38] sm:$0xf]
  %v30 = vld [vmem:[%s1 + $0x3c] sm:$0xf]
  %v31 = vld [vmem:[%s1 + $0x40] sm:$0xf]
  %v32 = vld [vmem:[%s1 + $0x44] sm:$0xf]
  %v33 = vld [vmem:[%s1 + $0x48] sm:$0xf]
  %v34 = vld [vmem:[%s1 + $0x4c] sm:$0xf]
  %v35 = vld [vmem:[%s1 + $0x50] sm:$0xf]
  %v36 = vld [vmem:[%s1 + $0x54] sm:$0xf]
  %v37 = vld [vmem:[%s1 + $0x58] sm:$0xf]
  %v38 = vld [vmem:[%s1 + $0x5c] sm:$0xf]
  %v39 = vld [vmem:[%s1 + $0x60] sm:$0xf]
  %v40 = vld [vmem:[%s1 + $0x64] sm:$0xf]
  %v41 = vld [vmem:[%s1 + $0x68] sm:$0xf]
  %v42 = vld [vmem:[%s1 + $0x6c] sm:$0xf]
  %v43 = vld [vmem:[%s1 + $0x70] sm:$0xf]
  %v44 = vld [vmem:[%s1 + $0x74] sm:$0xf]
  %v45 = vld [vmem:[%s1 + $0x78] sm:$0xf]
  %v46 = vld [vmem:[%s1 + $0x7c] sm:$0xf]
  %v47 = vld [vmem:[%s1 + $0x80] sm:$0xf]
  %v48 = vld [vmem:[%s1 + $0x84] sm:$0xf]
  %v49 = vld [vmem:[%s1 + $0x88] sm:$0xf]
  %v50 = vld [vmem:[%s1 + $0x8c] sm:$0xf]
  %v51 = vld [vmem:[%s1 + $0x90] sm:$0xf]
  %v52 = vld [vmem:[%s1 + $0x94] sm:$0xf]
  %v53 = vld [vmem:[%s1 + $0x98] sm:$0xf]
  %v54 = vld [vmem:[%s1 + $0x9c] sm:$0xf]
  %v55 = vld [vmem:[%s1 + $0xa0] sm:$0xf]
  %v56 = vld [vmem:[%s1 + $0xa4] sm:$0xf]
  %v57 = vld [vmem:[%s1 + $0xa8] sm:$0xf]
  %v58 = vld [vmem:[%s1 + $0xac] sm:$0xf]
  %v59 = vld [vmem:[%s1 + $0xb0] sm:$0xf]
  %v60 = vld [vmem:[%s1 + $0xb4] sm:$0xf]
  %v61 = vld [vmem:[%s1 + $0xb8] sm:$0xf]
  %v62 = vld [vmem:[%s1 + $0xbc] sm:$0xf]
  %v63 = vld [vmem:[%s1 + $0xc0] sm:$0xf]
  %v64 = vld [vmem:[%s1 + $0xc4] sm:$0xf]
  %v65 = vld [vmem:[%s1 + $0xc8] sm:$0xf]
  %v66 = vld [vmem:[%s1 + $0xcc] sm:$0xf]
  %v67 = vld [vmem:[%s1 + $0xd0] sm:$0xf]
  %v68 = vld [vmem:[%s1 + $0xd4] sm:$0xf]
  %v69 = vld [vmem:[%s1 + $0xd8] sm:$0xf]
  %v70 = vld [vmem:[%s1 + $0xdc] sm:$0xf]
  %v71 = vld [vmem:[%s1 + $0xe0] sm:$0xf]
  %v72 = vld [vmem:[%s1 + $0xe4] sm:$0xf]
  %v73 = vld [vmem:[%s1 + $0xe8] sm:$0xf]
  %v74 = vld [vmem:[%s1 + $0xec] sm:$0xf]
  %v75 = vld [vmem:[%s1 + $0xf0] sm:$0xf]
  %v76 = vld [vmem:[%s1 + $0xf4] sm:$0xf]
  %v77 = vld [vmem:[%s1 + $0xf8] sm:$0xf]
  %v78 = vld [vmem:[%s1 + $0xfc] sm:$0xf]
  %v79 = vld [vmem:[%s1 + $0x100] sm:$0xf]
  %v80 = vld [vmem:[%s1 + $0x104] sm:$0xf]
  %v81 = vld [vmem:[%s1 + $0x108] sm:$0xf]
  %v82 = vld [vmem:[%s1 + $0x10c] sm:$0xf]
  %v83 = vld [vmem:[%s1 + $0x110] sm:$0xf]
  %v84 = vld [vmem:[%s1 + $0x114] sm:$0xf]
  %v85 = vld [vmem:[%s1 + $0x118] sm:$0xf]
  %v86 = vld [vmem:[%s1 + $0x11c] sm:$0xf]
  %v87 = vld [vmem:[%s1 + $0x120] sm:$0xf]
  %v88 = vld [vmem:[%s1 + $0x124] sm:$0xf]
  %v89 = vld [vmem:[%s1 + $0x128] sm:$0xf]
  %v90 = vld [vmem:[%s1 + $0x12c] sm:$0xf]
  %v91 = vld [vmem:[%s1 + $0x130] sm:$0xf]
  %v92 = vld [vmem:[%s1 + $0x134] sm:$0xf]
  %v93 = vld [vmem:[%s1 + $0x138] sm:$0xf]
  %v94 = vld [vmem:[%s1 + $0x13c] sm:$0xf]
  %v95 = vld [vmem:[%s1 + $0x140] sm:$0xf]
  %v96 = vld [vmem:[%s1 + $0x144] sm:$0xf]
  %v97 = vld [vmem:[%s1 + $0x148] sm:$0xf]
  %v98 = vld [vmem:[%s1 + $0x14c] sm:$0xf]
  %v99 = vld [vmem:[%s1 + $0x150] sm:$0xf]
  %v100 = vld [vmem:[%s1 + $0x154] sm:$0xf]
  %v101 = vld [vmem:[%s1 + $0x158] sm:$0xf]
  %v102 = vld [vmem:[%s1 + $0x15c] sm:$0xf]
  %v103 = vld [vmem:[%s1 + $0x160] sm:$0xf]
  %v104 = vld [vmem:[%s1 + $0x164] sm:$0xf]
  %v105 = vld [vmem:[%s1 + $0x168] sm:$0xf]
  %v106 = vld [vmem:[%s1 + $0x16c] sm:$0xf]
  %v107 = vld [vmem:[%s1 + $0x170] sm:$0xf]
  %v108 = vld [vmem:[%s1 + $0x174] sm:$0xf]
  %v109 = vld [vmem:[%s1 + $0x178] sm:$0xf]
  %v110 = vld [vmem:[%s1 + $0x17c] sm:$0xf]
  %v111 = vld [vmem:[%s1 + $0x180] sm:$0xf]
  %v112 = vld [vmem:[%s1 + $0x184] sm:$0xf]
  %v113 = vld [vmem:[%s1 + $0x188] sm:$0xf]
  %v114 = vld [vmem:[%s1 + $0x18c] sm:$0xf]
  %v115 = vld [vmem:[%s1 + $0x190] sm:$0xf]
  %v116 = vld [vmem:[%s1 + $0x194] sm:$0xf]
  %v117 = vld [vmem:[%s1 + $0x198] sm:$0xf]
  %v118 = vld [vmem:[%s1 + $0x19c] sm:$0xf]
  %v119 = vld [vmem:[%s1 + $0x1a0] sm:$0xf]
  %v120 = vld [vmem:[%s1 + $0x1a4] sm:$0xf]
  %v121 = vld [vmem:[%s1 + $0x1a8] sm:$0xf]
  %v122 = vld [vmem:[%s1 + $0x1ac] sm:$0xf]
  %v123 = vld [vmem:[%s1 + $0x1b0] sm:$0xf]
  %v124 = vld [vmem:[%s1 + $0x1b4] sm:$0xf]
  %v125 = vld [vmem:[%s1 + $0x1b8] sm:$0xf]
  %v126 = vld [vmem:[%s1 + $0x1bc] sm:$0xf]
  %v127 = vld [vmem:[%s1 + $0x1c0] sm:$0xf]
  %v128 = vld [vmem:[%s1 + $0x1c4] sm:$0xf]
  %v129 = vld [vmem:[%s1 + $0x1c8] sm:$0xf]
  %v130 = vld [vmem:[%s1 + $0x1cc] sm:$0xf]
  %v131 = vld [vmem:[%s1 + $0x1d0] sm:$0xf]
  %v132 = vld [vmem:[%s1 + $0x1d4] sm:$0xf]
  %v133 = vld [vmem:[%s1 + $0x1d8] sm:$0xf]
  %v134 = vld [vmem:[%s1 + $0x1dc] sm:$0xf]
  %v135 = vld [vmem:[%s1 + $0x1e0] sm:$0xf]
  %v136 = vld [vmem:[%s1 + $0x1e4] sm:$0xf]
  %v137 = vld [vmem:[%s1 + $0x1e8] sm:$0xf]
  %v138 = vld [vmem:[%s1 + $0x1ec] sm:$0xf]
  %v139 = vld [vmem:[%s1 + $0x1f0] sm:$0xf]
  %v140 = vld [vmem:[%s1 + $0x1f4] sm:$0xf]
  %v141 = vld [vmem:[%s1 + $0x1f8] sm:$0xf]
  %v142 = vld [vmem:[%s1 + $0x1fc] sm:$0xf]
  %v143 = vld [vmem:[%s0] sm:$0xff]
  %v144 = vld [vmem:[%s0 + $0x8] sm:$0xff]
  %v145 = vld [vmem:[%s0 + $0x10] sm:$0xff]
  %v146 = vld [vmem:[%s0 + $0x18] sm:$0xff]
  %v151 = vunpack.c.l.b16 %v143
  %v152 = vunpack.c.h.b16 %v143
  %v153 = vunpack.c.l.b16 %v144
  %v154 = vunpack.c.h.b16 %v144
  %v155 = vunpack.c.l.b16 %v145
  %v156 = vunpack.c.h.b16 %v145
  %v157 = vunpack.c.l.b16 %v146
  %v158 = vunpack.c.h.b16 %v146
  %v159 = vpack.c.b16 %v151, %v151
  %v160 = vpack.c.b16 %v152, %v152
  %v161 = vpack.c.b16 %v153, %v153
  %v162 = vpack.c.b16 %v154, %v154
  %v163 = vpack.c.b16 %v155, %v155
  %v164 = vpack.c.b16 %v156, %v156
  %v165 = vpack.c.b16 %v157, %v157
  %v166 = vpack.c.b16 %v158, %v158
  %v303 = vunpack.c.l.b16 %v15
  %v304 = vunpack.c.l.b16 %v16
  %v305 = vunpack.c.l.b16 %v17
  %v306 = vunpack.c.l.b16 %v18
  %v307 = vunpack.c.l.b16 %v19
  %v308 = vunpack.c.l.b16 %v20
  %v309 = vunpack.c.l.b16 %v21
  %v310 = vunpack.c.l.b16 %v22
  %v311 = vunpack.c.l.b16 %v23
  %v312 = vunpack.c.l.b16 %v24
  %v313 = vunpack.c.l.b16 %v25
  %v314 = vunpack.c.l.b16 %v26
  %v315 = vunpack.c.l.b16 %v27
  %v316 = vunpack.c.l.b16 %v28
  %v317 = vunpack.c.l.b16 %v29
  %v318 = vunpack.c.l.b16 %v30
  %v319 = vunpack.c.l.b16 %v31
  %v320 = vunpack.c.l.b16 %v32
  %v321 = vunpack.c.l.b16 %v33
  %v322 = vunpack.c.l.b16 %v34
  %v323 = vunpack.c.l.b16 %v35
  %v324 = vunpack.c.l.b16 %v36
  %v325 = vunpack.c.l.b16 %v37
  %v326 = vunpack.c.l.b16 %v38
  %v327 = vunpack.c.l.b16 %v39
  %v328 = vunpack.c.l.b16 %v40
  %v329 = vunpack.c.l.b16 %v41
  %v330 = vunpack.c.l.b16 %v42
  %v331 = vunpack.c.l.b16 %v43
  %v332 = vunpack.c.l.b16 %v44
  %v333 = vunpack.c.l.b16 %v45
  %v334 = vunpack.c.l.b16 %v46
  %v335 = vunpack.c.l.b16 %v47
  %v336 = vunpack.c.l.b16 %v48
  %v337 = vunpack.c.l.b16 %v49
  %v338 = vunpack.c.l.b16 %v50
  %v339 = vunpack.c.l.b16 %v51
  %v340 = vunpack.c.l.b16 %v52
  %v341 = vunpack.c.l.b16 %v53
  %v342 = vunpack.c.l.b16 %v54
  %v343 = vunpack.c.l.b16 %v55
  %v344 = vunpack.c.l.b16 %v56
  %v345 = vunpack.c.l.b16 %v57
  %v346 = vunpack.c.l.b16 %v58
  %v347 = vunpack.c.l.b16 %v59
  %v348 = vunpack.c.l.b16 %v60
  %v349 = vunpack.c.l.b16 %v61
  %v350 = vunpack.c.l.b16 %v62
  %v351 = vunpack.c.l.b16 %v63
  %v352 = vunpack.c.l.b16 %v64
  %v353 = vunpack.c.l.b16 %v65
  %v354 = vunpack.c.l.b16 %v66
  %v355 = vunpack.c.l.b16 %v67
  %v356 = vunpack.c.l.b16 %v68
  %v357 = vunpack.c.l.b16 %v69
  %v358 = vunpack.c.l.b16 %v70
  %v359 = vunpack.c.l.b16 %v71
  %v360 = vunpack.c.l.b16 %v72
  %v361 = vunpack.c.l.b16 %v73
  %v362 = vunpack.c.l.b16 %v74
  %v363 = vunpack.c.l.b16 %v75
  %v364 = vunpack.c.l.b16 %v76
  %v365 = vunpack.c.l.b16 %v77
  %v366 = vunpack.c.l.b16 %v78
  %v367 = vunpack.c.l.b16 %v79
  %v368 = vunpack.c.l.b16 %v80
  %v369 = vunpack.c.l.b16 %v81
  %v370 = vunpack.c.l.b16 %v82
  %v371 = vunpack.c.l.b16 %v83
  %v372 = vunpack.c.l.b16 %v84
  %v373 = vunpack.c.l.b16 %v85
  %v374 = vunpack.c.l.b16 %v86
  %v375 = vunpack.c.l.b16 %v87
  %v376 = vunpack.c.l.b16 %v88
  %v377 = vunpack.c.l.b16 %v89
  %v378 = vunpack.c.l.b16 %v90
  %v379 = vunpack.c.l.b16 %v91
  %v380 = vunpack.c.l.b16 %v92
  %v381 = vunpack.c.l.b16 %v93
  %v382 = vunpack.c.l.b16 %v94
  %v383 = vunpack.c.l.b16 %v95
  %v384 = vunpack.c.l.b16 %v96
  %v385 = vunpack.c.l.b16 %v97
  %v386 = vunpack.c.l.b16 %v98
  %v387 = vunpack.c.l.b16 %v99
  %v388 = vunpack.c.l.b16 %v100
  %v389 = vunpack.c.l.b16 %v101
  %v390 = vunpack.c.l.b16 %v102
  %v391 = vunpack.c.l.b16 %v103
  %v392 = vunpack.c.l.b16 %v104
  %v393 = vunpack.c.l.b16 %v105
  %v394 = vunpack.c.l.b16 %v106
  %v395 = vunpack.c.l.b16 %v107
  %v396 = vunpack.c.l.b16 %v108
  %v397 = vunpack.c.l.b16 %v109
  %v398 = vunpack.c.l.b16 %v110
  %v399 = vunpack.c.l.b16 %v111
  %v400 = vunpack.c.l.b16 %v112
  %v401 = vunpack.c.l.b16 %v113
  %v402 = vunpack.c.l.b16 %v114
  %v403 = vunpack.c.l.b16 %v115
  %v404 = vunpack.c.l.b16 %v116
  %v405 = vunpack.c.l.b16 %v117
  %v406 = vunpack.c.l.b16 %v118
  %v407 = vunpack.c.l.b16 %v119
  %v408 = vunpack.c.l.b16 %v120
  %v409 = vunpack.c.l.b16 %v121
  %v410 = vunpack.c.l.b16 %v122
  %v411 = vunpack.c.l.b16 %v123
  %v412 = vunpack.c.l.b16 %v124
  %v413 = vunpack.c.l.b16 %v125
  %v414 = vunpack.c.l.b16 %v126
  %v415 = vunpack.c.l.b16 %v127
  %v416 = vunpack.c.l.b16 %v128
  %v417 = vunpack.c.l.b16 %v129
  %v418 = vunpack.c.l.b16 %v130
  %v419 = vunpack.c.l.b16 %v131
  %v420 = vunpack.c.l.b16 %v132
  %v421 = vunpack.c.l.b16 %v133
  %v422 = vunpack.c.l.b16 %v134
  %v423 = vunpack.c.l.b16 %v135
  %v424 = vunpack.c.l.b16 %v136
  %v425 = vunpack.c.l.b16 %v137
  %v426 = vunpack.c.l.b16 %v138
  %v427 = vunpack.c.l.b16 %v139
  %v428 = vunpack.c.l.b16 %v140
  %v429 = vunpack.c.l.b16 %v141
  %v430 = vunpack.c.l.b16 %v142
  %v431 = vpack.c.b16 %v304, %v303
  %v432 = vpack.c.b16 %v306, %v305
  %v433 = vpack.c.b16 %v308, %v307
  %v434 = vpack.c.b16 %v310, %v309
  %v435 = vpack.c.b16 %v312, %v311
  %v436 = vpack.c.b16 %v314, %v313
  %v437 = vpack.c.b16 %v316, %v315
  %v438 = vpack.c.b16 %v318, %v317
  %v439 = vpack.c.b16 %v320, %v319
  %v440 = vpack.c.b16 %v322, %v321
  %v441 = vpack.c.b16 %v324, %v323
  %v442 = vpack.c.b16 %v326, %v325
  %v443 = vpack.c.b16 %v328, %v327
  %v444 = vpack.c.b16 %v330, %v329
  %v445 = vpack.c.b16 %v332, %v331
  %v446 = vpack.c.b16 %v334, %v333
  %v447 = vpack.c.b16 %v336, %v335
  %v448 = vpack.c.b16 %v338, %v337
  %v449 = vpack.c.b16 %v340, %v339
  %v450 = vpack.c.b16 %v342, %v341
  %v451 = vpack.c.b16 %v344, %v343
  %v452 = vpack.c.b16 %v346, %v345
  %v453 = vpack.c.b16 %v348, %v347
  %v454 = vpack.c.b16 %v350, %v349
  %v455 = vpack.c.b16 %v352, %v351
  %v456 = vpack.c.b16 %v354, %v353
  %v457 = vpack.c.b16 %v356, %v355
  %v458 = vpack.c.b16 %v358, %v357
  %v459 = vpack.c.b16 %v360, %v359
  %v460 = vpack.c.b16 %v362, %v361
  %v461 = vpack.c.b16 %v364, %v363
  %v462 = vpack.c.b16 %v366, %v365
  %v463 = vpack.c.b16 %v368, %v367
  %v464 = vpack.c.b16 %v370, %v369
  %v465 = vpack.c.b16 %v372, %v371
  %v466 = vpack.c.b16 %v374, %v373
  %v467 = vpack.c.b16 %v376, %v375
  %v468 = vpack.c.b16 %v378, %v377
  %v469 = vpack.c.b16 %v380, %v379
  %v470 = vpack.c.b16 %v382, %v381
  %v471 = vpack.c.b16 %v384, %v383
  %v472 = vpack.c.b16 %v386, %v385
  %v473 = vpack.c.b16 %v388, %v387
  %v474 = vpack.c.b16 %v390, %v389
  %v475 = vpack.c.b16 %v392, %v391
  %v476 = vpack.c.b16 %v394, %v393
  %v477 = vpack.c.b16 %v396, %v395
  %v478 = vpack.c.b16 %v398, %v397
  %v479 = vpack.c.b16 %v400, %v399
  %v480 = vpack.c.b16 %v402, %v401
  %v481 = vpack.c.b16 %v404, %v403
  %v482 = vpack.c.b16 %v406, %v405
  %v483 = vpack.c.b16 %v408, %v407
  %v484 = vpack.c.b16 %v410, %v409
  %v485 = vpack.c.b16 %v412, %v411
  %v486 = vpack.c.b16 %v414, %v413
  %v487 = vpack.c.b16 %v416, %v415
  %v488 = vpack.c.b16 %v418, %v417
  %v489 = vpack.c.b16 %v420, %v419
  %v490 = vpack.c.b16 %v422, %v421
  %v491 = vpack.c.b16 %v424, %v423
  %v492 = vpack.c.b16 %v426, %v425
  %v493 = vpack.c.b16 %v428, %v427
  %v494 = vpack.c.b16 %v430, %v429
  %559 = vmatprep.subr.bf16.mxu0 0
  %560 = vmatpush1.bf16.msra.mxu0 %v431
  %561 = vmatprep.subr.bf16.mxu0 0
  %562 = vmatpush1.bf16.msra.mxu0 %v432
  %563 = vmatprep.subr.bf16.mxu0 0
  %564 = vmatpush1.bf16.msra.mxu0 %v433
  %565 = vmatprep.subr.bf16.mxu0 0
  %566 = vmatpush1.bf16.msra.mxu0 %v434
  %567 = vmatprep.subr.bf16.mxu0 0
  %568 = vmatpush1.bf16.msra.mxu0 %v435
  %569 = vmatprep.subr.bf16.mxu0 0
  %570 = vmatpush1.bf16.msra.mxu0 %v436
  %571 = vmatprep.subr.bf16.mxu0 0
  %572 = vmatpush1.bf16.msra.mxu0 %v437
  %573 = vmatprep.subr.bf16.mxu0 0
  %574 = vmatpush1.bf16.msra.mxu0 %v438
  %575 = vmatprep.subr.bf16.mxu0 0
  %576 = vmatpush1.bf16.msra.mxu0 %v439
  %577 = vmatprep.subr.bf16.mxu0 0
  %578 = vmatpush1.bf16.msra.mxu0 %v440
  %579 = vmatprep.subr.bf16.mxu0 0
  %580 = vmatpush1.bf16.msra.mxu0 %v441
  %581 = vmatprep.subr.bf16.mxu0 0
  %582 = vmatpush1.bf16.msra.mxu0 %v442
  %583 = vmatprep.subr.bf16.mxu0 0
  %584 = vmatpush1.bf16.msra.mxu0 %v443
  %585 = vmatprep.subr.bf16.mxu0 0
  %586 = vmatpush1.bf16.msra.mxu0 %v444
  %587 = vmatprep.subr.bf16.mxu0 0
  %588 = vmatpush1.bf16.msra.mxu0 %v445
  %589 = vmatprep.subr.bf16.mxu0 0
  %590 = vmatpush1.bf16.msra.mxu0 %v446
  %591 = vmatprep.mubr.bf16.mxu0 %v160
  %592 = vmatmul.mubr.bf16.gmra.mrb[0].mxu0 %v159
  %v593 = vpop.f32.mrb[0].mxu0
  %v594 = vadd.f32 0.0, %v593
  %v595 = vpop.f32.mrb[0].mxu0
  %v596 = vpop.f32.mrb[0].mxu0
  %v597 = vpop.f32.mrb[0].mxu0
  %598 = vdwg.mxu0
  %599 = vmatprep.subr.bf16.mxu0 0
  %600 = vmatpush1.bf16.msra.mxu0 %v447
  %601 = vmatprep.subr.bf16.mxu0 0
  %602 = vmatpush1.bf16.msra.mxu0 %v448
  %603 = vmatprep.subr.bf16.mxu0 0
  %604 = vmatpush1.bf16.msra.mxu0 %v449
  %605 = vmatprep.subr.bf16.mxu0 0
  %606 = vmatpush1.bf16.msra.mxu0 %v450
  %607 = vmatprep.subr.bf16.mxu0 0
  %608 = vmatpush1.bf16.msra.mxu0 %v451
  %609 = vmatprep.subr.bf16.mxu0 0
  %610 = vmatpush1.bf16.msra.mxu0 %v452
  %611 = vmatprep.subr.bf16.mxu0 0
  %612 = vmatpush1.bf16.msra.mxu0 %v453
  %613 = vmatprep.subr.bf16.mxu0 0
  %614 = vmatpush1.bf16.msra.mxu0 %v454
  %615 = vmatprep.subr.bf16.mxu0 0
  %616 = vmatpush1.bf16.msra.mxu0 %v455
  %617 = vmatprep.subr.bf16.mxu0 0
  %618 = vmatpush1.bf16.msra.mxu0 %v456
  %619 = vmatprep.subr.bf16.mxu0 0
  %620 = vmatpush1.bf16.msra.mxu0 %v457
  %621 = vmatprep.subr.bf16.mxu0 0
  %622 = vmatpush1.bf16.msra.mxu0 %v458
  %623 = vmatprep.subr.bf16.mxu0 0
  %624 = vmatpush1.bf16.msra.mxu0 %v459
  %625 = vmatprep.subr.bf16.mxu0 0
  %626 = vmatpush1.bf16.msra.mxu0 %v460
  %627 = vmatprep.subr.bf16.mxu0 0
  %628 = vmatpush1.bf16.msra.mxu0 %v461
  %629 = vmatprep.subr.bf16.mxu0 0
  %630 = vmatpush1.bf16.msra.mxu0 %v462
  %631 = vmatprep.mubr.bf16.mxu0 %v162
  %632 = vmatmul.mubr.bf16.gmra.mrb[0].mxu0 %v161
  %v633 = vpop.f32.mrb[0].mxu0
  %v634 = vadd.f32 %v594, %v633
  %v635 = vpop.f32.mrb[0].mxu0
  %v636 = vpop.f32.mrb[0].mxu0
  %v637 = vpop.f32.mrb[0].mxu0
  %638 = vdwg.mxu0
  %639 = vmatprep.subr.bf16.mxu0 0
  %640 = vmatpush1.bf16.msra.mxu0 %v463
  %641 = vmatprep.subr.bf16.mxu0 0
  %642 = vmatpush1.bf16.msra.mxu0 %v464
  %643 = vmatprep.subr.bf16.mxu0 0
  %644 = vmatpush1.bf16.msra.mxu0 %v465
  %645 = vmatprep.subr.bf16.mxu0 0
  %646 = vmatpush1.bf16.msra.mxu0 %v466
  %647 = vmatprep.subr.bf16.mxu0 0
  %648 = vmatpush1.bf16.msra.mxu0 %v467
  %649 = vmatprep.subr.bf16.mxu0 0
  %650 = vmatpush1.bf16.msra.mxu0 %v468
  %651 = vmatprep.subr.bf16.mxu0 0
  %652 = vmatpush1.bf16.msra.mxu0 %v469
  %653 = vmatprep.subr.bf16.mxu0 0
  %654 = vmatpush1.bf16.msra.mxu0 %v470
  %655 = vmatprep.subr.bf16.mxu0 0
  %656 = vmatpush1.bf16.msra.mxu0 %v471
  %657 = vmatprep.subr.bf16.mxu0 0
  %658 = vmatpush1.bf16.msra.mxu0 %v472
  %659 = vmatprep.subr.bf16.mxu0 0
  %660 = vmatpush1.bf16.msra.mxu0 %v473
  %661 = vmatprep.subr.bf16.mxu0 0
  %662 = vmatpush1.bf16.msra.mxu0 %v474
  %663 = vmatprep.subr.bf16.mxu0 0
  %664 = vmatpush1.bf16.msra.mxu0 %v475
  %665 = vmatprep.subr.bf16.mxu0 0
  %666 = vmatpush1.bf16.msra.mxu0 %v476
  %667 = vmatprep.subr.bf16.mxu0 0
  %668 = vmatpush1.bf16.msra.mxu0 %v477
  %669 = vmatprep.subr.bf16.mxu0 0
  %670 = vmatpush1.bf16.msra.mxu0 %v478
  %671 = vmatprep.mubr.bf16.mxu0 %v164
  %672 = vmatmul.mubr.bf16.gmra.mrb[0].mxu0 %v163
  %v673 = vpop.f32.mrb[0].mxu0
  %v674 = vadd.f32 %v634, %v673
  %v675 = vpop.f32.mrb[0].mxu0
  %v676 = vpop.f32.mrb[0].mxu0
  %v677 = vpop.f32.mrb[0].mxu0
  %678 = vdwg.mxu0
  %679 = vmatprep.subr.bf16.mxu0 0
  %680 = vmatpush1.bf16.msra.mxu0 %v479
  %681 = vmatprep.subr.bf16.mxu0 0
  %682 = vmatpush1.bf16.msra.mxu0 %v480
  %683 = vmatprep.subr.bf16.mxu0 0
  %684 = vmatpush1.bf16.msra.mxu0 %v481
  %685 = vmatprep.subr.bf16.mxu0 0
  %686 = vmatpush1.bf16.msra.mxu0 %v482
  %687 = vmatprep.subr.bf16.mxu0 0
  %688 = vmatpush1.bf16.msra.mxu0 %v483
  %689 = vmatprep.subr.bf16.mxu0 0
  %690 = vmatpush1.bf16.msra.mxu0 %v484
  %691 = vmatprep.subr.bf16.mxu0 0
  %692 = vmatpush1.bf16.msra.mxu0 %v485
  %693 = vmatprep.subr.bf16.mxu0 0
  %694 = vmatpush1.bf16.msra.mxu0 %v486
  %695 = vmatprep.subr.bf16.mxu0 0
  %696 = vmatpush1.bf16.msra.mxu0 %v487
  %697 = vmatprep.subr.bf16.mxu0 0
  %698 = vmatpush1.bf16.msra.mxu0 %v488
  %699 = vmatprep.subr.bf16.mxu0 0
  %700 = vmatpush1.bf16.msra.mxu0 %v489
  %701 = vmatprep.subr.bf16.mxu0 0
  %702 = vmatpush1.bf16.msra.mxu0 %v490
  %703 = vmatprep.subr.bf16.mxu0 0
  %704 = vmatpush1.bf16.msra.mxu0 %v491
  %705 = vmatprep.subr.bf16.mxu0 0
  %706 = vmatpush1.bf16.msra.mxu0 %v492
  %707 = vmatprep.subr.bf16.mxu0 0
  %708 = vmatpush1.bf16.msra.mxu0 %v493
  %709 = vmatprep.subr.bf16.mxu0 0
  %710 = vmatpush1.bf16.msra.mxu0 %v494
  %711 = vmatprep.mubr.bf16.mxu0 %v166
  %712 = vmatmul.mubr.bf16.gmra.mrb[0].mxu0 %v165
  %v713 = vpop.f32.mrb[0].mxu0
  %v714 = vadd.f32 %v674, %v713
  %v715 = vpop.f32.mrb[0].mxu0
  %v716 = vpop.f32.mrb[0].mxu0
  %v717 = vpop.f32.mrb[0].mxu0
  %718 = vdwg.mxu0
  %v719 = vld [vmem:[%s2] sm:$0x1]
  %v720 = vld [vmem:[%s2 + $0x1] sm:$0xf]
  %v721 = vadd.f32 %v714, %v720
  %v723 = vrot.slane %v720, 4
  %v725 = vadd.f32 %v714, %v723
  %v727 = vrot.slane %v721, 7
  %v730 = vrot.slane %v725, 3
  %vm732 = vcmask 1040384
  %v733 = vsel %vm732, %v719, %v727
  %vm734 = vcmask 1044480
  %v735 = vsel %vm734, %v733, 0.0
  %v736 = vsel %vm732, %v719, %v730
  %v737 = vsel %vm734, %v736, 0.0
  %v738 = vlaneseq
  %v739 = vshrl.u32 %v738, 7
  %v740 = vadd.s32 %v739, 8
  %v741 = vadd.s32 %v739, 16
  %v742 = vadd.s32 %v739, 24
  %v743 = vadd.s32 %v739, 32
  %v744 = vadd.s32 %v739, 40
  %v745 = vadd.s32 %v739, 48
  %v746 = vadd.s32 %v739, 56
  %v747 = vlaneseq
  %v748 = vand.u32 %v747, 127
  %v749 = vshra.s32 %v739, 3
  %v750 = vshra.s32 %v740, 3
  %v751 = vshra.s32 %v741, 3
  %v752 = vshra.s32 %v742, 3
  %v753 = vshra.s32 %v743, 3
  %v754 = vshra.s32 %v744, 3
  %v755 = vshra.s32 %v745, 3
  %v756 = vshra.s32 %v746, 3
  %v757 = vshra.s32 %v748, 3
  %vm758 = vcmp.eq.s32.totalorder %v749, %v757
  %vm759 = vcmp.eq.s32.totalorder %v750, %v757
  %vm760 = vcmp.eq.s32.totalorder %v751, %v757
  %vm761 = vcmp.eq.s32.totalorder %v752, %v757
  %vm762 = vcmp.eq.s32.totalorder %v753, %v757
  %vm763 = vcmp.eq.s32.totalorder %v754, %v757
  %vm764 = vcmp.eq.s32.totalorder %v755, %v757
  %vm765 = vcmp.eq.s32.totalorder %v756, %v757
  %v766 = vand.u32 %v748, 7
  %vm767 = vcmp.lt.s32.totalorder %v766, 5
  %vm768 = vmand %vm758, %vm767
  %vm769 = vmand %vm759, %vm767
  %vm770 = vmand %vm760, %vm767
  %vm771 = vmand %vm761, %vm767
  %vm772 = vmand %vm762, %vm767
  %vm773 = vmand %vm763, %vm767
  %vm774 = vmand %vm764, %vm767
  %vm775 = vmand %vm765, %vm767
  %v776 = vsel %vm768, 0.0, -1e+30
  %v777 = vsel %vm769, 0.0, -1e+30
  %v778 = vsel %vm770, 0.0, -1e+30
  %v779 = vsel %vm771, 0.0, -1e+30
  %v780 = vsel %vm772, 0.0, -1e+30
  %v781 = vsel %vm773, 0.0, -1e+30
  %v782 = vsel %vm774, 0.0, -1e+30
  %v783 = vsel %vm775, 0.0, -1e+30
  %v784 = vld [vmem:[%s1 + $0x200] sm:$0xf]
  %v785 = vld [vmem:[%s1 + $0x204] sm:$0xf]
  %v786 = vld [vmem:[%s1 + $0x208] sm:$0xf]
  %v787 = vld [vmem:[%s1 + $0x20c] sm:$0xf]
  %v788 = vld [vmem:[%s1 + $0x210] sm:$0xf]
  %v789 = vld [vmem:[%s1 + $0x214] sm:$0xf]
  %v790 = vld [vmem:[%s1 + $0x218] sm:$0xf]
  %v791 = vld [vmem:[%s1 + $0x21c] sm:$0xf]
  %v792 = vld [vmem:[%s1 + $0x220] sm:$0xf]
  %v793 = vld [vmem:[%s1 + $0x224] sm:$0xf]
  %v794 = vld [vmem:[%s1 + $0x228] sm:$0xf]
  %v795 = vld [vmem:[%s1 + $0x22c] sm:$0xf]
  %v796 = vld [vmem:[%s1 + $0x230] sm:$0xf]
  %v797 = vld [vmem:[%s1 + $0x234] sm:$0xf]
  %v798 = vld [vmem:[%s1 + $0x238] sm:$0xf]
  %v799 = vld [vmem:[%s1 + $0x23c] sm:$0xf]
  %v800 = vld [vmem:[%s1 + $0x240] sm:$0xf]
  %v801 = vld [vmem:[%s1 + $0x244] sm:$0xf]
  %v802 = vld [vmem:[%s1 + $0x248] sm:$0xf]
  %v803 = vld [vmem:[%s1 + $0x24c] sm:$0xf]
  %v804 = vld [vmem:[%s1 + $0x250] sm:$0xf]
  %v805 = vld [vmem:[%s1 + $0x254] sm:$0xf]
  %v806 = vld [vmem:[%s1 + $0x258] sm:$0xf]
  %v807 = vld [vmem:[%s1 + $0x25c] sm:$0xf]
  %v808 = vld [vmem:[%s1 + $0x260] sm:$0xf]
  %v809 = vld [vmem:[%s1 + $0x264] sm:$0xf]
  %v810 = vld [vmem:[%s1 + $0x268] sm:$0xf]
  %v811 = vld [vmem:[%s1 + $0x26c] sm:$0xf]
  %v812 = vld [vmem:[%s2 + $0x8] sm:$0x1]
  %v813 = vld [vmem:[%s2 + $0x9] sm:$0x1]
  %v814 = vld [vmem:[%s2 + $0xa] sm:$0x1]
  %v815 = vld [vmem:[%s2 + $0xb] sm:$0x1]
  %v816 = vld [vmem:[%s2 + $0xc] sm:$0x1]
  %v817 = vld [vmem:[%s2 + $0xd] sm:$0x1]
  %v818 = vld [vmem:[%s2 + $0xe] sm:$0x1]
  %v819 = vld [vmem:[%s2 + $0xf] sm:$0x1]
  %vm820 = vcmask 261120
  %v821 = vsel %vm820, %v735, 0.0
  %822 = vadd.xlane.f32.xlu0 %v821
  %v823 = vpop.xlane.xlu0 %822
  %v824 = vsel %vm820, %v737, 0.0
  %825 = vadd.xlane.f32.xlu0 %v824
  %v826 = vpop.xlane.xlu0 %825
  %v827 = vrcp.pop 32.0
  %v828 = vmul.f32 %v823, %v827
  %v829 = vmul.f32 %v826, %v827
  %v830 = vsub.f32 %v735, %v828
  %v831 = vsub.f32 %v737, %v829
  %v832 = vmul.f32 %v830, %v830
  %v833 = vmul.f32 %v831, %v831
  %v834 = vsel %vm820, %v832, 0.0
  %835 = vadd.xlane.f32.xlu0 %v834
  %v836 = vpop.xlane.xlu0 %835
  %v837 = vsel %vm820, %v833, 0.0
  %838 = vadd.xlane.f32.xlu0 %v837
  %v839 = vpop.xlane.xlu0 %838
  %v840 = vmul.f32 %v836, %v827
  %v841 = vmul.f32 %v839, %v827
  %v842 = vadd.f32 %v840, 1e-05
  %v843 = vadd.f32 %v841, 1e-05
  %v844 = vrsqrt.pop %v842
  %v845 = vrsqrt.pop %v843
  %v846 = vmul.f32 %v830, %v844
  %v847 = vmul.f32 %v831, %v845
  %v848 = vlaneseq
  %v849 = vshrl.u32 %v848, 7
  %v850 = vsub.s32 0, %v849
  %v851 = vrot.slane %v812, %v850
  %v852 = vmul.f32 %v846, %v851
  %v853 = vmul.f32 %v847, %v851
  %v854 = vlaneseq
  %v855 = vshrl.u32 %v854, 7
  %v856 = vsub.s32 0, %v855
  %v857 = vrot.slane %v813, %v856
  %v858 = vadd.f32 %v852, %v857
  %v859 = vadd.f32 %v853, %v857
  %v860 = vpack.c.bf16 %v859, %v858
  %v861 = vlaneseq
  %v862 = vshrl.u32 %v861, 7
  %v863 = vsub.s32 0, %v862
  %v864 = vrot.slane %v814, %v863
  %v869 = vunpack.c.l.b16 %v784
  %v870 = vunpack.c.l.b16 %v785
  %v871 = vunpack.c.l.b16 %v786
  %v872 = vunpack.c.l.b16 %v787
  %v873 = vpack.c.b16 %v870, %v869
  %v874 = vpack.c.b16 %v872, %v871
  %v878 = vsel %vm820, %v860, 0
  %880 = vmatprep.subr.bf16.mxu0 0
  %881 = vmatpush1.bf16.msra.mxu0 %v873
  %882 = vmatprep.subr.bf16.mxu0 0
  %883 = vmatpush1.bf16.msra.mxu0 %v874
  %884 = vmatprep.subr.bf16.mxu0 0
  %885 = vmatpush1.bf16.msra.mxu0 0
  %886 = vmatprep.subr.bf16.mxu0 0
  %887 = vmatpush1.bf16.msra.mxu0 0
  %888 = vmatprep.subr.bf16.mxu0 0
  %889 = vmatpush1.bf16.msra.mxu0 0
  %890 = vmatprep.subr.bf16.mxu0 0
  %891 = vmatpush1.bf16.msra.mxu0 0
  %892 = vmatprep.subr.bf16.mxu0 0
  %893 = vmatpush1.bf16.msra.mxu0 0
  %894 = vmatprep.subr.bf16.mxu0 0
  %895 = vmatpush1.bf16.msra.mxu0 0
  %896 = vmatprep.subr.bf16.mxu0 0
  %897 = vmatpush1.bf16.msra.mxu0 0
  %898 = vmatprep.subr.bf16.mxu0 0
  %899 = vmatpush1.bf16.msra.mxu0 0
  %900 = vmatprep.subr.bf16.mxu0 0
  %901 = vmatpush1.bf16.msra.mxu0 0
  %902 = vmatprep.subr.bf16.mxu0 0
  %903 = vmatpush1.bf16.msra.mxu0 0
  %904 = vmatprep.subr.bf16.mxu0 0
  %905 = vmatpush1.bf16.msra.mxu0 0
  %906 = vmatprep.subr.bf16.mxu0 0
  %907 = vmatpush1.bf16.msra.mxu0 0
  %908 = vmatprep.subr.bf16.mxu0 0
  %909 = vmatpush1.bf16.msra.mxu0 0
  %910 = vmatprep.subr.bf16.mxu0 0
  %911 = vmatpush1.bf16.msra.mxu0 0
  %912 = vmatprep.mubr.bf16.mxu0 0
  %913 = vmatmul.mubr.bf16.gmra.mrb[0].mxu0 %v878
  %v914 = vpop.f32.mrb[0].mxu0
  %v915 = vadd.f32 %v864, %v914
  %v916 = vpop.f32.mrb[0].mxu0
  %v917 = vpop.f32.mrb[0].mxu0
  %v918 = vadd.f32 %v864, %v917
  %v919 = vpop.f32.mrb[0].mxu0
  %920 = vdwg.mxu0
  %922 = vrot.lane.b32.xlu0 %v915, 120
  %v923 = vpop.permute.xlu0 %922
  %924 = vrot.lane.b32.xlu0 %v915, 112
  %v925 = vpop.permute.xlu0 %924
  %926 = vrot.lane.b32.xlu0 %v915, 104
  %v927 = vpop.permute.xlu0 %926
  %929 = vrot.lane.b32.xlu0 %v918, 120
  %v930 = vpop.permute.xlu0 %929
  %931 = vrot.lane.b32.xlu0 %v918, 112
  %v932 = vpop.permute.xlu0 %931
  %933 = vrot.lane.b32.xlu0 %v918, 104
  %v934 = vpop.permute.xlu0 %933
  %935 = vrot.lane.b32.xlu0 %v915, 96
  %v936 = vpop.permute.xlu0 %935
  %937 = vrot.lane.b32.xlu0 %v923, 96
  %v938 = vpop.permute.xlu0 %937
  %939 = vrot.lane.b32.xlu0 %v925, 96
  %v940 = vpop.permute.xlu0 %939
  %941 = vrot.lane.b32.xlu0 %v927, 96
  %v942 = vpop.permute.xlu0 %941
  %943 = vrot.lane.b32.xlu0 %v918, 96
  %v944 = vpop.permute.xlu0 %943
  %945 = vrot.lane.b32.xlu0 %v930, 96
  %v946 = vpop.permute.xlu0 %945
  %947 = vrot.lane.b32.xlu0 %v932, 96
  %v948 = vpop.permute.xlu0 %947
  %949 = vrot.lane.b32.xlu0 %v934, 96
  %v950 = vpop.permute.xlu0 %949
  %vm951 = vcmask 64512
  %v952 = vsel %vm951, %v915, 0
  %v954 = vsel %vm951, %v923, 0
  %v956 = vsel %vm951, %v925, 0
  %v958 = vsel %vm951, %v927, 0
  %v960 = vsel %vm951, %v918, 0
  %v962 = vsel %vm951, %v930, 0
  %v964 = vsel %vm951, %v932, 0
  %v966 = vsel %vm951, %v934, 0
  %v968 = vsel %vm951, %v936, 0
  %v970 = vsel %vm951, %v938, 0
  %v972 = vsel %vm951, %v940, 0
  %v974 = vsel %vm951, %v942, 0
  %v976 = vsel %vm951, %v944, 0
  %v978 = vsel %vm951, %v946, 0
  %v980 = vsel %vm951, %v948, 0
  %v982 = vsel %vm951, %v950, 0
  %984 = vmatprep.subr.mxu0 0.0
  %985 = vmatpush1.xpose.msra.mxu0 %v968
  %986 = vmatprep.subr.mxu0 0.0
  %987 = vmatpush1.xpose.msra.mxu0 %v970
  %988 = vmatprep.subr.mxu0 0.0
  %989 = vmatpush1.xpose.msra.mxu0 %v972
  %990 = vmatprep.subr.mxu0 0.0
  %991 = vmatpush1.xpose.msra.mxu0 %v974
  %992 = vmatprep.subr.mxu0 0.0
  %993 = vmatpush1.xpose.msra.mxu0 %v976
  %994 = vmatprep.subr.mxu0 0.0
  %995 = vmatpush1.xpose.msra.mxu0 %v978
  %996 = vmatprep.subr.mxu0 0.0
  %997 = vmatpush1.xpose.msra.mxu0 %v980
  %998 = vmatprep.subr.mxu0 0.0
  %999 = vmatpush1.xpose.msra.mxu0 %v982
  %1000 = vmatprep.subr.mxu0 0.0
  %1001 = vmatpush1.xpose.msra.mxu0 0.0
  %1002 = vmatprep.subr.mxu0 0.0
  %1003 = vmatpush1.xpose.msra.mxu0 0.0
  %1004 = vmatprep.subr.mxu0 0.0
  %1005 = vmatpush1.xpose.msra.mxu0 0.0
  %1006 = vmatprep.subr.mxu0 0.0
  %1007 = vmatpush1.xpose.msra.mxu0 0.0
  %1008 = vmatprep.subr.mxu0 0.0
  %1009 = vmatpush1.xpose.msra.mxu0 0.0
  %1010 = vmatprep.subr.mxu0 0.0
  %1011 = vmatpush1.xpose.msra.mxu0 0.0
  %1012 = vmatprep.subr.mxu0 0.0
  %1013 = vmatpush1.xpose.msra.mxu0 0.0
  %1014 = vmatprep.subr.mxu0 0.0
  %1015 = vmatpush1.xpose.msra.mxu0 0.0
  %1016 = vmatprep.subr.mxu0 0.0
  %1017 = vmatpush1.xpose.msra.mxu0 0.0
  %1018 = vmatprep.subr.mxu0 0.0
  %1019 = vmatpush1.xpose.msra.mxu0 0.0
  %1020 = vmatprep.subr.mxu0 0.0
  %1021 = vmatpush1.xpose.msra.mxu0 0.0
  %1022 = vmatprep.subr.mxu0 0.0
  %1023 = vmatpush1.xpose.msra.mxu0 0.0
  %1024 = vmatprep.subr.mxu0 0.0
  %1025 = vmatpush1.xpose.msra.mxu0 0.0
  %1026 = vmatprep.subr.mxu0 0.0
  %1027 = vmatpush1.xpose.msra.mxu0 0.0
  %1028 = vmatprep.subr.mxu0 0.0
  %1029 = vmatpush1.xpose.msra.mxu0 0.0
  %1030 = vmatprep.subr.mxu0 0.0
  %1031 = vmatpush1.xpose.msra.mxu0 0.0
  %1032 = vmatprep.subr.mxu0 0.0
  %1033 = vmatpush1.xpose.msra.mxu0 0.0
  %1034 = vmatprep.subr.mxu0 0.0
  %1035 = vmatpush1.xpose.msra.mxu0 0.0
  %1036 = vmatprep.subr.mxu0 0.0
  %1037 = vmatpush1.xpose.msra.mxu0 0.0
  %1038 = vmatprep.subr.mxu0 0.0
  %1039 = vmatpush1.xpose.msra.mxu0 0.0
  %1040 = vmatprep.subr.mxu0 0.0
  %1041 = vmatpush1.xpose.msra.mxu0 0.0
  %1042 = vmatprep.subr.mxu0 0.0
  %1043 = vmatpush1.xpose.msra.mxu0 0.0
  %1044 = vmatprep.subr.mxu0 0.0
  %1045 = vmatpush1.xpose.msra.mxu0 0.0
  %1046 = vmatprep.subr.mxu0 0.0
  %1047 = vmatpush1.xpose.msra.mxu0 0.0
  %1048 = vmatprep.mubr.f32.mxu0 0.0
  %1049 = vmatmul.mubr.f32.gmra.mrb[0].mxu0 %v952
  %v1050 = vpop.f32.mrb[0].mxu0
  %v1051 = vadd.f32 %v776, %v1050
  %v1052 = vpop.f32.mrb[0].mxu0
  %1053 = vmatprep.mubr.f32.mxu0 0.0
  %1054 = vmatmul.mubr.f32.gmra.mrb[0].mxu0 %v954
  %v1055 = vpop.f32.mrb[0].mxu0
  %v1056 = vadd.f32 %v777, %v1055
  %v1057 = vpop.f32.mrb[0].mxu0
  %1058 = vmatprep.mubr.f32.mxu0 0.0
  %1059 = vmatmul.mubr.f32.gmra.mrb[0].mxu0 %v956
  %v1060 = vpop.f32.mrb[0].mxu0
  %v1061 = vadd.f32 %v778, %v1060
  %v1062 = vpop.f32.mrb[0].mxu0
  %1063 = vmatprep.mubr.f32.mxu0 0.0
  %1064 = vmatmul.mubr.f32.gmra.mrb[0].mxu0 %v958
  %v1065 = vpop.f32.mrb[0].mxu0
  %v1066 = vadd.f32 %v779, %v1065
  %v1067 = vpop.f32.mrb[0].mxu0
  %1068 = vmatprep.mubr.f32.mxu0 0.0
  %1069 = vmatmul.mubr.f32.gmra.mrb[0].mxu0 %v960
  %v1070 = vpop.f32.mrb[0].mxu0
  %v1071 = vadd.f32 %v780, %v1070
  %v1072 = vpop.f32.mrb[0].mxu0
  %1073 = vmatprep.mubr.f32.mxu0 0.0
  %1074 = vmatmul.mubr.f32.gmra.mrb[0].mxu0 %v962
  %v1075 = vpop.f32.mrb[0].mxu0
  %v1076 = vadd.f32 %v781, %v1075
  %v1077 = vpop.f32.mrb[0].mxu0
  %1078 = vmatprep.mubr.f32.mxu0 0.0
  %1079 = vmatmul.mubr.f32.gmra.mrb[0].mxu0 %v964
  %v1080 = vpop.f32.mrb[0].mxu0
  %v1081 = vadd.f32 %v782, %v1080
  %v1082 = vpop.f32.mrb[0].mxu0
  %1083 = vmatprep.mubr.f32.mxu0 0.0
  %1084 = vmatmul.mubr.f32.gmra.mrb[0].mxu0 %v966
  %v1085 = vpop.f32.mrb[0].mxu0
  %v1086 = vadd.f32 %v783, %v1085
  %v1087 = vpop.f32.mrb[0].mxu0
  %1088 = vdwg.mxu0
  %vm1089 = vcmask 523264
  %v1090 = vsel %vm1089, %v1051, -inf
  %1091 = vmax.xlane.f32.xlu0 %v1090
  %v1092 = vpop.xlane.xlu0 %1091
  %v1093 = vsel %vm1089, %v1056, -inf
  %1094 = vmax.xlane.f32.xlu0 %v1093
  %v1095 = vpop.xlane.xlu0 %1094
  %v1096 = vsel %vm1089, %v1061, -inf
  %1097 = vmax.xlane.f32.xlu0 %v1096
  %v1098 = vpop.xlane.xlu0 %1097
  %v1099 = vsel %vm1089, %v1066, -inf
  %1100 = vmax.xlane.f32.xlu0 %v1099
  %v1101 = vpop.xlane.xlu0 %1100
  %v1102 = vsel %vm1089, %v1071, -inf
  %1103 = vmax.xlane.f32.xlu0 %v1102
  %v1104 = vpop.xlane.xlu0 %1103
  %v1105 = vsel %vm1089, %v1076, -inf
  %1106 = vmax.xlane.f32.xlu0 %v1105
  %v1107 = vpop.xlane.xlu0 %1106
  %v1108 = vsel %vm1089, %v1081, -inf
  %1109 = vmax.xlane.f32.xlu0 %v1108
  %v1110 = vpop.xlane.xlu0 %1109
  %v1111 = vsel %vm1089, %v1086, -inf
  %1112 = vmax.xlane.f32.xlu0 %v1111
  %v1113 = vpop.xlane.xlu0 %1112
  %v1114 = vsub.f32 %v1051, %v1092
  %v1115 = vsub.f32 %v1056, %v1095
  %v1116 = vsub.f32 %v1061, %v1098
  %v1117 = vsub.f32 %v1066, %v1101
  %v1118 = vsub.f32 %v1071, %v1104
  %v1119 = vsub.f32 %v1076, %v1107
  %v1120 = vsub.f32 %v1081, %v1110
  %v1121 = vsub.f32 %v1086, %v1113
  %v1122 = vmul.f32 %v1114, 1.442695
  %v1123 = vpow.pop %v1122
  %v1124 = vmul.f32 %v1115, 1.442695
  %v1125 = vpow.pop %v1124
  %v1126 = vmul.f32 %v1116, 1.442695
  %v1127 = vpow.pop %v1126
  %v1128 = vmul.f32 %v1117, 1.442695
  %v1129 = vpow.pop %v1128
  %v1130 = vmul.f32 %v1118, 1.442695
  %v1131 = vpow.pop %v1130
  %v1132 = vmul.f32 %v1119, 1.442695
  %v1133 = vpow.pop %v1132
  %v1134 = vmul.f32 %v1120, 1.442695
  %v1135 = vpow.pop %v1134
  %v1136 = vmul.f32 %v1121, 1.442695
  %v1137 = vpow.pop %v1136
  %v1138 = vsel %vm1089, %v1123, 0.0
  %1139 = vadd.xlane.f32.xlu0 %v1138
  %v1140 = vpop.xlane.xlu0 %1139
  %v1141 = vsel %vm1089, %v1125, 0.0
  %1142 = vadd.xlane.f32.xlu0 %v1141
  %v1143 = vpop.xlane.xlu0 %1142
  %v1144 = vsel %vm1089, %v1127, 0.0
  %1145 = vadd.xlane.f32.xlu0 %v1144
  %v1146 = vpop.xlane.xlu0 %1145
  %v1147 = vsel %vm1089, %v1129, 0.0
  %1148 = vadd.xlane.f32.xlu0 %v1147
  %v1149 = vpop.xlane.xlu0 %1148
  %v1150 = vsel %vm1089, %v1131, 0.0
  %1151 = vadd.xlane.f32.xlu0 %v1150
  %v1152 = vpop.xlane.xlu0 %1151
  %v1153 = vsel %vm1089, %v1133, 0.0
  %1154 = vadd.xlane.f32.xlu0 %v1153
  %v1155 = vpop.xlane.xlu0 %1154
  %v1156 = vsel %vm1089, %v1135, 0.0
  %1157 = vadd.xlane.f32.xlu0 %v1156
  %v1158 = vpop.xlane.xlu0 %1157
  %v1159 = vsel %vm1089, %v1137, 0.0
  %1160 = vadd.xlane.f32.xlu0 %v1159
  %v1161 = vpop.xlane.xlu0 %1160
  %v1162 = vrcp.pop %v1140
  %v1163 = vmul.f32 %v1123, %v1162
  %v1164 = vrcp.pop %v1143
  %v1165 = vmul.f32 %v1125, %v1164
  %v1166 = vrcp.pop %v1146
  %v1167 = vmul.f32 %v1127, %v1166
  %v1168 = vrcp.pop %v1149
  %v1169 = vmul.f32 %v1129, %v1168
  %v1170 = vrcp.pop %v1152
  %v1171 = vmul.f32 %v1131, %v1170
  %v1172 = vrcp.pop %v1155
  %v1173 = vmul.f32 %v1133, %v1172
  %v1174 = vrcp.pop %v1158
  %v1175 = vmul.f32 %v1135, %v1174
  %v1176 = vrcp.pop %v1161
  %v1177 = vmul.f32 %v1137, %v1176
  %1178 = vrot.lane.b32.xlu0 %v915, 64
  %v1179 = vpop.permute.xlu0 %1178
  %1180 = vrot.lane.b32.xlu0 %v923, 64
  %v1181 = vpop.permute.xlu0 %1180
  %1182 = vrot.lane.b32.xlu0 %v925, 64
  %v1183 = vpop.permute.xlu0 %1182
  %1184 = vrot.lane.b32.xlu0 %v927, 64
  %v1185 = vpop.permute.xlu0 %1184
  %1186 = vrot.lane.b32.xlu0 %v918, 64
  %v1187 = vpop.permute.xlu0 %1186
  %1188 = vrot.lane.b32.xlu0 %v930, 64
  %v1189 = vpop.permute.xlu0 %1188
  %1190 = vrot.lane.b32.xlu0 %v932, 64
  %v1191 = vpop.permute.xlu0 %1190
  %1192 = vrot.lane.b32.xlu0 %v934, 64
  %v1193 = vpop.permute.xlu0 %1192
  %v1203 = vsel %vm1089, %v1163, 0
  %v1206 = vsel %vm1089, %v1165, 0
  %v1209 = vsel %vm1089, %v1167, 0
  %v1212 = vsel %vm1089, %v1169, 0
  %v1215 = vsel %vm1089, %v1171, 0
  %v1218 = vsel %vm1089, %v1173, 0
  %v1221 = vsel %vm1089, %v1175, 0
  %v1224 = vsel %vm1089, %v1177, 0
  %1226 = vmatprep.subr.mxu0 0.0
  %1227 = vmatpush1.msra.mxu0 %v1179
  %1228 = vmatprep.subr.mxu0 0.0
  %1229 = vmatpush1.msra.mxu0 %v1181
  %1230 = vmatprep.subr.mxu0 0.0
  %1231 = vmatpush1.msra.mxu0 %v1183
  %1232 = vmatprep.subr.mxu0 0.0
  %1233 = vmatpush1.msra.mxu0 %v1185
  %1234 = vmatprep.subr.mxu0 0.0
  %1235 = vmatpush1.msra.mxu0 %v1187
  %1236 = vmatprep.subr.mxu0 0.0
  %1237 = vmatpush1.msra.mxu0 %v1189
  %1238 = vmatprep.subr.mxu0 0.0
  %1239 = vmatpush1.msra.mxu0 %v1191
  %1240 = vmatprep.subr.mxu0 0.0
  %1241 = vmatpush1.msra.mxu0 %v1193
  %1242 = vmatprep.subr.mxu0 0.0
  %1243 = vmatpush1.msra.mxu0 0.0
  %1244 = vmatprep.subr.mxu0 0.0
  %1245 = vmatpush1.msra.mxu0 0.0
  %1246 = vmatprep.subr.mxu0 0.0
  %1247 = vmatpush1.msra.mxu0 0.0
  %1248 = vmatprep.subr.mxu0 0.0
  %1249 = vmatpush1.msra.mxu0 0.0
  %1250 = vmatprep.subr.mxu0 0.0
  %1251 = vmatpush1.msra.mxu0 0.0
  %1252 = vmatprep.subr.mxu0 0.0
  %1253 = vmatpush1.msra.mxu0 0.0
  %1254 = vmatprep.subr.mxu0 0.0
  %1255 = vmatpush1.msra.mxu0 0.0
  %1256 = vmatprep.subr.mxu0 0.0
  %1257 = vmatpush1.msra.mxu0 0.0
  %1258 = vmatprep.subr.mxu0 0.0
  %1259 = vmatpush1.msra.mxu0 0.0
  %1260 = vmatprep.subr.mxu0 0.0
  %1261 = vmatpush1.msra.mxu0 0.0
  %1262 = vmatprep.subr.mxu0 0.0
  %1263 = vmatpush1.msra.mxu0 0.0
  %1264 = vmatprep.subr.mxu0 0.0
  %1265 = vmatpush1.msra.mxu0 0.0
  %1266 = vmatprep.subr.mxu0 0.0
  %1267 = vmatpush1.msra.mxu0 0.0
  %1268 = vmatprep.subr.mxu0 0.0
  %1269 = vmatpush1.msra.mxu0 0.0
  %1270 = vmatprep.subr.mxu0 0.0
  %1271 = vmatpush1.msra.mxu0 0.0
  %1272 = vmatprep.subr.mxu0 0.0
  %1273 = vmatpush1.msra.mxu0 0.0
  %1274 = vmatprep.subr.mxu0 0.0
  %1275 = vmatpush1.msra.mxu0 0.0
  %1276 = vmatprep.subr.mxu0 0.0
  %1277 = vmatpush1.msra.mxu0 0.0
  %1278 = vmatprep.subr.mxu0 0.0
  %1279 = vmatpush1.msra.mxu0 0.0
  %1280 = vmatprep.subr.mxu0 0.0
  %1281 = vmatpush1.msra.mxu0 0.0
  %1282 = vmatprep.subr.mxu0 0.0
  %1283 = vmatpush1.msra.mxu0 0.0
  %1284 = vmatprep.subr.mxu0 0.0
  %1285 = vmatpush1.msra.mxu0 0.0
  %1286 = vmatprep.subr.mxu0 0.0
  %1287 = vmatpush1.msra.mxu0 0.0
  %1288 = vmatprep.subr.mxu0 0.0
  %1289 = vmatpush1.msra.mxu0 0.0
  %1290 = vmatprep.mubr.f32.mxu0 0.0
  %1291 = vmatmul.mubr.f32.gmra.mrb[0].mxu0 %v1203
  %v1292 = vpop.f32.mrb[0].mxu0
  %v1293 = vadd.f32 0.0, %v1292
  %v1294 = vpop.f32.mrb[0].mxu0
  %1295 = vmatprep.mubr.f32.mxu0 0.0
  %1296 = vmatmul.mubr.f32.gmra.mrb[0].mxu0 %v1206
  %v1297 = vpop.f32.mrb[0].mxu0
  %v1298 = vadd.f32 0.0, %v1297
  %v1299 = vpop.f32.mrb[0].mxu0
  %1300 = vmatprep.mubr.f32.mxu0 0.0
  %1301 = vmatmul.mubr.f32.gmra.mrb[0].mxu0 %v1209
  %v1302 = vpop.f32.mrb[0].mxu0
  %v1303 = vadd.f32 0.0, %v1302
  %v1304 = vpop.f32.mrb[0].mxu0
  %1305 = vmatprep.mubr.f32.mxu0 0.0
  %1306 = vmatmul.mubr.f32.gmra.mrb[0].mxu0 %v1212
  %v1307 = vpop.f32.mrb[0].mxu0
  %v1308 = vadd.f32 0.0, %v1307
  %v1309 = vpop.f32.mrb[0].mxu0
  %1310 = vmatprep.mubr.f32.mxu0 0.0
  %1311 = vmatmul.mubr.f32.gmra.mrb[0].mxu0 %v1215
  %v1312 = vpop.f32.mrb[0].mxu0
  %v1313 = vadd.f32 0.0, %v1312
  %v1314 = vpop.f32.mrb[0].mxu0
  %1315 = vmatprep.mubr.f32.mxu0 0.0
  %1316 = vmatmul.mubr.f32.gmra.mrb[0].mxu0 %v1218
  %v1317 = vpop.f32.mrb[0].mxu0
  %v1318 = vadd.f32 0.0, %v1317
  %v1319 = vpop.f32.mrb[0].mxu0
  %1320 = vmatprep.mubr.f32.mxu0 0.0
  %1321 = vmatmul.mubr.f32.gmra.mrb[0].mxu0 %v1221
  %v1322 = vpop.f32.mrb[0].mxu0
  %v1323 = vadd.f32 0.0, %v1322
  %v1324 = vpop.f32.mrb[0].mxu0
  %1325 = vmatprep.mubr.f32.mxu0 0.0
  %1326 = vmatmul.mubr.f32.gmra.mrb[0].mxu0 %v1224
  %v1327 = vpop.f32.mrb[0].mxu0
  %v1328 = vadd.f32 0.0, %v1327
  %v1329 = vpop.f32.mrb[0].mxu0
  %1330 = vdwg.mxu0
  %1332 = vrot.lane.b32.xlu0 %v1298, 8
  %v1333 = vpop.permute.xlu0 %1332
  %1336 = vrot.lane.b32.xlu0 %v1303, 16
  %v1337 = vpop.permute.xlu0 %1336
  %1340 = vrot.lane.b32.xlu0 %v1308, 24
  %v1341 = vpop.permute.xlu0 %1340
  %v1343 = vsel %vm951, %v1293, %v1333
  %vm1344 = vcmask 130048
  %v1345 = vsel %vm1344, %v1343, %v1337
  %vm1346 = vcmask 195584
  %v1347 = vsel %vm1346, %v1345, %v1341
  %1349 = vrot.lane.b32.xlu0 %v1318, 8
  %v1350 = vpop.permute.xlu0 %1349
  %1353 = vrot.lane.b32.xlu0 %v1323, 16
  %v1354 = vpop.permute.xlu0 %1353
  %1357 = vrot.lane.b32.xlu0 %v1328, 24
  %v1358 = vpop.permute.xlu0 %1357
  %v1360 = vsel %vm951, %v1313, %v1350
  %v1361 = vsel %vm1344, %v1360, %v1354
  %v1362 = vsel %vm1346, %v1361, %v1358
  %v1363 = vpack.c.bf16 %v1362, %v1347
  %v1368 = vunpack.c.l.b16 %v788
  %v1369 = vunpack.c.l.b16 %v789
  %v1370 = vunpack.c.l.b16 %v790
  %v1371 = vunpack.c.l.b16 %v791
  %v1372 = vpack.c.b16 %v1369, %v1368
  %v1373 = vpack.c.b16 %v1371, %v1370
  %v1377 = vsel %vm820, %v1363, 0
  %1379 = vmatprep.subr.bf16.mxu0 0
  %1380 = vmatpush1.bf16.msra.mxu0 %v1372
  %1381 = vmatprep.subr.bf16.mxu0 0
  %1382 = vmatpush1.bf16.msra.mxu0 %v1373
  %1383 = vmatprep.subr.bf16.mxu0 0
  %1384 = vmatpush1.bf16.msra.mxu0 0
  %1385 = vmatprep.subr.bf16.mxu0 0
  %1386 = vmatpush1.bf16.msra.mxu0 0
  %1387 = vmatprep.subr.bf16.mxu0 0
  %1388 = vmatpush1.bf16.msra.mxu0 0
  %1389 = vmatprep.subr.bf16.mxu0 0
  %1390 = vmatpush1.bf16.msra.mxu0 0
  %1391 = vmatprep.subr.bf16.mxu0 0
  %1392 = vmatpush1.bf16.msra.mxu0 0
  %1393 = vmatprep.subr.bf16.mxu0 0
  %1394 = vmatpush1.bf16.msra.mxu0 0
  %1395 = vmatprep.subr.bf16.mxu0 0
  %1396 = vmatpush1.bf16.msra.mxu0 0
  %1397 = vmatprep.subr.bf16.mxu0 0
  %1398 = vmatpush1.bf16.msra.mxu0 0
  %1399 = vmatprep.subr.bf16.mxu0 0
  %1400 = vmatpush1.bf16.msra.mxu0 0
  %1401 = vmatprep.subr.bf16.mxu0 0
  %1402 = vmatpush1.bf16.msra.mxu0 0
  %1403 = vmatprep.subr.bf16.mxu0 0
  %1404 = vmatpush1.bf16.msra.mxu0 0
  %1405 = vmatprep.subr.bf16.mxu0 0
  %1406 = vmatpush1.bf16.msra.mxu0 0
  %1407 = vmatprep.subr.bf16.mxu0 0
  %1408 = vmatpush1.bf16.msra.mxu0 0
  %1409 = vmatprep.subr.bf16.mxu0 0
  %1410 = vmatpush1.bf16.msra.mxu0 0
  %1411 = vmatprep.mubr.bf16.mxu0 0
  %1412 = vmatmul.mubr.bf16.gmra.mrb[0].mxu0 %v1377
  %v1413 = vpop.f32.mrb[0].mxu0
  %v1414 = vadd.f32 0.0, %v1413
  %v1415 = vpop.f32.mrb[0].mxu0
  %v1416 = vpop.f32.mrb[0].mxu0
  %v1417 = vadd.f32 0.0, %v1416
  %v1418 = vpop.f32.mrb[0].mxu0
  %1419 = vdwg.mxu0
  %v1420 = vlaneseq
  %v1421 = vshrl.u32 %v1420, 7
  %v1422 = vsub.s32 0, %v1421
  %v1423 = vrot.slane %v815, %v1422
  %v1424 = vadd.f32 %v1414, %v1423
  %v1425 = vadd.f32 %v1417, %v1423
  %v1426 = vadd.f32 %v735, %v1424
  %v1427 = vadd.f32 %v737, %v1425
  %v1428 = vsel %vm820, %v1426, 0.0
  %1429 = vadd.xlane.f32.xlu0 %v1428
  %v1430 = vpop.xlane.xlu0 %1429
  %v1431 = vsel %vm820, %v1427, 0.0
  %1432 = vadd.xlane.f32.xlu0 %v1431
  %v1433 = vpop.xlane.xlu0 %1432
  %v1434 = vmul.f32 %v1430, %v827
  %v1435 = vmul.f32 %v1433, %v827
  %v1436 = vsub.f32 %v1426, %v1434
  %v1437 = vsub.f32 %v1427, %v1435
  %v1438 = vmul.f32 %v1436, %v1436
  %v1439 = vmul.f32 %v1437, %v1437
  %v1440 = vsel %vm820, %v1438, 0.0
  %1441 = vadd.xlane.f32.xlu0 %v1440
  %v1442 = vpop.xlane.xlu0 %1441
  %v1443 = vsel %vm820, %v1439, 0.0
  %1444 = vadd.xlane.f32.xlu0 %v1443
  %v1445 = vpop.xlane.xlu0 %1444
  %v1446 = vmul.f32 %v1442, %v827
  %v1447 = vmul.f32 %v1445, %v827
  %v1448 = vadd.f32 %v1446, 1e-05
  %v1449 = vadd.f32 %v1447, 1e-05
  %v1450 = vrsqrt.pop %v1448
  %v1451 = vrsqrt.pop %v1449
  %v1452 = vmul.f32 %v1436, %v1450
  %v1453 = vmul.f32 %v1437, %v1451
  %v1454 = vlaneseq
  %v1455 = vshrl.u32 %v1454, 7
  %v1456 = vsub.s32 0, %v1455
  %v1457 = vrot.slane %v816, %v1456
  %v1458 = vmul.f32 %v1452, %v1457
  %v1459 = vmul.f32 %v1453, %v1457
  %v1460 = vlaneseq
  %v1461 = vshrl.u32 %v1460, 7
  %v1462 = vsub.s32 0, %v1461
  %v1463 = vrot.slane %v817, %v1462
  %v1464 = vadd.f32 %v1458, %v1463
  %v1465 = vadd.f32 %v1459, %v1463
  %v1466 = vpack.c.bf16 %v1465, %v1464
  %v1467 = vlaneseq
  %v1468 = vshrl.u32 %v1467, 7
  %v1469 = vsub.s32 0, %v1468
  %v1470 = vrot.slane %v818, %v1469
  %v1475 = vunpack.c.l.b16 %v792
  %v1476 = vunpack.c.l.b16 %v793
  %v1477 = vunpack.c.l.b16 %v794
  %v1478 = vunpack.c.l.b16 %v795
  %v1479 = vpack.c.b16 %v1476, %v1475
  %v1480 = vpack.c.b16 %v1478, %v1477
  %v1484 = vsel %vm820, %v1466, 0
  %1486 = vmatprep.subr.bf16.mxu0 0
  %1487 = vmatpush1.bf16.msra.mxu0 %v1479
  %1488 = vmatprep.subr.bf16.mxu0 0
  %1489 = vmatpush1.bf16.msra.mxu0 %v1480
  %1490 = vmatprep.subr.bf16.mxu0 0
  %1491 = vmatpush1.bf16.msra.mxu0 0
  %1492 = vmatprep.subr.bf16.mxu0 0
  %1493 = vmatpush1.bf16.msra.mxu0 0
  %1494 = vmatprep.subr.bf16.mxu0 0
  %1495 = vmatpush1.bf16.msra.mxu0 0
  %1496 = vmatprep.subr.bf16.mxu0 0
  %1497 = vmatpush1.bf16.msra.mxu0 0
  %1498 = vmatprep.subr.bf16.mxu0 0
  %1499 = vmatpush1.bf16.msra.mxu0 0
  %1500 = vmatprep.subr.bf16.mxu0 0
  %1501 = vmatpush1.bf16.msra.mxu0 0
  %1502 = vmatprep.subr.bf16.mxu0 0
  %1503 = vmatpush1.bf16.msra.mxu0 0
  %1504 = vmatprep.subr.bf16.mxu0 0
  %1505 = vmatpush1.bf16.msra.mxu0 0
  %1506 = vmatprep.subr.bf16.mxu0 0
  %1507 = vmatpush1.bf16.msra.mxu0 0
  %1508 = vmatprep.subr.bf16.mxu0 0
  %1509 = vmatpush1.bf16.msra.mxu0 0
  %1510 = vmatprep.subr.bf16.mxu0 0
  %1511 = vmatpush1.bf16.msra.mxu0 0
  %1512 = vmatprep.subr.bf16.mxu0 0
  %1513 = vmatpush1.bf16.msra.mxu0 0
  %1514 = vmatprep.subr.bf16.mxu0 0
  %1515 = vmatpush1.bf16.msra.mxu0 0
  %1516 = vmatprep.subr.bf16.mxu0 0
  %1517 = vmatpush1.bf16.msra.mxu0 0
  %1518 = vmatprep.mubr.bf16.mxu0 0
  %1519 = vmatmul.mubr.bf16.gmra.mrb[0].mxu0 %v1484
  %v1520 = vpop.f32.mrb[0].mxu0
  %v1521 = vadd.f32 %v1470, %v1520
  %v1522 = vpop.f32.mrb[0].mxu0
  %v1523 = vpop.f32.mrb[0].mxu0
  %v1524 = vadd.f32 %v1470, %v1523
  %v1525 = vpop.f32.mrb[0].mxu0
  %1526 = vdwg.mxu0
  %v1527 = vmul.f32 %v1521, 0.5
  %v1528 = vmul.f32 %v1524, 0.5
  %v1529 = vmul.f32 %v1521, 0.70710677
  %v1530 = vmul.f32 %v1524, 0.70710677
  %v1531 = vand.u32 2147483647, %v1529
  %v1532 = vand.u32 2147483647, %v1530
  %v1533 = vmul.f32 %v1531, 0.3275911
  %v1534 = vmul.f32 %v1532, 0.3275911
  %v1535 = vadd.f32 %v1533, 1.0
  %v1536 = vadd.f32 %v1534, 1.0
  %v1537 = vrcp.pop %v1535
  %v1538 = vmul.f32 1.0, %v1537
  %v1539 = vrcp.pop %v1536
  %v1540 = vmul.f32 1.0, %v1539
  %v1541 = vmul.f32 %v1538, 1.0614054
  %v1542 = vmul.f32 %v1540, 1.0614054
  %v1543 = vadd.f32 %v1541, -1.4531521
  %v1544 = vadd.f32 %v1542, -1.4531521
  %v1545 = vmul.f32 %v1543, %v1538
  %v1546 = vmul.f32 %v1544, %v1540
  %v1547 = vadd.f32 %v1545, 1.4214138
  %v1548 = vadd.f32 %v1546, 1.4214138
  %v1549 = vmul.f32 %v1547, %v1538
  %v1550 = vmul.f32 %v1548, %v1540
  %v1551 = vadd.f32 %v1549, -0.28449672
  %v1552 = vadd.f32 %v1550, -0.28449672
  %v1553 = vmul.f32 %v1551, %v1538
  %v1554 = vmul.f32 %v1552, %v1540
  %v1555 = vadd.f32 %v1553, 0.2548296
  %v1556 = vadd.f32 %v1554, 0.2548296
  %v1557 = vmul.f32 %v1555, %v1538
  %v1558 = vmul.f32 %v1556, %v1540
  %v1559 = vsub.f32 0.0, %v1531
  %v1560 = vsub.f32 0.0, %v1532
  %v1561 = vmul.f32 %v1559, %v1531
  %v1562 = vmul.f32 %v1560, %v1532
  %v1563 = vmul.f32 %v1561, 1.442695
  %v1564 = vpow.pop %v1563
  %v1565 = vmul.f32 %v1562, 1.442695
  %v1566 = vpow.pop %v1565
  %v1567 = vmul.f32 %v1557, %v1564
  %v1568 = vmul.f32 %v1558, %v1566
  %v1569 = vsub.f32 1.0, %v1567
  %v1570 = vsub.f32 1.0, %v1568
  %vm1571 = vcmp.ge.f32.partialorder %v1529, 0.0
  %vm1572 = vcmp.ge.f32.partialorder %v1530, 0.0
  %v1573 = vsub.f32 0.0, %v1569
  %v1574 = vsub.f32 0.0, %v1570
  %v1575 = vsel %vm1571, %v1569, %v1573
  %v1576 = vsel %vm1572, %v1570, %v1574
  %v1577 = vadd.f32 %v1575, 1.0
  %v1578 = vadd.f32 %v1576, 1.0
  %v1579 = vmul.f32 %v1527, %v1577
  %v1580 = vmul.f32 %v1528, %v1578
  %v1581 = vpack.c.bf16 %v1580, %v1579
  %v1598 = vunpack.c.l.b16 %v796
  %v1599 = vunpack.c.l.b16 %v797
  %v1600 = vunpack.c.l.b16 %v798
  %v1601 = vunpack.c.l.b16 %v799
  %v1602 = vunpack.c.l.b16 %v800
  %v1603 = vunpack.c.l.b16 %v801
  %v1604 = vunpack.c.l.b16 %v802
  %v1605 = vunpack.c.l.b16 %v803
  %v1606 = vunpack.c.l.b16 %v804
  %v1607 = vunpack.c.l.b16 %v805
  %v1608 = vunpack.c.l.b16 %v806
  %v1609 = vunpack.c.l.b16 %v807
  %v1610 = vunpack.c.l.b16 %v808
  %v1611 = vunpack.c.l.b16 %v809
  %v1612 = vunpack.c.l.b16 %v810
  %v1613 = vunpack.c.l.b16 %v811
  %v1614 = vpack.c.b16 %v1599, %v1598
  %v1615 = vpack.c.b16 %v1601, %v1600
  %v1616 = vpack.c.b16 %v1603, %v1602
  %v1617 = vpack.c.b16 %v1605, %v1604
  %v1618 = vpack.c.b16 %v1607, %v1606
  %v1619 = vpack.c.b16 %v1609, %v1608
  %v1620 = vpack.c.b16 %v1611, %v1610
  %v1621 = vpack.c.b16 %v1613, %v1612
  %1630 = vmatprep.subr.bf16.mxu0 0
  %1631 = vmatpush1.bf16.msra.mxu0 %v1614
  %1632 = vmatprep.subr.bf16.mxu0 0
  %1633 = vmatpush1.bf16.msra.mxu0 %v1615
  %1634 = vmatprep.subr.bf16.mxu0 0
  %1635 = vmatpush1.bf16.msra.mxu0 %v1616
  %1636 = vmatprep.subr.bf16.mxu0 0
  %1637 = vmatpush1.bf16.msra.mxu0 %v1617
  %1638 = vmatprep.subr.bf16.mxu0 0
  %1639 = vmatpush1.bf16.msra.mxu0 %v1618
  %1640 = vmatprep.subr.bf16.mxu0 0
  %1641 = vmatpush1.bf16.msra.mxu0 %v1619
  %1642 = vmatprep.subr.bf16.mxu0 0
  %1643 = vmatpush1.bf16.msra.mxu0 %v1620
  %1644 = vmatprep.subr.bf16.mxu0 0
  %1645 = vmatpush1.bf16.msra.mxu0 %v1621
  %1646 = vmatprep.subr.bf16.mxu0 0
  %1647 = vmatpush1.bf16.msra.mxu0 0
  %1648 = vmatprep.subr.bf16.mxu0 0
  %1649 = vmatpush1.bf16.msra.mxu0 0
  %1650 = vmatprep.subr.bf16.mxu0 0
  %1651 = vmatpush1.bf16.msra.mxu0 0
  %1652 = vmatprep.subr.bf16.mxu0 0
  %1653 = vmatpush1.bf16.msra.mxu0 0
  %1654 = vmatprep.subr.bf16.mxu0 0
  %1655 = vmatpush1.bf16.msra.mxu0 0
  %1656 = vmatprep.subr.bf16.mxu0 0
  %1657 = vmatpush1.bf16.msra.mxu0 0
  %1658 = vmatprep.subr.bf16.mxu0 0
  %1659 = vmatpush1.bf16.msra.mxu0 0
  %1660 = vmatprep.subr.bf16.mxu0 0
  %1661 = vmatpush1.bf16.msra.mxu0 0
  %1662 = vmatprep.mubr.bf16.mxu0 0
  %1663 = vmatmul.mubr.bf16.gmra.mrb[0].mxu0 %v1581
  %v1664 = vpop.f32.mrb[0].mxu0
  %v1665 = vadd.f32 0.0, %v1664
  %v1666 = vpop.f32.mrb[0].mxu0
  %v1667 = vpop.f32.mrb[0].mxu0
  %v1668 = vadd.f32 0.0, %v1667
  %v1669 = vpop.f32.mrb[0].mxu0
  %1670 = vdwg.mxu0
  %v1671 = vlaneseq
  %v1672 = vshrl.u32 %v1671, 7
  %v1673 = vsub.s32 0, %v1672
  %v1674 = vrot.slane %v819, %v1673
  %v1675 = vadd.f32 %v1665, %v1674
  %v1676 = vadd.f32 %v1668, %v1674
  %v1677 = vadd.f32 %v1426, %v1675
  %v1678 = vadd.f32 %v1427, %v1676
  %v1679 = vld [vmem:[%s1 + $0x270] sm:$0xf]
  %v1680 = vld [vmem:[%s1 + $0x274] sm:$0xf]
  %v1681 = vld [vmem:[%s1 + $0x278] sm:$0xf]
  %v1682 = vld [vmem:[%s1 + $0x27c] sm:$0xf]
  %v1683 = vld [vmem:[%s1 + $0x280] sm:$0xf]
  %v1684 = vld [vmem:[%s1 + $0x284] sm:$0xf]
  %v1685 = vld [vmem:[%s1 + $0x288] sm:$0xf]
  %v1686 = vld [vmem:[%s1 + $0x28c] sm:$0xf]
  %v1687 = vld [vmem:[%s1 + $0x290] sm:$0xf]
  %v1688 = vld [vmem:[%s1 + $0x294] sm:$0xf]
  %v1689 = vld [vmem:[%s1 + $0x298] sm:$0xf]
  %v1690 = vld [vmem:[%s1 + $0x29c] sm:$0xf]
  %v1691 = vld [vmem:[%s1 + $0x2a0] sm:$0xf]
  %v1692 = vld [vmem:[%s1 + $0x2a4] sm:$0xf]
  %v1693 = vld [vmem:[%s1 + $0x2a8] sm:$0xf]
  %v1694 = vld [vmem:[%s1 + $0x2ac] sm:$0xf]
  %v1695 = vld [vmem:[%s1 + $0x2b0] sm:$0xf]
  %v1696 = vld [vmem:[%s1 + $0x2b4] sm:$0xf]
  %v1697 = vld [vmem:[%s1 + $0x2b8] sm:$0xf]
  %v1698 = vld [vmem:[%s1 + $0x2bc] sm:$0xf]
  %v1699 = vld [vmem:[%s1 + $0x2c0] sm:$0xf]
  %v1700 = vld [vmem:[%s1 + $0x2c4] sm:$0xf]
  %v1701 = vld [vmem:[%s1 + $0x2c8] sm:$0xf]
  %v1702 = vld [vmem:[%s1 + $0x2cc] sm:$0xf]
  %v1703 = vld [vmem:[%s1 + $0x2d0] sm:$0xf]
  %v1704 = vld [vmem:[%s1 + $0x2d4] sm:$0xf]
  %v1705 = vld [vmem:[%s1 + $0x2d8] sm:$0xf]
  %v1706 = vld [vmem:[%s1 + $0x2dc] sm:$0xf]
  %v1707 = vld [vmem:[%s2 + $0x10] sm:$0x1]
  %v1708 = vld [vmem:[%s2 + $0x11] sm:$0x1]
  %v1709 = vld [vmem:[%s2 + $0x12] sm:$0x1]
  %v1710 = vld [vmem:[%s2 + $0x13] sm:$0x1]
  %v1711 = vld [vmem:[%s2 + $0x14] sm:$0x1]
  %v1712 = vld [vmem:[%s2 + $0x15] sm:$0x1]
  %v1713 = vld [vmem:[%s2 + $0x16] sm:$0x1]
  %v1714 = vld [vmem:[%s2 + $0x17] sm:$0x1]
  %v1715 = vsel %vm820, %v1677, 0.0
  %1716 = vadd.xlane.f32.xlu0 %v1715
  %v1717 = vpop.xlane.xlu0 %1716
  %v1718 = vsel %vm820, %v1678, 0.0
  %1719 = vadd.xlane.f32.xlu0 %v1718
  %v1720 = vpop.xlane.xlu0 %1719
  %v1721 = vmul.f32 %v1717, %v827
  %v1722 = vmul.f32 %v1720, %v827
  %v1723 = vsub.f32 %v1677, %v1721
  %v1724 = vsub.f32 %v1678, %v1722
  %v1725 = vmul.f32 %v1723, %v1723
  %v1726 = vmul.f32 %v1724, %v1724
  %v1727 = vsel %vm820, %v1725, 0.0
  %1728 = vadd.xlane.f32.xlu0 %v1727
  %v1729 = vpop.xlane.xlu0 %1728
  %v1730 = vsel %vm820, %v1726, 0.0
  %1731 = vadd.xlane.f32.xlu0 %v1730
  %v1732 = vpop.xlane.xlu0 %1731
  %v1733 = vmul.f32 %v1729, %v827
  %v1734 = vmul.f32 %v1732, %v827
  %v1735 = vadd.f32 %v1733, 1e-05
  %v1736 = vadd.f32 %v1734, 1e-05
  %v1737 = vrsqrt.pop %v1735
  %v1738 = vrsqrt.pop %v1736
  %v1739 = vmul.f32 %v1723, %v1737
  %v1740 = vmul.f32 %v1724, %v1738
  %v1741 = vlaneseq
  %v1742 = vshrl.u32 %v1741, 7
  %v1743 = vsub.s32 0, %v1742
  %v1744 = vrot.slane %v1707, %v1743
  %v1745 = vmul.f32 %v1739, %v1744
  %v1746 = vmul.f32 %v1740, %v1744
  %v1747 = vlaneseq
  %v1748 = vshrl.u32 %v1747, 7
  %v1749 = vsub.s32 0, %v1748
  %v1750 = vrot.slane %v1708, %v1749
  %v1751 = vadd.f32 %v1745, %v1750
  %v1752 = vadd.f32 %v1746, %v1750
  %v1753 = vpack.c.bf16 %v1752, %v1751
  %v1754 = vlaneseq
  %v1755 = vshrl.u32 %v1754, 7
  %v1756 = vsub.s32 0, %v1755
  %v1757 = vrot.slane %v1709, %v1756
  %v1762 = vunpack.c.l.b16 %v1679
  %v1763 = vunpack.c.l.b16 %v1680
  %v1764 = vunpack.c.l.b16 %v1681
  %v1765 = vunpack.c.l.b16 %v1682
  %v1766 = vpack.c.b16 %v1763, %v1762
  %v1767 = vpack.c.b16 %v1765, %v1764
  %v1771 = vsel %vm820, %v1753, 0
  %1773 = vmatprep.subr.bf16.mxu0 0
  %1774 = vmatpush1.bf16.msra.mxu0 %v1766
  %1775 = vmatprep.subr.bf16.mxu0 0
  %1776 = vmatpush1.bf16.msra.mxu0 %v1767
  %1777 = vmatprep.subr.bf16.mxu0 0
  %1778 = vmatpush1.bf16.msra.mxu0 0
  %1779 = vmatprep.subr.bf16.mxu0 0
  %1780 = vmatpush1.bf16.msra.mxu0 0
  %1781 = vmatprep.subr.bf16.mxu0 0
  %1782 = vmatpush1.bf16.msra.mxu0 0
  %1783 = vmatprep.subr.bf16.mxu0 0
  %1784 = vmatpush1.bf16.msra.mxu0 0
  %1785 = vmatprep.subr.bf16.mxu0 0
  %1786 = vmatpush1.bf16.msra.mxu0 0
  %1787 = vmatprep.subr.bf16.mxu0 0
  %1788 = vmatpush1.bf16.msra.mxu0 0
  %1789 = vmatprep.subr.bf16.mxu0 0
  %1790 = vmatpush1.bf16.msra.mxu0 0
  %1791 = vmatprep.subr.bf16.mxu0 0
  %1792 = vmatpush1.bf16.msra.mxu0 0
  %1793 = vmatprep.subr.bf16.mxu0 0
  %1794 = vmatpush1.bf16.msra.mxu0 0
  %1795 = vmatprep.subr.bf16.mxu0 0
  %1796 = vmatpush1.bf16.msra.mxu0 0
  %1797 = vmatprep.subr.bf16.mxu0 0
  %1798 = vmatpush1.bf16.msra.mxu0 0
  %1799 = vmatprep.subr.bf16.mxu0 0
  %1800 = vmatpush1.bf16.msra.mxu0 0
  %1801 = vmatprep.subr.bf16.mxu0 0
  %1802 = vmatpush1.bf16.msra.mxu0 0
  %1803 = vmatprep.subr.bf16.mxu0 0
  %1804 = vmatpush1.bf16.msra.mxu0 0
  %1805 = vmatprep.mubr.bf16.mxu0 0
  %1806 = vmatmul.mubr.bf16.gmra.mrb[0].mxu0 %v1771
  %v1807 = vpop.f32.mrb[0].mxu0
  %v1808 = vadd.f32 %v1757, %v1807
  %v1809 = vpop.f32.mrb[0].mxu0
  %v1810 = vpop.f32.mrb[0].mxu0
  %v1811 = vadd.f32 %v1757, %v1810
  %v1812 = vpop.f32.mrb[0].mxu0
  %1813 = vdwg.mxu0
  %1815 = vrot.lane.b32.xlu0 %v1808, 120
  %v1816 = vpop.permute.xlu0 %1815
  %1817 = vrot.lane.b32.xlu0 %v1808, 112
  %v1818 = vpop.permute.xlu0 %1817
  %1819 = vrot.lane.b32.xlu0 %v1808, 104
  %v1820 = vpop.permute.xlu0 %1819
  %1822 = vrot.lane.b32.xlu0 %v1811, 120
  %v1823 = vpop.permute.xlu0 %1822
  %1824 = vrot.lane.b32.xlu0 %v1811, 112
  %v1825 = vpop.permute.xlu0 %1824
  %1826 = vrot.lane.b32.xlu0 %v1811, 104
  %v1827 = vpop.permute.xlu0 %1826
  %1828 = vrot.lane.b32.xlu0 %v1808, 96
  %v1829 = vpop.permute.xlu0 %1828
  %1830 = vrot.lane.b32.xlu0 %v1816, 96
  %v1831 = vpop.permute.xlu0 %1830
  %1832 = vrot.lane.b32.xlu0 %v1818, 96
  %v1833 = vpop.permute.xlu0 %1832
  %1834 = vrot.lane.b32.xlu0 %v1820, 96
  %v1835 = vpop.permute.xlu0 %1834
  %1836 = vrot.lane.b32.xlu0 %v1811, 96
  %v1837 = vpop.permute.xlu0 %1836
  %1838 = vrot.lane.b32.xlu0 %v1823, 96
  %v1839 = vpop.permute.xlu0 %1838
  %1840 = vrot.lane.b32.xlu0 %v1825, 96
  %v1841 = vpop.permute.xlu0 %1840
  %1842 = vrot.lane.b32.xlu0 %v1827, 96
  %v1843 = vpop.permute.xlu0 %1842
  %v1844 = vsel %vm951, %v1808, 0
  %v1846 = vsel %vm951, %v1816, 0
  %v1848 = vsel %vm951, %v1818, 0
  %v1850 = vsel %vm951, %v1820, 0
  %v1852 = vsel %vm951, %v1811, 0
  %v1854 = vsel %vm951, %v1823, 0
  %v1856 = vsel %vm951, %v1825, 0
  %v1858 = vsel %vm951, %v1827, 0
  %v1860 = vsel %vm951, %v1829, 0
  %v1862 = vsel %vm951, %v1831, 0
  %v1864 = vsel %vm951, %v1833, 0
  %v1866 = vsel %vm951, %v1835, 0
  %v1868 = vsel %vm951, %v1837, 0
  %v1870 = vsel %vm951, %v1839, 0
  %v1872 = vsel %vm951, %v1841, 0
  %v1874 = vsel %vm951, %v1843, 0
  %1876 = vmatprep.subr.mxu0 0.0
  %1877 = vmatpush1.xpose.msra.mxu0 %v1860
  %1878 = vmatprep.subr.mxu0 0.0
  %1879 = vmatpush1.xpose.msra.mxu0 %v1862
  %1880 = vmatprep.subr.mxu0 0.0
  %1881 = vmatpush1.xpose.msra.mxu0 %v1864
  %1882 = vmatprep.subr.mxu0 0.0
  %1883 = vmatpush1.xpose.msra.mxu0 %v1866
  %1884 = vmatprep.subr.mxu0 0.0
  %1885 = vmatpush1.xpose.msra.mxu0 %v1868
  %1886 = vmatprep.subr.mxu0 0.0
  %1887 = vmatpush1.xpose.msra.mxu0 %v1870
  %1888 = vmatprep.subr.mxu0 0.0
  %1889 = vmatpush1.xpose.msra.mxu0 %v1872
  %1890 = vmatprep.subr.mxu0 0.0
  %1891 = vmatpush1.xpose.msra.mxu0 %v1874
  %1892 = vmatprep.subr.mxu0 0.0
  %1893 = vmatpush1.xpose.msra.mxu0 0.0
  %1894 = vmatprep.subr.mxu0 0.0
  %1895 = vmatpush1.xpose.msra.mxu0 0.0
  %1896 = vmatprep.subr.mxu0 0.0
  %1897 = vmatpush1.xpose.msra.mxu0 0.0
  %1898 = vmatprep.subr.mxu0 0.0
  %1899 = vmatpush1.xpose.msra.mxu0 0.0
  %1900 = vmatprep.subr.mxu0 0.0
  %1901 = vmatpush1.xpose.msra.mxu0 0.0
  %1902 = vmatprep.subr.mxu0 0.0
  %1903 = vmatpush1.xpose.msra.mxu0 0.0
  %1904 = vmatprep.subr.mxu0 0.0
  %1905 = vmatpush1.xpose.msra.mxu0 0.0
  %1906 = vmatprep.subr.mxu0 0.0
  %1907 = vmatpush1.xpose.msra.mxu0 0.0
  %1908 = vmatprep.subr.mxu0 0.0
  %1909 = vmatpush1.xpose.msra.mxu0 0.0
  %1910 = vmatprep.subr.mxu0 0.0
  %1911 = vmatpush1.xpose.msra.mxu0 0.0
  %1912 = vmatprep.subr.mxu0 0.0
  %1913 = vmatpush1.xpose.msra.mxu0 0.0
  %1914 = vmatprep.subr.mxu0 0.0
  %1915 = vmatpush1.xpose.msra.mxu0 0.0
  %1916 = vmatprep.subr.mxu0 0.0
  %1917 = vmatpush1.xpose.msra.mxu0 0.0
  %1918 = vmatprep.subr.mxu0 0.0
  %1919 = vmatpush1.xpose.msra.mxu0 0.0
  %1920 = vmatprep.subr.mxu0 0.0
  %1921 = vmatpush1.xpose.msra.mxu0 0.0
  %1922 = vmatprep.subr.mxu0 0.0
  %1923 = vmatpush1.xpose.msra.mxu0 0.0
  %1924 = vmatprep.subr.mxu0 0.0
  %1925 = vmatpush1.xpose.msra.mxu0 0.0
  %1926 = vmatprep.subr.mxu0 0.0
  %1927 = vmatpush1.xpose.msra.mxu0 0.0
  %1928 = vmatprep.subr.mxu0 0.0
  %1929 = vmatpush1.xpose.msra.mxu0 0.0
  %1930 = vmatprep.subr.mxu0 0.0
  %1931 = vmatpush1.xpose.msra.mxu0 0.0
  %1932 = vmatprep.subr.mxu0 0.0
  %1933 = vmatpush1.xpose.msra.mxu0 0.0
  %1934 = vmatprep.subr.mxu0 0.0
  %1935 = vmatpush1.xpose.msra.mxu0 0.0
  %1936 = vmatprep.subr.mxu0 0.0
  %1937 = vmatpush1.xpose.msra.mxu0 0.0
  %1938 = vmatprep.subr.mxu0 0.0
  %1939 = vmatpush1.xpose.msra.mxu0 0.0
  %1940 = vmatprep.mubr.f32.mxu0 0.0
  %1941 = vmatmul.mubr.f32.gmra.mrb[0].mxu0 %v1844
  %v1942 = vpop.f32.mrb[0].mxu0
  %v1943 = vadd.f32 %v776, %v1942
  %v1944 = vpop.f32.mrb[0].mxu0
  %1945 = vmatprep.mubr.f32.mxu0 0.0
  %1946 = vmatmul.mubr.f32.gmra.mrb[0].mxu0 %v1846
  %v1947 = vpop.f32.mrb[0].mxu0
  %v1948 = vadd.f32 %v777, %v1947
  %v1949 = vpop.f32.mrb[0].mxu0
  %1950 = vmatprep.mubr.f32.mxu0 0.0
  %1951 = vmatmul.mubr.f32.gmra.mrb[0].mxu0 %v1848
  %v1952 = vpop.f32.mrb[0].mxu0
  %v1953 = vadd.f32 %v778, %v1952
  %v1954 = vpop.f32.mrb[0].mxu0
  %1955 = vmatprep.mubr.f32.mxu0 0.0
  %1956 = vmatmul.mubr.f32.gmra.mrb[0].mxu0 %v1850
  %v1957 = vpop.f32.mrb[0].mxu0
  %v1958 = vadd.f32 %v779, %v1957
  %v1959 = vpop.f32.mrb[0].mxu0
  %1960 = vmatprep.mubr.f32.mxu0 0.0
  %1961 = vmatmul.mubr.f32.gmra.mrb[0].mxu0 %v1852
  %v1962 = vpop.f32.mrb[0].mxu0
  %v1963 = vadd.f32 %v780, %v1962
  %v1964 = vpop.f32.mrb[0].mxu0
  %1965 = vmatprep.mubr.f32.mxu0 0.0
  %1966 = vmatmul.mubr.f32.gmra.mrb[0].mxu0 %v1854
  %v1967 = vpop.f32.mrb[0].mxu0
  %v1968 = vadd.f32 %v781, %v1967
  %v1969 = vpop.f32.mrb[0].mxu0
  %1970 = vmatprep.mubr.f32.mxu0 0.0
  %1971 = vmatmul.mubr.f32.gmra.mrb[0].mxu0 %v1856
  %v1972 = vpop.f32.mrb[0].mxu0
  %v1973 = vadd.f32 %v782, %v1972
  %v1974 = vpop.f32.mrb[0].mxu0
  %1975 = vmatprep.mubr.f32.mxu0 0.0
  %1976 = vmatmul.mubr.f32.gmra.mrb[0].mxu0 %v1858
  %v1977 = vpop.f32.mrb[0].mxu0
  %v1978 = vadd.f32 %v783, %v1977
  %v1979 = vpop.f32.mrb[0].mxu0
  %1980 = vdwg.mxu0
  %v1981 = vsel %vm1089, %v1943, -inf
  %1982 = vmax.xlane.f32.xlu0 %v1981
  %v1983 = vpop.xlane.xlu0 %1982
  %v1984 = vsel %vm1089, %v1948, -inf
  %1985 = vmax.xlane.f32.xlu0 %v1984
  %v1986 = vpop.xlane.xlu0 %1985
  %v1987 = vsel %vm1089, %v1953, -inf
  %1988 = vmax.xlane.f32.xlu0 %v1987
  %v1989 = vpop.xlane.xlu0 %1988
  %v1990 = vsel %vm1089, %v1958, -inf
  %1991 = vmax.xlane.f32.xlu0 %v1990
  %v1992 = vpop.xlane.xlu0 %1991
  %v1993 = vsel %vm1089, %v1963, -inf
  %1994 = vmax.xlane.f32.xlu0 %v1993
  %v1995 = vpop.xlane.xlu0 %1994
  %v1996 = vsel %vm1089, %v1968, -inf
  %1997 = vmax.xlane.f32.xlu0 %v1996
  %v1998 = vpop.xlane.xlu0 %1997
  %v1999 = vsel %vm1089, %v1973, -inf
  %2000 = vmax.xlane.f32.xlu0 %v1999
  %v2001 = vpop.xlane.xlu0 %2000
  %v2002 = vsel %vm1089, %v1978, -inf
  %2003 = vmax.xlane.f32.xlu0 %v2002
  %v2004 = vpop.xlane.xlu0 %2003
  %v2005 = vsub.f32 %v1943, %v1983
  %v2006 = vsub.f32 %v1948, %v1986
  %v2007 = vsub.f32 %v1953, %v1989
  %v2008 = vsub.f32 %v1958, %v1992
  %v2009 = vsub.f32 %v1963, %v1995
  %v2010 = vsub.f32 %v1968, %v1998
  %v2011 = vsub.f32 %v1973, %v2001
  %v2012 = vsub.f32 %v1978, %v2004
  %v2013 = vmul.f32 %v2005, 1.442695
  %v2014 = vpow.pop %v2013
  %v2015 = vmul.f32 %v2006, 1.442695
  %v2016 = vpow.pop %v2015
  %v2017 = vmul.f32 %v2007, 1.442695
  %v2018 = vpow.pop %v2017
  %v2019 = vmul.f32 %v2008, 1.442695
  %v2020 = vpow.pop %v2019
  %v2021 = vmul.f32 %v2009, 1.442695
  %v2022 = vpow.pop %v2021
  %v2023 = vmul.f32 %v2010, 1.442695
  %v2024 = vpow.pop %v2023
  %v2025 = vmul.f32 %v2011, 1.442695
  %v2026 = vpow.pop %v2025
  %v2027 = vmul.f32 %v2012, 1.442695
  %v2028 = vpow.pop %v2027
  %v2029 = vsel %vm1089, %v2014, 0.0
  %2030 = vadd.xlane.f32.xlu0 %v2029
  %v2031 = vpop.xlane.xlu0 %2030
  %v2032 = vsel %vm1089, %v2016, 0.0
  %2033 = vadd.xlane.f32.xlu0 %v2032
  %v2034 = vpop.xlane.xlu0 %2033
  %v2035 = vsel %vm1089, %v2018, 0.0
  %2036 = vadd.xlane.f32.xlu0 %v2035
  %v2037 = vpop.xlane.xlu0 %2036
  %v2038 = vsel %vm1089, %v2020, 0.0
  %2039 = vadd.xlane.f32.xlu0 %v2038
  %v2040 = vpop.xlane.xlu0 %2039
  %v2041 = vsel %vm1089, %v2022, 0.0
  %2042 = vadd.xlane.f32.xlu0 %v2041
  %v2043 = vpop.xlane.xlu0 %2042
  %v2044 = vsel %vm1089, %v2024, 0.0
  %2045 = vadd.xlane.f32.xlu0 %v2044
  %v2046 = vpop.xlane.xlu0 %2045
  %v2047 = vsel %vm1089, %v2026, 0.0
  %2048 = vadd.xlane.f32.xlu0 %v2047
  %v2049 = vpop.xlane.xlu0 %2048
  %v2050 = vsel %vm1089, %v2028, 0.0
  %2051 = vadd.xlane.f32.xlu0 %v2050
  %v2052 = vpop.xlane.xlu0 %2051
  %v2053 = vrcp.pop %v2031
  %v2054 = vmul.f32 %v2014, %v2053
  %v2055 = vrcp.pop %v2034
  %v2056 = vmul.f32 %v2016, %v2055
  %v2057 = vrcp.pop %v2037
  %v2058 = vmul.f32 %v2018, %v2057
  %v2059 = vrcp.pop %v2040
  %v2060 = vmul.f32 %v2020, %v2059
  %v2061 = vrcp.pop %v2043
  %v2062 = vmul.f32 %v2022, %v2061
  %v2063 = vrcp.pop %v2046
  %v2064 = vmul.f32 %v2024, %v2063
  %v2065 = vrcp.pop %v2049
  %v2066 = vmul.f32 %v2026, %v2065
  %v2067 = vrcp.pop %v2052
  %v2068 = vmul.f32 %v2028, %v2067
  %2069 = vrot.lane.b32.xlu0 %v1808, 64
  %v2070 = vpop.permute.xlu0 %2069
  %2071 = vrot.lane.b32.xlu0 %v1816, 64
  %v2072 = vpop.permute.xlu0 %2071
  %2073 = vrot.lane.b32.xlu0 %v1818, 64
  %v2074 = vpop.permute.xlu0 %2073
  %2075 = vrot.lane.b32.xlu0 %v1820, 64
  %v2076 = vpop.permute.xlu0 %2075
  %2077 = vrot.lane.b32.xlu0 %v1811, 64
  %v2078 = vpop.permute.xlu0 %2077
  %2079 = vrot.lane.b32.xlu0 %v1823, 64
  %v2080 = vpop.permute.xlu0 %2079
  %2081 = vrot.lane.b32.xlu0 %v1825, 64
  %v2082 = vpop.permute.xlu0 %2081
  %2083 = vrot.lane.b32.xlu0 %v1827, 64
  %v2084 = vpop.permute.xlu0 %2083
  %v2094 = vsel %vm1089, %v2054, 0
  %v2097 = vsel %vm1089, %v2056, 0
  %v2100 = vsel %vm1089, %v2058, 0
  %v2103 = vsel %vm1089, %v2060, 0
  %v2106 = vsel %vm1089, %v2062, 0
  %v2109 = vsel %vm1089, %v2064, 0
  %v2112 = vsel %vm1089, %v2066, 0
  %v2115 = vsel %vm1089, %v2068, 0
  %2117 = vmatprep.subr.mxu0 0.0
  %2118 = vmatpush1.msra.mxu0 %v2070
  %2119 = vmatprep.subr.mxu0 0.0
  %2120 = vmatpush1.msra.mxu0 %v2072
  %2121 = vmatprep.subr.mxu0 0.0
  %2122 = vmatpush1.msra.mxu0 %v2074
  %2123 = vmatprep.subr.mxu0 0.0
  %2124 = vmatpush1.msra.mxu0 %v2076
  %2125 = vmatprep.subr.mxu0 0.0
  %2126 = vmatpush1.msra.mxu0 %v2078
  %2127 = vmatprep.subr.mxu0 0.0
  %2128 = vmatpush1.msra.mxu0 %v2080
  %2129 = vmatprep.subr.mxu0 0.0
  %2130 = vmatpush1.msra.mxu0 %v2082
  %2131 = vmatprep.subr.mxu0 0.0
  %2132 = vmatpush1.msra.mxu0 %v2084
  %2133 = vmatprep.subr.mxu0 0.0
  %2134 = vmatpush1.msra.mxu0 0.0
  %2135 = vmatprep.subr.mxu0 0.0
  %2136 = vmatpush1.msra.mxu0 0.0
  %2137 = vmatprep.subr.mxu0 0.0
  %2138 = vmatpush1.msra.mxu0 0.0
  %2139 = vmatprep.subr.mxu0 0.0
  %2140 = vmatpush1.msra.mxu0 0.0
  %2141 = vmatprep.subr.mxu0 0.0
  %2142 = vmatpush1.msra.mxu0 0.0
  %2143 = vmatprep.subr.mxu0 0.0
  %2144 = vmatpush1.msra.mxu0 0.0
  %2145 = vmatprep.subr.mxu0 0.0
  %2146 = vmatpush1.msra.mxu0 0.0
  %2147 = vmatprep.subr.mxu0 0.0
  %2148 = vmatpush1.msra.mxu0 0.0
  %2149 = vmatprep.subr.mxu0 0.0
  %2150 = vmatpush1.msra.mxu0 0.0
  %2151 = vmatprep.subr.mxu0 0.0
  %2152 = vmatpush1.msra.mxu0 0.0
  %2153 = vmatprep.subr.mxu0 0.0
  %2154 = vmatpush1.msra.mxu0 0.0
  %2155 = vmatprep.subr.mxu0 0.0
  %2156 = vmatpush1.msra.mxu0 0.0
  %2157 = vmatprep.subr.mxu0 0.0
  %2158 = vmatpush1.msra.mxu0 0.0
  %2159 = vmatprep.subr.mxu0 0.0
  %2160 = vmatpush1.msra.mxu0 0.0
  %2161 = vmatprep.subr.mxu0 0.0
  %2162 = vmatpush1.msra.mxu0 0.0
  %2163 = vmatprep.subr.mxu0 0.0
  %2164 = vmatpush1.msra.mxu0 0.0
  %2165 = vmatprep.subr.mxu0 0.0
  %2166 = vmatpush1.msra.mxu0 0.0
  %2167 = vmatprep.subr.mxu0 0.0
  %2168 = vmatpush1.msra.mxu0 0.0
  %2169 = vmatprep.subr.mxu0 0.0
  %2170 = vmatpush1.msra.mxu0 0.0
  %2171 = vmatprep.subr.mxu0 0.0
  %2172 = vmatpush1.msra.mxu0 0.0
  %2173 = vmatprep.subr.mxu0 0.0
  %2174 = vmatpush1.msra.mxu0 0.0
  %2175 = vmatprep.subr.mxu0 0.0
  %2176 = vmatpush1.msra.mxu0 0.0
  %2177 = vmatprep.subr.mxu0 0.0
  %2178 = vmatpush1.msra.mxu0 0.0
  %2179 = vmatprep.subr.mxu0 0.0
  %2180 = vmatpush1.msra.mxu0 0.0
  %2181 = vmatprep.mubr.f32.mxu0 0.0
  %2182 = vmatmul.mubr.f32.gmra.mrb[0].mxu0 %v2094
  %v2183 = vpop.f32.mrb[0].mxu0
  %v2184 = vadd.f32 0.0, %v2183
  %v2185 = vpop.f32.mrb[0].mxu0
  %2186 = vmatprep.mubr.f32.mxu0 0.0
  %2187 = vmatmul.mubr.f32.gmra.mrb[0].mxu0 %v2097
  %v2188 = vpop.f32.mrb[0].mxu0
  %v2189 = vadd.f32 0.0, %v2188
  %v2190 = vpop.f32.mrb[0].mxu0
  %2191 = vmatprep.mubr.f32.mxu0 0.0
  %2192 = vmatmul.mubr.f32.gmra.mrb[0].mxu0 %v2100
  %v2193 = vpop.f32.mrb[0].mxu0
  %v2194 = vadd.f32 0.0, %v2193
  %v2195 = vpop.f32.mrb[0].mxu0
  %2196 = vmatprep.mubr.f32.mxu0 0.0
  %2197 = vmatmul.mubr.f32.gmra.mrb[0].mxu0 %v2103
  %v2198 = vpop.f32.mrb[0].mxu0
  %v2199 = vadd.f32 0.0, %v2198
  %v2200 = vpop.f32.mrb[0].mxu0
  %2201 = vmatprep.mubr.f32.mxu0 0.0
  %2202 = vmatmul.mubr.f32.gmra.mrb[0].mxu0 %v2106
  %v2203 = vpop.f32.mrb[0].mxu0
  %v2204 = vadd.f32 0.0, %v2203
  %v2205 = vpop.f32.mrb[0].mxu0
  %2206 = vmatprep.mubr.f32.mxu0 0.0
  %2207 = vmatmul.mubr.f32.gmra.mrb[0].mxu0 %v2109
  %v2208 = vpop.f32.mrb[0].mxu0
  %v2209 = vadd.f32 0.0, %v2208
  %v2210 = vpop.f32.mrb[0].mxu0
  %2211 = vmatprep.mubr.f32.mxu0 0.0
  %2212 = vmatmul.mubr.f32.gmra.mrb[0].mxu0 %v2112
  %v2213 = vpop.f32.mrb[0].mxu0
  %v2214 = vadd.f32 0.0, %v2213
  %v2215 = vpop.f32.mrb[0].mxu0
  %2216 = vmatprep.mubr.f32.mxu0 0.0
  %2217 = vmatmul.mubr.f32.gmra.mrb[0].mxu0 %v2115
  %v2218 = vpop.f32.mrb[0].mxu0
  %v2219 = vadd.f32 0.0, %v2218
  %v2220 = vpop.f32.mrb[0].mxu0
  %2221 = vdwg.mxu0
  %2223 = vrot.lane.b32.xlu0 %v2189, 8
  %v2224 = vpop.permute.xlu0 %2223
  %2227 = vrot.lane.b32.xlu0 %v2194, 16
  %v2228 = vpop.permute.xlu0 %2227
  %2231 = vrot.lane.b32.xlu0 %v2199, 24
  %v2232 = vpop.permute.xlu0 %2231
  %v2234 = vsel %vm951, %v2184, %v2224
  %v2235 = vsel %vm1344, %v2234, %v2228
  %v2236 = vsel %vm1346, %v2235, %v2232
  %2238 = vrot.lane.b32.xlu0 %v2209, 8
  %v2239 = vpop.permute.xlu0 %2238
  %2242 = vrot.lane.b32.xlu0 %v2214, 16
  %v2243 = vpop.permute.xlu0 %2242
  %2246 = vrot.lane.b32.xlu0 %v2219, 24
  %v2247 = vpop.permute.xlu0 %2246
  %v2249 = vsel %vm951, %v2204, %v2239
  %v2250 = vsel %vm1344, %v2249, %v2243
  %v2251 = vsel %vm1346, %v2250, %v2247
  %v2252 = vpack.c.bf16 %v2251, %v2236
  %v2257 = vunpack.c.l.b16 %v1683
  %v2258 = vunpack.c.l.b16 %v1684
  %v2259 = vunpack.c.l.b16 %v1685
  %v2260 = vunpack.c.l.b16 %v1686
  %v2261 = vpack.c.b16 %v2258, %v2257
  %v2262 = vpack.c.b16 %v2260, %v2259
  %v2266 = vsel %vm820, %v2252, 0
  %2268 = vmatprep.subr.bf16.mxu0 0
  %2269 = vmatpush1.bf16.msra.mxu0 %v2261
  %2270 = vmatprep.subr.bf16.mxu0 0
  %2271 = vmatpush1.bf16.msra.mxu0 %v2262
  %2272 = vmatprep.subr.bf16.mxu0 0
  %2273 = vmatpush1.bf16.msra.mxu0 0
  %2274 = vmatprep.subr.bf16.mxu0 0
  %2275 = vmatpush1.bf16.msra.mxu0 0
  %2276 = vmatprep.subr.bf16.mxu0 0
  %2277 = vmatpush1.bf16.msra.mxu0 0
  %2278 = vmatprep.subr.bf16.mxu0 0
  %2279 = vmatpush1.bf16.msra.mxu0 0
  %2280 = vmatprep.subr.bf16.mxu0 0
  %2281 = vmatpush1.bf16.msra.mxu0 0
  %2282 = vmatprep.subr.bf16.mxu0 0
  %2283 = vmatpush1.bf16.msra.mxu0 0
  %2284 = vmatprep.subr.bf16.mxu0 0
  %2285 = vmatpush1.bf16.msra.mxu0 0
  %2286 = vmatprep.subr.bf16.mxu0 0
  %2287 = vmatpush1.bf16.msra.mxu0 0
  %2288 = vmatprep.subr.bf16.mxu0 0
  %2289 = vmatpush1.bf16.msra.mxu0 0
  %2290 = vmatprep.subr.bf16.mxu0 0
  %2291 = vmatpush1.bf16.msra.mxu0 0
  %2292 = vmatprep.subr.bf16.mxu0 0
  %2293 = vmatpush1.bf16.msra.mxu0 0
  %2294 = vmatprep.subr.bf16.mxu0 0
  %2295 = vmatpush1.bf16.msra.mxu0 0
  %2296 = vmatprep.subr.bf16.mxu0 0
  %2297 = vmatpush1.bf16.msra.mxu0 0
  %2298 = vmatprep.subr.bf16.mxu0 0
  %2299 = vmatpush1.bf16.msra.mxu0 0
  %2300 = vmatprep.mubr.bf16.mxu0 0
  %2301 = vmatmul.mubr.bf16.gmra.mrb[0].mxu0 %v2266
  %v2302 = vpop.f32.mrb[0].mxu0
  %v2303 = vadd.f32 0.0, %v2302
  %v2304 = vpop.f32.mrb[0].mxu0
  %v2305 = vpop.f32.mrb[0].mxu0
  %v2306 = vadd.f32 0.0, %v2305
  %v2307 = vpop.f32.mrb[0].mxu0
  %2308 = vdwg.mxu0
  %v2309 = vlaneseq
  %v2310 = vshrl.u32 %v2309, 7
  %v2311 = vsub.s32 0, %v2310
  %v2312 = vrot.slane %v1710, %v2311
  %v2313 = vadd.f32 %v2303, %v2312
  %v2314 = vadd.f32 %v2306, %v2312
  %v2315 = vadd.f32 %v1677, %v2313
  %v2316 = vadd.f32 %v1678, %v2314
  %v2317 = vsel %vm820, %v2315, 0.0
  %2318 = vadd.xlane.f32.xlu0 %v2317
  %v2319 = vpop.xlane.xlu0 %2318
  %v2320 = vsel %vm820, %v2316, 0.0
  %2321 = vadd.xlane.f32.xlu0 %v2320
  %v2322 = vpop.xlane.xlu0 %2321
  %v2323 = vmul.f32 %v2319, %v827
  %v2324 = vmul.f32 %v2322, %v827
  %v2325 = vsub.f32 %v2315, %v2323
  %v2326 = vsub.f32 %v2316, %v2324
  %v2327 = vmul.f32 %v2325, %v2325
  %v2328 = vmul.f32 %v2326, %v2326
  %v2329 = vsel %vm820, %v2327, 0.0
  %2330 = vadd.xlane.f32.xlu0 %v2329
  %v2331 = vpop.xlane.xlu0 %2330
  %v2332 = vsel %vm820, %v2328, 0.0
  %2333 = vadd.xlane.f32.xlu0 %v2332
  %v2334 = vpop.xlane.xlu0 %2333
  %v2335 = vmul.f32 %v2331, %v827
  %v2336 = vmul.f32 %v2334, %v827
  %v2337 = vadd.f32 %v2335, 1e-05
  %v2338 = vadd.f32 %v2336, 1e-05
  %v2339 = vrsqrt.pop %v2337
  %v2340 = vrsqrt.pop %v2338
  %v2341 = vmul.f32 %v2325, %v2339
  %v2342 = vmul.f32 %v2326, %v2340
  %v2343 = vlaneseq
  %v2344 = vshrl.u32 %v2343, 7
  %v2345 = vsub.s32 0, %v2344
  %v2346 = vrot.slane %v1711, %v2345
  %v2347 = vmul.f32 %v2341, %v2346
  %v2348 = vmul.f32 %v2342, %v2346
  %v2349 = vlaneseq
  %v2350 = vshrl.u32 %v2349, 7
  %v2351 = vsub.s32 0, %v2350
  %v2352 = vrot.slane %v1712, %v2351
  %v2353 = vadd.f32 %v2347, %v2352
  %v2354 = vadd.f32 %v2348, %v2352
  %v2355 = vpack.c.bf16 %v2354, %v2353
  %v2356 = vlaneseq
  %v2357 = vshrl.u32 %v2356, 7
  %v2358 = vsub.s32 0, %v2357
  %v2359 = vrot.slane %v1713, %v2358
  %v2364 = vunpack.c.l.b16 %v1687
  %v2365 = vunpack.c.l.b16 %v1688
  %v2366 = vunpack.c.l.b16 %v1689
  %v2367 = vunpack.c.l.b16 %v1690
  %v2368 = vpack.c.b16 %v2365, %v2364
  %v2369 = vpack.c.b16 %v2367, %v2366
  %v2373 = vsel %vm820, %v2355, 0
  %2375 = vmatprep.subr.bf16.mxu0 0
  %2376 = vmatpush1.bf16.msra.mxu0 %v2368
  %2377 = vmatprep.subr.bf16.mxu0 0
  %2378 = vmatpush1.bf16.msra.mxu0 %v2369
  %2379 = vmatprep.subr.bf16.mxu0 0
  %2380 = vmatpush1.bf16.msra.mxu0 0
  %2381 = vmatprep.subr.bf16.mxu0 0
  %2382 = vmatpush1.bf16.msra.mxu0 0
  %2383 = vmatprep.subr.bf16.mxu0 0
  %2384 = vmatpush1.bf16.msra.mxu0 0
  %2385 = vmatprep.subr.bf16.mxu0 0
  %2386 = vmatpush1.bf16.msra.mxu0 0
  %2387 = vmatprep.subr.bf16.mxu0 0
  %2388 = vmatpush1.bf16.msra.mxu0 0
  %2389 = vmatprep.subr.bf16.mxu0 0
  %2390 = vmatpush1.bf16.msra.mxu0 0
  %2391 = vmatprep.subr.bf16.mxu0 0
  %2392 = vmatpush1.bf16.msra.mxu0 0
  %2393 = vmatprep.subr.bf16.mxu0 0
  %2394 = vmatpush1.bf16.msra.mxu0 0
  %2395 = vmatprep.subr.bf16.mxu0 0
  %2396 = vmatpush1.bf16.msra.mxu0 0
  %2397 = vmatprep.subr.bf16.mxu0 0
  %2398 = vmatpush1.bf16.msra.mxu0 0
  %2399 = vmatprep.subr.bf16.mxu0 0
  %2400 = vmatpush1.bf16.msra.mxu0 0
  %2401 = vmatprep.subr.bf16.mxu0 0
  %2402 = vmatpush1.bf16.msra.mxu0 0
  %2403 = vmatprep.subr.bf16.mxu0 0
  %2404 = vmatpush1.bf16.msra.mxu0 0
  %2405 = vmatprep.subr.bf16.mxu0 0
  %2406 = vmatpush1.bf16.msra.mxu0 0
  %2407 = vmatprep.mubr.bf16.mxu0 0
  %2408 = vmatmul.mubr.bf16.gmra.mrb[0].mxu0 %v2373
  %v2409 = vpop.f32.mrb[0].mxu0
  %v2410 = vadd.f32 %v2359, %v2409
  %v2411 = vpop.f32.mrb[0].mxu0
  %v2412 = vpop.f32.mrb[0].mxu0
  %v2413 = vadd.f32 %v2359, %v2412
  %v2414 = vpop.f32.mrb[0].mxu0
  %2415 = vdwg.mxu0
  %v2416 = vmul.f32 %v2410, 0.5
  %v2417 = vmul.f32 %v2413, 0.5
  %v2418 = vmul.f32 %v2410, 0.70710677
  %v2419 = vmul.f32 %v2413, 0.70710677
  %v2420 = vand.u32 2147483647, %v2418
  %v2421 = vand.u32 2147483647, %v2419
  %v2422 = vmul.f32 %v2420, 0.3275911
  %v2423 = vmul.f32 %v2421, 0.3275911
  %v2424 = vadd.f32 %v2422, 1.0
  %v2425 = vadd.f32 %v2423, 1.0
  %v2426 = vrcp.pop %v2424
  %v2427 = vmul.f32 1.0, %v2426
  %v2428 = vrcp.pop %v2425
  %v2429 = vmul.f32 1.0, %v2428
  %v2430 = vmul.f32 %v2427, 1.0614054
  %v2431 = vmul.f32 %v2429, 1.0614054
  %v2432 = vadd.f32 %v2430, -1.4531521
  %v2433 = vadd.f32 %v2431, -1.4531521
  %v2434 = vmul.f32 %v2432, %v2427
  %v2435 = vmul.f32 %v2433, %v2429
  %v2436 = vadd.f32 %v2434, 1.4214138
  %v2437 = vadd.f32 %v2435, 1.4214138
  %v2438 = vmul.f32 %v2436, %v2427
  %v2439 = vmul.f32 %v2437, %v2429
  %v2440 = vadd.f32 %v2438, -0.28449672
  %v2441 = vadd.f32 %v2439, -0.28449672
  %v2442 = vmul.f32 %v2440, %v2427
  %v2443 = vmul.f32 %v2441, %v2429
  %v2444 = vadd.f32 %v2442, 0.2548296
  %v2445 = vadd.f32 %v2443, 0.2548296
  %v2446 = vmul.f32 %v2444, %v2427
  %v2447 = vmul.f32 %v2445, %v2429
  %v2448 = vsub.f32 0.0, %v2420
  %v2449 = vsub.f32 0.0, %v2421
  %v2450 = vmul.f32 %v2448, %v2420
  %v2451 = vmul.f32 %v2449, %v2421
  %v2452 = vmul.f32 %v2450, 1.442695
  %v2453 = vpow.pop %v2452
  %v2454 = vmul.f32 %v2451, 1.442695
  %v2455 = vpow.pop %v2454
  %v2456 = vmul.f32 %v2446, %v2453
  %v2457 = vmul.f32 %v2447, %v2455
  %v2458 = vsub.f32 1.0, %v2456
  %v2459 = vsub.f32 1.0, %v2457
  %vm2460 = vcmp.ge.f32.partialorder %v2418, 0.0
  %vm2461 = vcmp.ge.f32.partialorder %v2419, 0.0
  %v2462 = vsub.f32 0.0, %v2458
  %v2463 = vsub.f32 0.0, %v2459
  %v2464 = vsel %vm2460, %v2458, %v2462
  %v2465 = vsel %vm2461, %v2459, %v2463
  %v2466 = vadd.f32 %v2464, 1.0
  %v2467 = vadd.f32 %v2465, 1.0
  %v2468 = vmul.f32 %v2416, %v2466
  %v2469 = vmul.f32 %v2417, %v2467
  %v2470 = vpack.c.bf16 %v2469, %v2468
  %v2487 = vunpack.c.l.b16 %v1691
  %v2488 = vunpack.c.l.b16 %v1692
  %v2489 = vunpack.c.l.b16 %v1693
  %v2490 = vunpack.c.l.b16 %v1694
  %v2491 = vunpack.c.l.b16 %v1695
  %v2492 = vunpack.c.l.b16 %v1696
  %v2493 = vunpack.c.l.b16 %v1697
  %v2494 = vunpack.c.l.b16 %v1698
  %v2495 = vunpack.c.l.b16 %v1699
  %v2496 = vunpack.c.l.b16 %v1700
  %v2497 = vunpack.c.l.b16 %v1701
  %v2498 = vunpack.c.l.b16 %v1702
  %v2499 = vunpack.c.l.b16 %v1703
  %v2500 = vunpack.c.l.b16 %v1704
  %v2501 = vunpack.c.l.b16 %v1705
  %v2502 = vunpack.c.l.b16 %v1706
  %v2503 = vpack.c.b16 %v2488, %v2487
  %v2504 = vpack.c.b16 %v2490, %v2489
  %v2505 = vpack.c.b16 %v2492, %v2491
  %v2506 = vpack.c.b16 %v2494, %v2493
  %v2507 = vpack.c.b16 %v2496, %v2495
  %v2508 = vpack.c.b16 %v2498, %v2497
  %v2509 = vpack.c.b16 %v2500, %v2499
  %v2510 = vpack.c.b16 %v2502, %v2501
  %2519 = vmatprep.subr.bf16.mxu0 0
  %2520 = vmatpush1.bf16.msra.mxu0 %v2503
  %2521 = vmatprep.subr.bf16.mxu0 0
  %2522 = vmatpush1.bf16.msra.mxu0 %v2504
  %2523 = vmatprep.subr.bf16.mxu0 0
  %2524 = vmatpush1.bf16.msra.mxu0 %v2505
  %2525 = vmatprep.subr.bf16.mxu0 0
  %2526 = vmatpush1.bf16.msra.mxu0 %v2506
  %2527 = vmatprep.subr.bf16.mxu0 0
  %2528 = vmatpush1.bf16.msra.mxu0 %v2507
  %2529 = vmatprep.subr.bf16.mxu0 0
  %2530 = vmatpush1.bf16.msra.mxu0 %v2508
  %2531 = vmatprep.subr.bf16.mxu0 0
  %2532 = vmatpush1.bf16.msra.mxu0 %v2509
  %2533 = vmatprep.subr.bf16.mxu0 0
  %2534 = vmatpush1.bf16.msra.mxu0 %v2510
  %2535 = vmatprep.subr.bf16.mxu0 0
  %2536 = vmatpush1.bf16.msra.mxu0 0
  %2537 = vmatprep.subr.bf16.mxu0 0
  %2538 = vmatpush1.bf16.msra.mxu0 0
  %2539 = vmatprep.subr.bf16.mxu0 0
  %2540 = vmatpush1.bf16.msra.mxu0 0
  %2541 = vmatprep.subr.bf16.mxu0 0
  %2542 = vmatpush1.bf16.msra.mxu0 0
  %2543 = vmatprep.subr.bf16.mxu0 0
  %2544 = vmatpush1.bf16.msra.mxu0 0
  %2545 = vmatprep.subr.bf16.mxu0 0
  %2546 = vmatpush1.bf16.msra.mxu0 0
  %2547 = vmatprep.subr.bf16.mxu0 0
  %2548 = vmatpush1.bf16.msra.mxu0 0
  %2549 = vmatprep.subr.bf16.mxu0 0
  %2550 = vmatpush1.bf16.msra.mxu0 0
  %2551 = vmatprep.mubr.bf16.mxu0 0
  %2552 = vmatmul.mubr.bf16.gmra.mrb[0].mxu0 %v2470
  %v2553 = vpop.f32.mrb[0].mxu0
  %v2554 = vadd.f32 0.0, %v2553
  %v2555 = vpop.f32.mrb[0].mxu0
  %v2556 = vpop.f32.mrb[0].mxu0
  %v2557 = vadd.f32 0.0, %v2556
  %v2558 = vpop.f32.mrb[0].mxu0
  %2559 = vdwg.mxu0
  %v2560 = vlaneseq
  %v2561 = vshrl.u32 %v2560, 7
  %v2562 = vsub.s32 0, %v2561
  %v2563 = vrot.slane %v1714, %v2562
  %v2564 = vadd.f32 %v2554, %v2563
  %v2565 = vadd.f32 %v2557, %v2563
  %v2566 = vadd.f32 %v2315, %v2564
  %v2567 = vadd.f32 %v2316, %v2565
  %v2568 = vld [vmem:[%s2 + $0x18] sm:$0x1]
  %v2569 = vld [vmem:[%s2 + $0x19] sm:$0x1]
  %v2570 = vld [vmem:[%s2 + $0x1a] sm:$0x1]
  %v2571 = vld [vmem:[%s2 + $0x1b] sm:$0x1]
  %v2573 = vrot.slane %v2567, 7
  %v2575 = vsel %vm732, %v2566, %v2573
  %vm2576 = vcmask 254976
  %v2577 = vsel %vm2576, %v2575, 0.0
  %2578 = vadd.xlane.f32.xlu0 %v2577
  %v2579 = vpop.xlane.xlu0 %2578
  %v2580 = vmul.f32 %v2579, %v827
  %v2581 = vsub.f32 %v2575, %v2580
  %v2582 = vmul.f32 %v2581, %v2581
  %v2583 = vsel %vm2576, %v2582, 0.0
  %2584 = vadd.xlane.f32.xlu0 %v2583
  %v2585 = vpop.xlane.xlu0 %2584
  %v2586 = vmul.f32 %v2585, %v827
  %v2587 = vadd.f32 %v2586, 1e-05
  %v2588 = vrsqrt.pop %v2587
  %v2589 = vmul.f32 %v2581, %v2588
  %v2590 = vlaneseq
  %v2591 = vshrl.u32 %v2590, 7
  %v2592 = vsub.s32 0, %v2591
  %v2593 = vrot.slane %v2568, %v2592
  %v2594 = vmul.f32 %v2589, %v2593
  %v2595 = vlaneseq
  %v2596 = vshrl.u32 %v2595, 7
  %v2597 = vsub.s32 0, %v2596
  %v2598 = vrot.slane %v2569, %v2597
  %v2599 = vadd.f32 %v2594, %v2598
  %v2600 = vlaneseq
  %v2601 = vshrl.u32 %v2600, 7
  %v2602 = vsub.s32 0, %v2601
  %v2603 = vrot.slane %v2570, %v2602
  %v2604 = vmul.f32 %v2599, %v2603
  %v2605 = vsel %vm2576, %v2604, 0.0
  %2606 = vadd.xlane.f32.xlu0 %v2605
  %v2607 = vpop.xlane.xlu0 %2606
  %v2608 = vlaneseq
  %v2609 = vshrl.u32 %v2608, 7
  %v2610 = vsub.s32 0, %v2609
  %v2611 = vrot.slane %v2571, %v2610
  %v2612 = vadd.f32 %v2607, %v2611
  %v2613 = vmul.f32 %v2612, 0.5
  %v2614 = vtanh.pop %v2613
  %v2615 = vadd.f32 %v2614, 1.0
  %v2616 = vmul.f32 %v2615, 0.5
  %vm2617 = vcmask 1024
  %2618 = vst.msk [vmem:[%s3] sm:$0x3] %vm2617, %v2616
  // Predicated region
  $region14: #{vit_discriminator_forward.1} parent=0 // pred_check
    _
  $region15: #{vit_discriminator_forward.1} parent=0 // pred_check_branch
    %2620 = sbr.rel (0) target = $region17
  $region16: #{vit_discriminator_forward.1} parent=0 // pred_region
    _
  $region17: #{vit_discriminator_forward.1} parent=0 // pred_fallthru
    _
  // Predicated region
  $region18: #{vit_discriminator_forward.1} parent=0 // pred_check
    _
  $region19: #{vit_discriminator_forward.1} parent=0 // pred_check_branch
    %2622 = sbr.rel (0) target = $region21
  $region20: #{vit_discriminator_forward.1} parent=0 // pred_region
    _
  $region21: #{vit_discriminator_forward.1} parent=0 // pred_fallthru
    _

</llo_original>
